<compile_context>
chip_gen: v7x
topology: tpu7x:2x2x1
jax: 0.10.0
libtpu: 0.0.40
codegen_flags: <defaults>
</compile_context>

<pallas_src>
import functools
import math

import jax
import jax.numpy as jnp
from jax.experimental import pallas as pl
from jax.experimental.pallas import tpu as pltpu


# ---------------------------------------------------------------------------
# Generation-aware sizing.
# ---------------------------------------------------------------------------
def _tpu_vmem_capacity_bytes():
    try:
        cap = getattr(pltpu.get_tpu_info(), "vmem_capacity_bytes", None)
        if cap:
            return int(cap)
    except Exception:
        pass
    return 64 * 1024 * 1024            # conservative fallback (v7x physical VMEM)


_VMEM_CAP = _tpu_vmem_capacity_bytes()
_VMEM_LIMIT = max(32 * 1024 * 1024,
                  min(_VMEM_CAP * 3 // 4, _VMEM_CAP - (8 << 20)))


def _detect_default_block_q():
    try:
        kind = jax.devices()[0].device_kind.lower()
        if "v5 lite" in kind or "v5e" in kind:
            return 128                 # v5e MXU is 128x128
    except Exception:
        pass
    return 256                         # v6e / v7x MXUs are 256x256


_DEFAULT_BLOCK_Q = _detect_default_block_q()

# Whether pipeline_mode=pl.Buffered(1) (single-buffered constant blocks) works
# on this JAX/Mosaic build; set by _probe_single_buffer_support() in __main__.
_FEATURES = {"single_buffer": False}


def _spec(block_shape, index_map, *, constant=False):
    """BlockSpec; single-buffers blocks whose block index never changes."""
    if constant and _FEATURES["single_buffer"]:
        return pl.BlockSpec(block_shape, index_map, pipeline_mode=pl.Buffered(1))
    return pl.BlockSpec(block_shape, index_map)


def _probe_single_buffer_support():
    """Runtime probe: does pipeline_mode=pl.Buffered(1) compile and run right?"""
    try:
        def _k(c_ref, x_ref, o_ref):
            o_ref[...] = x_ref[...] + c_ref[...]

        fn = pl.pallas_call(
            _k,
            out_shape=jax.ShapeDtypeStruct((16, 128), jnp.float32),
            grid_spec=pltpu.PrefetchScalarGridSpec(
                num_scalar_prefetch=0,
                grid=(2,),
                in_specs=[
                    pl.BlockSpec((8, 128), lambda i: (0, 0),
                                 pipeline_mode=pl.Buffered(1)),
                    pl.BlockSpec((8, 128), lambda i: (i, 0)),
                ],
                out_specs=pl.BlockSpec((8, 128), lambda i: (i, 0)),
            ),
        )
        y = jax.block_until_ready(fn(jnp.ones((8, 128), jnp.float32),
                                     jnp.zeros((16, 128), jnp.float32)))
        return bool(jnp.allclose(y, 1.0))
    except Exception:
        return False


def _round_up(x, m):
    return ((x + m - 1) // m) * m


def _divisor_tile(dim, max_tile, unit):
    """Largest multiple of `unit` <= max_tile that divides `dim`; `dim` if none."""
    if dim <= max_tile:
        return dim
    t = (max_tile // unit) * unit
    while t >= unit:
        if dim % t == 0:
            return t
        t -= unit
    return dim


def _pick_divisor(n, cap):
    cap = max(1, min(n, cap))
    for t in range(cap, 0, -1):
        if n % t == 0:
            return t
    return 1


# ---------------------------------------------------------------------------
# Shared accumulating matmul kernel:  out = sum_r x_r @ w_r  (+ b on last step)
# Used by the Q/K/V projections (reduction over Din tiles) and by the fused
# head-merge output projection (reduction over heads).
# ---------------------------------------------------------------------------
def _matmul_acc_kernel(x_ref, w_ref, b_ref, o_ref, acc_ref):
    r = pl.program_id(2)               # reduction axis (last, "arbitrary")

    @pl.when(r == 0)
    def _():
        acc_ref[...] = jnp.zeros_like(acc_ref)

    acc_ref[...] += jnp.dot(x_ref[...], w_ref[...],
                            preferred_element_type=jnp.float32)

    @pl.when(r == pl.num_programs(2) - 1)
    def _():
        o_ref[...] = (acc_ref[...] + b_ref[...]).astype(o_ref.dtype)


def linear_pallas(x, w, b, *, block_m=None):
    """x: (M, Din), w: (Din, Dout), b: (Dout,) -> (M, Dout)."""
    M, Din = x.shape
    Dout = w.shape[1]
    b2 = b.reshape(1, Dout)
    budget = int(_VMEM_LIMIT * 0.6)

    # Keep the whole weight resident when it is small; otherwise tile Dout
    # (lane-dense) and the Din reduction so the resident block stays bounded
    # on v7x's 64 MiB VMEM.
    if Din * Dout * 4 <= budget // 3:
        tk, tn = Din, Dout
    else:
        tn = _divisor_tile(Dout, 512, 128)
        tk = _divisor_tile(Din, 512, 128)

    if block_m is None:
        block_m = 1024 if _VMEM_CAP >= (100 << 20) else 256

    def _footprint(tm_):
        return 4 * (2 * tm_ * tk + 2 * tk * tn + 2 * tm_ * tn + tm_ * tn + 2 * tn)

    while block_m > 8 and _footprint(block_m) > budget:
        block_m //= 2
    tm = _divisor_tile(M, block_m, 8)
    if tm > block_m:                   # no divisor; partial trailing M block
        tm = block_m

    grid = (pl.cdiv(M, tm), Dout // tn, Din // tk)
    const_w = (grid[1] == 1 and grid[2] == 1)
    const_b = (grid[1] == 1)

    return pl.pallas_call(
        _matmul_acc_kernel,
        out_shape=jax.ShapeDtypeStruct((M, Dout), x.dtype),
        grid_spec=pltpu.PrefetchScalarGridSpec(
            num_scalar_prefetch=0,
            grid=grid,
            in_specs=[
                pl.BlockSpec((tm, tk), lambda i, j, r: (i, r)),
                _spec((tk, tn), lambda i, j, r: (r, j), constant=const_w),
                _spec((1, tn), lambda i, j, r: (0, j), constant=const_b),
            ],
            out_specs=pl.BlockSpec((tm, tn), lambda i, j, r: (i, j)),
            scratch_shapes=[pltpu.VMEM((tm, tn), jnp.float32)],
        ),
        compiler_params=pltpu.CompilerParams(
            dimension_semantics=("parallel", "parallel", "arbitrary"),
            vmem_limit_bytes=_VMEM_LIMIT),
    )(x, w, b2)


def output_projection_pallas(oh, wo, bo):
    """Fused head-merge + output projection.

    oh: (B, H, L_pad, E) head-major attention output, wo: (D, D) with D=H*E,
    bo: (D,).  Computes out[b,l,:] = sum_h oh[b,h,l,:] @ wo[h*E:(h+1)*E,:] + bo,
    i.e. the (B,H,L,E)->(B,L,D) relayout fused into the projection's H
    reduction (saves one wrapper-side HBM transpose round trip).
    """
    B, H, L_pad, E = oh.shape
    D = wo.shape[1]
    wo_h = wo.reshape(H, E, D)
    bo2 = bo.reshape(1, D)
    tm = _divisor_tile(L_pad, 256, 8)
    grid = (B, L_pad // tm, H)
    # TODO(synk): tile D as well once E*D*4 no longer fits comfortably in VMEM.
    return pl.pallas_call(
        _matmul_acc_kernel,
        out_shape=jax.ShapeDtypeStruct((B, L_pad, D), oh.dtype),
        grid_spec=pltpu.PrefetchScalarGridSpec(
            num_scalar_prefetch=0,
            grid=grid,
            in_specs=[
                pl.BlockSpec((None, None, tm, E), lambda b, i, h: (b, h, i, 0)),
                pl.BlockSpec((None, E, D), lambda b, i, h: (h, 0, 0)),
                _spec((1, D), lambda b, i, h: (0, 0), constant=True),
            ],
            out_specs=pl.BlockSpec((None, tm, D), lambda b, i, h: (b, i, 0)),
            scratch_shapes=[pltpu.VMEM((tm, D), jnp.float32)],
        ),
        compiler_params=pltpu.CompilerParams(
            dimension_semantics=("parallel", "parallel", "arbitrary"),
            vmem_limit_bytes=_VMEM_LIMIT),
    )(oh, wo_h, bo2)


# ---------------------------------------------------------------------------
# Head-batched attention kernels.
# ---------------------------------------------------------------------------
def _make_attn_kernel(masked, return_attn):
    """Full-S kernel.  `masked` adds the precomputed 0/-1e30 key-pad bias.
    The softmax uses an exact reciprocal when the attention map is an external
    output and the approximate EUP reciprocal otherwise."""

    def kernel(*refs):
        if masked:
            q_ref, k_ref, v_ref, bias_ref = refs[:4]
            out_refs = refs[4:]
        else:
            q_ref, k_ref, v_ref = refs[:3]
            bias_ref = None
            out_refs = refs[3:]
        # 1/sqrt(E) is folded into the Q projection weights.
        s = jnp.einsum("gqe,gse->gqs", q_ref[...], k_ref[...],
                       preferred_element_type=jnp.float32)
        if masked:
            s = s + bias_ref[...]                       # (1,1,S_pad) broadcast
        m = jnp.max(s, axis=-1, keepdims=True)
        e = jnp.exp(s - m)
        denom = jnp.sum(e, axis=-1, keepdims=True)
        if return_attn:
            p = e * (1.0 / denom)                       # exact: attn is returned
        else:
            p = e * pl.reciprocal(denom, approx=True)   # EUP slot, frees VALU
        # TODO(synk): for bf16 inputs p is quantised to bf16 before the PV
        # matmul (matches MXU input width); fine for inference.
        o = jnp.einsum("gqs,gse->gqe", p.astype(v_ref.dtype), v_ref[...],
                       preferred_element_type=jnp.float32)
        out_refs[0][...] = o.astype(out_refs[0].dtype)
        if return_attn:
            out_refs[1][...] = p.astype(out_refs[1].dtype)

    return kernel


def _make_flash_kernel(masked):
    """S-tiled online-softmax kernel (return_attn=False hot path)."""

    def kernel(*refs):
        if masked:
            q_ref, k_ref, v_ref, bias_ref, o_ref, m_sc, l_sc, acc_sc = refs
        else:
            q_ref, k_ref, v_ref, o_ref, m_sc, l_sc, acc_sc = refs
            bias_ref = None
        kv = pl.program_id(2)

        @pl.when(kv == 0)
        def _():
            m_sc[...] = jnp.full_like(m_sc, -jnp.inf)
            l_sc[...] = jnp.zeros_like(l_sc)
            acc_sc[...] = jnp.zeros_like(acc_sc)

        s = jnp.einsum("gqe,gke->gqk", q_ref[...], k_ref[...],
                       preferred_element_type=jnp.float32)
        if masked:
            s = s + bias_ref[...]
        m_new = jnp.maximum(m_sc[...], jnp.max(s, axis=-1, keepdims=True))
        alpha = jnp.exp(m_sc[...] - m_new)
        p = jnp.exp(s - m_new)
        l_sc[...] = alpha * l_sc[...] + jnp.sum(p, axis=-1, keepdims=True)
        acc_sc[...] = alpha * acc_sc[...] + jnp.einsum(
            "gqk,gke->gqe", p.astype(v_ref.dtype), v_ref[...],
            preferred_element_type=jnp.float32)
        m_sc[...] = m_new

        @pl.when(kv == pl.num_programs(2) - 1)
        def _():
            o_ref[...] = (acc_sc[...] *
                          pl.reciprocal(l_sc[...], approx=True)).astype(o_ref.dtype)

    return kernel


def attention_pallas(qh, kh, vh, *, return_attn=True, block_q=None,
                     block_k=128, force_flash=False, flash_s_threshold=2048):
    """qh: (G, L, E), kh/vh: (G, S, E), G = B*H (head-major).

    Returns (o (G, L_pad, E), attn (G, L_pad, S_pad) | None); the caller slices
    padding off only when padding was actually added.
    """
    G, L, E = qh.shape
    S = kh.shape[1]
    if block_q is None:
        block_q = _DEFAULT_BLOCK_Q
    use_flash = (not return_attn) and (force_flash or S >= flash_s_threshold)

    # L tiling: pad L to a multiple of the q tile instead of collapsing the L
    # grid axis (keeps per-step softmax state bounded, keeps megacore sharding).
    tq = block_q if L >= block_q else _round_up(L, 8)
    L_pad = _round_up(L, tq)
    if L_pad != L:
        qh = jnp.pad(qh, ((0, 0), (0, L_pad - L), (0, 0)))

    # S padded to a lane-dense multiple of the key tile; padded keys masked by
    # a precomputed additive 0/-1e30 bias (no per-step iota/compare/select).
    k_unit = block_k if use_flash else 128
    S_pad = _round_up(S, k_unit)
    if S_pad != S:
        pad = ((0, 0), (0, S_pad - S), (0, 0))
        kh = jnp.pad(kh, pad)
        vh = jnp.pad(vh, pad)
    masked = S_pad != S
    bias = None
    if masked:
        col = jnp.arange(S_pad, dtype=jnp.int32).reshape(1, 1, S_pad)
        bias = jnp.where(col < S, 0.0, -1e30).astype(jnp.float32)

    # Head-slab count Gt: largest divisor of G whose per-step footprint fits
    # the generation-aware VMEM budget.
    esz = jnp.dtype(qh.dtype).itemsize
    budget = int(_VMEM_LIMIT * 0.6)
    if use_flash:
        per_g = (4 * esz * E * (tq + block_k)      # q,o,k,v (double-buffered)
                 + 4 * tq * (E + 2)                # f32 m/l/acc scratch
                 + 12 * tq * block_k)              # softmax temporaries
    else:
        per_g = (4 * esz * E * (tq + S_pad)
                 + 12 * tq * S_pad
                 + (2 * esz * tq * S_pad if return_attn else 0))
    gt_cap = 16 if _VMEM_CAP >= (100 << 20) else 8
    Gt = _pick_divisor(G, min(gt_cap, budget // max(per_g, 1)))

    o_shape = jax.ShapeDtypeStruct((G, L_pad, E), qh.dtype)
    compiler_params = pltpu.CompilerParams(
        dimension_semantics=(("parallel", "parallel", "arbitrary") if use_flash
                             else ("parallel", "parallel")),
        vmem_limit_bytes=_VMEM_LIMIT)

    if use_flash:
        grid = (G // Gt, L_pad // tq, S_pad // block_k)
        in_specs = [pl.BlockSpec((Gt, tq, E), lambda g, l, s: (g, l, 0)),
                    pl.BlockSpec((Gt, block_k, E), lambda g, l, s: (g, s, 0)),
                    pl.BlockSpec((Gt, block_k, E), lambda g, l, s: (g, s, 0))]
        args = [qh, kh, vh]
        if masked:
            in_specs.append(
                pl.BlockSpec((1, 1, block_k), lambda g, l, s: (0, 0, s)))
            args.append(bias)
        o = pl.pallas_call(
            _make_flash_kernel(masked),
            out_shape=o_shape,
            grid_spec=pltpu.PrefetchScalarGridSpec(
                num_scalar_prefetch=0, grid=grid,
                in_specs=in_specs,
                out_specs=pl.BlockSpec((Gt, tq, E), lambda g, l, s: (g, l, 0)),
                scratch_shapes=[pltpu.VMEM((Gt, tq, 1), jnp.float32),
                                pltpu.VMEM((Gt, tq, 1), jnp.float32),
                                pltpu.VMEM((Gt, tq, E), jnp.float32)]),
            compiler_params=compiler_params,
        )(*args)
        return o, None

    grid = (G // Gt, L_pad // tq)
    in_specs = [pl.BlockSpec((Gt, tq, E), lambda g, l: (g, l, 0)),
                pl.BlockSpec((Gt, S_pad, E), lambda g, l: (g, 0, 0)),
                pl.BlockSpec((Gt, S_pad, E), lambda g, l: (g, 0, 0))]
    args = [qh, kh, vh]
    if masked:
        in_specs.append(
            _spec((1, 1, S_pad), lambda g, l: (0, 0, 0), constant=True))
        args.append(bias)
    o_spec = pl.BlockSpec((Gt, tq, E), lambda g, l: (g, l, 0))
    if return_attn:
        # Attention map emitted in the input dtype (not f32) to cut writeback.
        out_shape = (o_shape, jax.ShapeDtypeStruct((G, L_pad, S_pad), qh.dtype))
        out_specs = (o_spec,
                     pl.BlockSpec((Gt, tq, S_pad), lambda g, l: (g, l, 0)))
    else:
        out_shape = o_shape
        out_specs = o_spec
    out = pl.pallas_call(
        _make_attn_kernel(masked, return_attn),
        out_shape=out_shape,
        grid_spec=pltpu.PrefetchScalarGridSpec(
            num_scalar_prefetch=0, grid=grid,
            in_specs=in_specs, out_specs=out_specs),
        compiler_params=compiler_params,
    )(*args)
    if return_attn:
        return out[0], out[1]
    return out, None


# ---------------------------------------------------------------------------
# Full TSMixer forward.
# ---------------------------------------------------------------------------
def tsmixer_forward(q, k, v, params, n_heads, return_attn=True,
                    force_flash=False):
    """q: (B, L, D), k/v: (B, S, D) -> (out (B,L,D), attn (B,H,L,S) | None)."""
    B, L, D = q.shape
    _, S, _ = k.shape
    H = n_heads
    E = D // H
    wq, bq, wk, bk, wv, bv, wo, bo = params

    # Fold the 1/sqrt(E) attention scale into the Q projection parameters.
    scale = 1.0 / math.sqrt(E)
    qp = linear_pallas(q.reshape(B * L, D), wq * scale, bq * scale)
    kp = linear_pallas(k.reshape(B * S, D), wk, bk)
    vp = linear_pallas(v.reshape(B * S, D), wv, bv)

    # Head-major relayout (B,T,H,E) -> (B*H,T,E) done wrapper-side in XLA
    # (per-head E strips are lane-sparse; an in-kernel relayout would lose).
    def to_heads(x, T):
        return x.reshape(B, T, H, E).transpose(0, 2, 1, 3).reshape(B * H, T, E)

    oh, attn_pad = attention_pallas(to_heads(qp, L), to_heads(kp, S),
                                    to_heads(vp, S), return_attn=return_attn,
                                    force_flash=force_flash)
    L_pad = oh.shape[1]

    attn = None
    if return_attn:
        S_pad = attn_pad.shape[-1]
        attn = attn_pad.reshape(B, H, L_pad, S_pad)
        if L_pad != L or S_pad != S:
            attn = attn[:, :, :L, :S]

    # Output projection fused with the head merge (reduction over H inside the
    # kernel) -- removes the (B,H,L,E)->(B,L,D) HBM transpose.
    out = output_projection_pallas(oh.reshape(B, H, L_pad, E), wo, bo)
    if L_pad != L:
        out = out[:, :L, :]
    return out, attn


def reference_forward(q, k, v, params, n_heads):
    """Pure-JAX reference mirroring the PyTorch module."""
    B, L, D = q.shape
    _, S, _ = k.shape
    H = n_heads
    E = D // H
    wq, bq, wk, bk, wv, bv, wo, bo = params
    qp = (q @ wq + bq).reshape(B, L, H, E)
    kp = (k @ wk + bk).reshape(B, S, H, E)
    vp = (v @ wv + bv).reshape(B, S, H, E)
    scores = jnp.einsum("blhe,bshe->bhls", qp, kp) / math.sqrt(E)
    attn = jax.nn.softmax(scores, axis=-1)
    out = jnp.einsum("bhls,bshe->blhe", attn, vp).reshape(B, L, D)
    return out @ wo + bo, attn


if __name__ == "__main__":
    _FEATURES["single_buffer"] = _probe_single_buffer_support()

    d_model, n_heads = 32, 4
    key = jax.random.PRNGKey(0)
    keys = jax.random.split(key, 14)
    init_scale = 1.0 / math.sqrt(d_model)

    wq = jax.random.uniform(keys[0], (d_model, d_model), jnp.float32, -init_scale, init_scale)
    bq = jax.random.uniform(keys[1], (d_model,), jnp.float32, -init_scale, init_scale)
    wk = jax.random.uniform(keys[2], (d_model, d_model), jnp.float32, -init_scale, init_scale)
    bk = jax.random.uniform(keys[3], (d_model,), jnp.float32, -init_scale, init_scale)
    wv = jax.random.uniform(keys[4], (d_model, d_model), jnp.float32, -init_scale, init_scale)
    bv = jax.random.uniform(keys[5], (d_model,), jnp.float32, -init_scale, init_scale)
    wo = jax.random.uniform(keys[6], (d_model, d_model), jnp.float32, -init_scale, init_scale)
    bo = jax.random.uniform(keys[7], (d_model,), jnp.float32, -init_scale, init_scale)
    params = (wq, bq, wk, bk, wv, bv, wo, bo)

    fwd = jax.jit(functools.partial(tsmixer_forward, n_heads=n_heads))

    # Case 1: small aligned shapes (B=2, L=S=8, d_model=32, H=4).
    B, L, S = 2, 8, 8
    q = jax.random.normal(keys[8], (B, L, d_model), jnp.float32)
    k = jax.random.normal(keys[9], (B, S, d_model), jnp.float32)
    v = jax.random.normal(keys[10], (B, S, d_model), jnp.float32)
    out, attn = fwd(q, k, v, params)
    jax.block_until_ready((out, attn))
    out_ref, attn_ref = reference_forward(q, k, v, params, n_heads)
    assert jnp.allclose(out, out_ref, atol=5e-3, rtol=5e-3), "case1 output mismatch"
    assert jnp.allclose(attn, attn_ref, atol=5e-3, rtol=5e-3), "case1 attn mismatch"

    # Case 2: ragged L/S (exercises L padding, masked key padding, slice-back).
    B2, L2, S2 = 2, 37, 200
    q2 = jax.random.normal(keys[11], (B2, L2, d_model), jnp.float32)
    k2 = jax.random.normal(keys[12], (B2, S2, d_model), jnp.float32)
    v2 = jax.random.normal(keys[13], (B2, S2, d_model), jnp.float32)
    out2, attn2 = fwd(q2, k2, v2, params)
    jax.block_until_ready((out2, attn2))
    out2_ref, attn2_ref = reference_forward(q2, k2, v2, params, n_heads)
    assert jnp.allclose(out2, out2_ref, atol=5e-3, rtol=5e-3), "case2 output mismatch"
    assert jnp.allclose(attn2, attn2_ref, atol=5e-3, rtol=5e-3), "case2 attn mismatch"

    # Case 3: flash (S-tiled online softmax) hot path, no attn-map writeback.
    fwd_flash = jax.jit(functools.partial(
        tsmixer_forward, n_heads=n_heads, return_attn=False, force_flash=True))
    out3, attn3 = fwd_flash(q2, k2, v2, params)
    out3 = jax.block_until_ready(out3)
    assert attn3 is None
    assert jnp.allclose(out3, out2_ref, atol=5e-3, rtol=5e-3), "flash output mismatch"

    print("KERNEL_OK")
</pallas_src>

<mosaic_0001>
module attributes {stable_mosaic.version = 11 : i64} {
  func.func @_k(%arg0: i32, %arg1: memref<8x128xf32, #tpu.memory_space<vmem>>, %arg2: memref<8x128xf32, #tpu.memory_space<vmem>>, %arg3: memref<8x128xf32, #tpu.memory_space<vmem>>) attributes {dimension_semantics = [#tpu.dimension_semantics<arbitrary>], iteration_bounds = array<i64: 2>, scalar_prefetch = 0 : i64, scratch_operands = 0 : i64, tpu.core_type = #tpu.core_type<tc>, window_params = [{pipeline_mode = #tpu.pipeline_mode<synchronous>, transform_indices = @transform_0, window_bounds = array<i64: 8, 128>}, {transform_indices = @transform_1, window_bounds = array<i64: 8, 128>}, {transform_indices = @transform_2, window_bounds = array<i64: 8, 128>}]} {
    %c0 = arith.constant 0 : index
    %c0_0 = arith.constant 0 : index
    %0 = vector.load %arg2[%c0, %c0_0] : memref<8x128xf32, #tpu.memory_space<vmem>>, vector<8x128xf32>
    %c0_1 = arith.constant 0 : index
    %c0_2 = arith.constant 0 : index
    %1 = vector.load %arg1[%c0_1, %c0_2] : memref<8x128xf32, #tpu.memory_space<vmem>>, vector<8x128xf32>
    %2 = arith.addf %0, %1 : vector<8x128xf32>
    %c0_3 = arith.constant 0 : index
    %c0_4 = arith.constant 0 : index
    %3 = vector.load %arg3[%c0_3, %c0_4] : memref<8x128xf32, #tpu.memory_space<vmem>>, vector<8x128xf32>
    tpu.vector_store %arg3[%c0_3, %c0_4], %2 {strides = array<i32>} : memref<8x128xf32, #tpu.memory_space<vmem>>, vector<8x128xf32>,
    return
  }
  func.func @transform_0(%arg0: i32) -> (i32, i32) {
    %c0_i32 = arith.constant 0 : i32
    %c0_i32_0 = arith.constant 0 : i32
    %c0_i32_1 = arith.constant 0 : i32
    return %c0_i32, %c0_i32_0 : i32, i32
  }
  func.func @transform_1(%arg0: i32) -> (i32, i32) {
    %c0_i32 = arith.constant 0 : i32
    %c0_i32_0 = arith.constant 0 : i32
    return %arg0, %c0_i32 : i32, i32
  }
  func.func @transform_2(%arg0: i32) -> (i32, i32) {
    %c0_i32 = arith.constant 0 : i32
    %c0_i32_0 = arith.constant 0 : i32
    return %arg0, %c0_i32 : i32, i32
  }
}

module attributes {stable_mosaic.version = 11 : i64} {
  func.func @_matmul_acc_kernel(%arg0: i32, %arg1: i32, %arg2: i32, %arg3: memref<1x1x8x8xf32, #tpu.memory_space<vmem>>, %arg4: memref<1x8x32xf32, #tpu.memory_space<vmem>>, %arg5: memref<1x32xf32, #tpu.memory_space<vmem>>, %arg6: memref<1x8x32xf32, #tpu.memory_space<vmem>>, %arg7: memref<8x32xf32, #tpu.memory_space<vmem>>) attributes {dimension_semantics = [#tpu.dimension_semantics<parallel>, #tpu.dimension_semantics<parallel>, #tpu.dimension_semantics<arbitrary>], iteration_bounds = array<i64: 2, 1, 4>, scalar_prefetch = 0 : i64, scratch_operands = 1 : i64, tpu.core_type = #tpu.core_type<tc>, window_params = [{transform_indices = @transform_0, window_bounds = array<i64: 1, 1, 8, 8>}, {transform_indices = @transform_1, window_bounds = array<i64: 1, 8, 32>}, {pipeline_mode = #tpu.pipeline_mode<synchronous>, transform_indices = @transform_2, window_bounds = array<i64: 1, 32>}, {transform_indices = @transform_3, window_bounds = array<i64: 1, 8, 32>}]} {
    %c0_i32 = arith.constant 0 : i32
    %0 = arith.cmpi eq, %arg2, %c0_i32 : i32
    %1 = arith.extui %0 : i1 to i32
    %c0_i32_0 = arith.constant 0 : i32
    %2 = arith.cmpi ne, %1, %c0_i32_0 : i32
    scf.if %2 {
      %cst_12 = arith.constant 0.000000e+00 : f32
      %14 = vector.broadcast %cst_12 : f32 to vector<8x32xf32>
      %c0_13 = arith.constant 0 : index
      %c0_14 = arith.constant 0 : index
      %15 = vector.load %arg7[%c0_13, %c0_14] : memref<8x32xf32, #tpu.memory_space<vmem>>, vector<8x32xf32>
      tpu.vector_store %arg7[%c0_13, %c0_14], %14 {strides = array<i32>} : memref<8x32xf32, #tpu.memory_space<vmem>>, vector<8x32xf32>,
    } else {
    }
    %c0 = arith.constant 0 : index
    %c0_1 = arith.constant 0 : index
    %3 = vector.load %arg7[%c0, %c0_1] : memref<8x32xf32, #tpu.memory_space<vmem>>, vector<8x32xf32>
    %c0_2 = arith.constant 0 : index
    %c0_3 = arith.constant 0 : index
    %c0_4 = arith.constant 0 : index
    %c0_5 = arith.constant 0 : index
    %4 = vector.load %arg3[%c0_2, %c0_3, %c0_4, %c0_5] : memref<1x1x8x8xf32, #tpu.memory_space<vmem>>, vector<1x1x8x8xf32>
    %5 = vector.shape_cast %4 : vector<1x1x8x8xf32> to vector<8x8xf32>
    %c0_6 = arith.constant 0 : index
    %c0_7 = arith.constant 0 : index
    %c0_8 = arith.constant 0 : index
    %6 = vector.load %arg4[%c0_6, %c0_7, %c0_8] : memref<1x8x32xf32, #tpu.memory_space<vmem>>, vector<1x8x32xf32>
    %7 = vector.shape_cast %6 : vector<1x8x32xf32> to vector<8x32xf32>
    %cst = arith.constant dense<0.000000e+00> : vector<8x32xf32>
    %8 = tpu.matmul %5, %7, %cst {dimension_numbers = #tpu.dot_dimension_numbers<[1], [0], [0], [1], [0, 0, 1, 1], [], []>} : vector<8x8xf32>, vector<8x32xf32>, vector<8x32xf32> -> vector<8x32xf32>
    %9 = arith.addf %3, %8 : vector<8x32xf32>
    %c0_9 = arith.constant 0 : index
    %c0_10 = arith.constant 0 : index
    %10 = vector.load %arg7[%c0_9, %c0_10] : memref<8x32xf32, #tpu.memory_space<vmem>>, vector<8x32xf32>
    tpu.vector_store %arg7[%c0_9, %c0_10], %9 {strides = array<i32>} : memref<8x32xf32, #tpu.memory_space<vmem>>, vector<8x32xf32>,
    %c3_i32 = arith.constant 3 : i32
    %11 = arith.cmpi eq, %arg2, %c3_i32 : i32
    %12 = arith.extui %11 : i1 to i32
    %c0_i32_11 = arith.constant 0 : i32
    %13 = arith.cmpi ne, %12, %c0_i32_11 : i32
    scf.if %13 {
      %c0_12 = arith.constant 0 : index
      %c0_13 = arith.constant 0 : index
      %14 = vector.load %arg7[%c0_12, %c0_13] : memref<8x32xf32, #tpu.memory_space<vmem>>, vector<8x32xf32>
      %c0_14 = arith.constant 0 : index
      %c0_15 = arith.constant 0 : index
      %15 = vector.load %arg5[%c0_14, %c0_15] : memref<1x32xf32, #tpu.memory_space<vmem>>, vector<1x32xf32>
      %16 = vector.broadcast %15 : vector<1x32xf32> to vector<8x32xf32>
      %17 = arith.addf %14, %16 : vector<8x32xf32>
      %c0_16 = arith.constant 0 : index
      %c0_17 = arith.constant 0 : index
      %c0_18 = arith.constant 0 : index
      %18 = vector.load %arg6[%c0_16, %c0_17, %c0_18] : memref<1x8x32xf32, #tpu.memory_space<vmem>>, vector<1x8x32xf32>
      %19 = vector.shape_cast %18 : vector<1x8x32xf32> to vector<8x32xf32>
      %20 = vector.shape_cast %17 : vector<8x32xf32> to vector<1x8x32xf32>
      tpu.vector_store %arg6[%c0_16, %c0_17, %c0_18], %20 {strides = array<i32>} : memref<1x8x32xf32, #tpu.memory_space<vmem>>, vector<1x8x32xf32>,
    } else {
    }
    return
  }
  func.func @transform_0(%arg0: i32, %arg1: i32, %arg2: i32) -> (i32, i32, i32, i32) {
    %c0_i32 = arith.constant 0 : i32
    %c0_i32_0 = arith.constant 0 : i32
    return %arg0, %arg2, %arg1, %c0_i32 : i32, i32, i32, i32
  }
  func.func @transform_1(%arg0: i32, %arg1: i32, %arg2: i32) -> (i32, i32, i32) {
    %c0_i32 = arith.constant 0 : i32
    %c0_i32_0 = arith.constant 0 : i32
    %c0_i32_1 = arith.constant 0 : i32
    return %arg2, %c0_i32, %c0_i32_0 : i32, i32, i32
  }
  func.func @transform_2(%arg0: i32, %arg1: i32, %arg2: i32) -> (i32, i32) {
    %c0_i32 = arith.constant 0 : i32
    %c0_i32_0 = arith.constant 0 : i32
    %c0_i32_1 = arith.constant 0 : i32
    return %c0_i32, %c0_i32_0 : i32, i32
  }
  func.func @transform_3(%arg0: i32, %arg1: i32, %arg2: i32) -> (i32, i32, i32) {
    %c0_i32 = arith.constant 0 : i32
    %c0_i32_0 = arith.constant 0 : i32
    return %arg0, %arg1, %c0_i32 : i32, i32, i32
  }
}

module attributes {stable_mosaic.version = 11 : i64} {
  func.func @_matmul_acc_kernel(%arg0: i32, %arg1: i32, %arg2: i32, %arg3: memref<16x32xf32, #tpu.memory_space<vmem>>, %arg4: memref<32x32xf32, #tpu.memory_space<vmem>>, %arg5: memref<1x32xf32, #tpu.memory_space<vmem>>, %arg6: memref<16x32xf32, #tpu.memory_space<vmem>>, %arg7: memref<16x32xf32, #tpu.memory_space<vmem>>) attributes {dimension_semantics = [#tpu.dimension_semantics<parallel>, #tpu.dimension_semantics<parallel>, #tpu.dimension_semantics<arbitrary>], iteration_bounds = array<i64: 1, 1, 1>, scalar_prefetch = 0 : i64, scratch_operands = 1 : i64, tpu.core_type = #tpu.core_type<tc>, window_params = [{transform_indices = @transform_0, window_bounds = array<i64: 16, 32>}, {transform_indices = @transform_1, window_bounds = array<i64: 32, 32>}, {transform_indices = @transform_2, window_bounds = array<i64: 1, 32>}, {transform_indices = @transform_3, window_bounds = array<i64: 16, 32>}]} {
    %c0_i32 = arith.constant 0 : i32
    %0 = arith.cmpi eq, %arg2, %c0_i32 : i32
    %1 = arith.extui %0 : i1 to i32
    %c0_i32_0 = arith.constant 0 : i32
    %2 = arith.cmpi ne, %1, %c0_i32_0 : i32
    scf.if %2 {
      %cst_10 = arith.constant 0.000000e+00 : f32
      %12 = vector.broadcast %cst_10 : f32 to vector<16x32xf32>
      %c0_11 = arith.constant 0 : index
      %c0_12 = arith.constant 0 : index
      %13 = vector.load %arg7[%c0_11, %c0_12] : memref<16x32xf32, #tpu.memory_space<vmem>>, vector<16x32xf32>
      tpu.vector_store %arg7[%c0_11, %c0_12], %12 {strides = array<i32>} : memref<16x32xf32, #tpu.memory_space<vmem>>, vector<16x32xf32>,
    } else {
    }
    %c0 = arith.constant 0 : index
    %c0_1 = arith.constant 0 : index
    %3 = vector.load %arg7[%c0, %c0_1] : memref<16x32xf32, #tpu.memory_space<vmem>>, vector<16x32xf32>
    %c0_2 = arith.constant 0 : index
    %c0_3 = arith.constant 0 : index
    %4 = vector.load %arg3[%c0_2, %c0_3] : memref<16x32xf32, #tpu.memory_space<vmem>>, vector<16x32xf32>
    %c0_4 = arith.constant 0 : index
    %c0_5 = arith.constant 0 : index
    %5 = vector.load %arg4[%c0_4, %c0_5] : memref<32x32xf32, #tpu.memory_space<vmem>>, vector<32x32xf32>
    %cst = arith.constant dense<0.000000e+00> : vector<16x32xf32>
    %6 = tpu.matmul %4, %5, %cst {dimension_numbers = #tpu.dot_dimension_numbers<[1], [0], [0], [1], [0, 0, 1, 1], [], []>} : vector<16x32xf32>, vector<32x32xf32>, vector<16x32xf32> -> vector<16x32xf32>
    %7 = arith.addf %3, %6 : vector<16x32xf32>
    %c0_6 = arith.constant 0 : index
    %c0_7 = arith.constant 0 : index
    %8 = vector.load %arg7[%c0_6, %c0_7] : memref<16x32xf32, #tpu.memory_space<vmem>>, vector<16x32xf32>
    tpu.vector_store %arg7[%c0_6, %c0_7], %7 {strides = array<i32>} : memref<16x32xf32, #tpu.memory_space<vmem>>, vector<16x32xf32>,
    %c0_i32_8 = arith.constant 0 : i32
    %9 = arith.cmpi eq, %arg2, %c0_i32_8 : i32
    %10 = arith.extui %9 : i1 to i32
    %c0_i32_9 = arith.constant 0 : i32
    %11 = arith.cmpi ne, %10, %c0_i32_9 : i32
    scf.if %11 {
      %c0_10 = arith.constant 0 : index
      %c0_11 = arith.constant 0 : index
      %12 = vector.load %arg7[%c0_10, %c0_11] : memref<16x32xf32, #tpu.memory_space<vmem>>, vector<16x32xf32>
      %c0_12 = arith.constant 0 : index
      %c0_13 = arith.constant 0 : index
      %13 = vector.load %arg5[%c0_12, %c0_13] : memref<1x32xf32, #tpu.memory_space<vmem>>, vector<1x32xf32>
      %14 = vector.broadcast %13 : vector<1x32xf32> to vector<16x32xf32>
      %15 = arith.addf %12, %14 : vector<16x32xf32>
      %c0_14 = arith.constant 0 : index
      %c0_15 = arith.constant 0 : index
      %16 = vector.load %arg6[%c0_14, %c0_15] : memref<16x32xf32, #tpu.memory_space<vmem>>, vector<16x32xf32>
      tpu.vector_store %arg6[%c0_14, %c0_15], %15 {strides = array<i32>} : memref<16x32xf32, #tpu.memory_space<vmem>>, vector<16x32xf32>,
    } else {
    }
    return
  }
  func.func @transform_0(%arg0: i32, %arg1: i32, %arg2: i32) -> (i32, i32) {
    %c0_i32 = arith.constant 0 : i32
    return %arg0, %arg2 : i32, i32
  }
  func.func @transform_1(%arg0: i32, %arg1: i32, %arg2: i32) -> (i32, i32) {
    %c0_i32 = arith.constant 0 : i32
    return %arg2, %arg1 : i32, i32
  }
  func.func @transform_2(%arg0: i32, %arg1: i32, %arg2: i32) -> (i32, i32) {
    %c0_i32 = arith.constant 0 : i32
    %c0_i32_0 = arith.constant 0 : i32
    return %c0_i32, %arg1 : i32, i32
  }
  func.func @transform_3(%arg0: i32, %arg1: i32, %arg2: i32) -> (i32, i32) {
    %c0_i32 = arith.constant 0 : i32
    return %arg0, %arg1 : i32, i32
  }
}

module attributes {stable_mosaic.version = 11 : i64} {
  func.func @kernel(%arg0: i32, %arg1: i32, %arg2: memref<8x8x8xf32, #tpu.memory_space<vmem>>, %arg3: memref<8x128x8xf32, #tpu.memory_space<vmem>>, %arg4: memref<8x128x8xf32, #tpu.memory_space<vmem>>, %arg5: memref<1x1x128xf32, #tpu.memory_space<vmem>>, %arg6: memref<8x8x8xf32, #tpu.memory_space<vmem>>, %arg7: memref<8x8x128xf32, #tpu.memory_space<vmem>>) attributes {dimension_semantics = [#tpu.dimension_semantics<parallel>, #tpu.dimension_semantics<parallel>], iteration_bounds = array<i64: 1, 1>, scalar_prefetch = 0 : i64, scratch_operands = 0 : i64, tpu.core_type = #tpu.core_type<tc>, window_params = [{transform_indices = @transform_0, window_bounds = array<i64: 8, 8, 8>}, {transform_indices = @transform_1, window_bounds = array<i64: 8, 128, 8>}, {transform_indices = @transform_2, window_bounds = array<i64: 8, 128, 8>}, {pipeline_mode = #tpu.pipeline_mode<synchronous>, transform_indices = @transform_3, window_bounds = array<i64: 1, 1, 128>}, {transform_indices = @transform_4, window_bounds = array<i64: 8, 8, 8>}, {transform_indices = @transform_5, window_bounds = array<i64: 8, 8, 128>}]} {
    %c0 = arith.constant 0 : index
    %c0_0 = arith.constant 0 : index
    %c0_1 = arith.constant 0 : index
    %0 = vector.load %arg2[%c0, %c0_0, %c0_1] : memref<8x8x8xf32, #tpu.memory_space<vmem>>, vector<8x8x8xf32>
    %c0_2 = arith.constant 0 : index
    %c0_3 = arith.constant 0 : index
    %c0_4 = arith.constant 0 : index
    %1 = vector.load %arg3[%c0_2, %c0_3, %c0_4] : memref<8x128x8xf32, #tpu.memory_space<vmem>>, vector<8x128x8xf32>
    "tpu.trace_start"() <{level = 10 : i32, message = "gqe,gse->gqs"}> : () -> ()
    %cst = arith.constant dense<0.000000e+00> : vector<8x8x128xf32>
    %2 = tpu.matmul %0, %1, %cst {dimension_numbers = #tpu.dot_dimension_numbers<[2], [2], [1], [1], [0, 0, 0, 1, 1, 1], [0], [0]>} : vector<8x8x8xf32>, vector<8x128x8xf32>, vector<8x8x128xf32> -> vector<8x8x128xf32>
    "tpu.trace_stop"() : () -> ()
    %c0_5 = arith.constant 0 : index
    %c0_6 = arith.constant 0 : index
    %c0_7 = arith.constant 0 : index
    %3 = vector.load %arg5[%c0_5, %c0_6, %c0_7] : memref<1x1x128xf32, #tpu.memory_space<vmem>>, vector<1x1x128xf32>
    %4 = vector.broadcast %3 : vector<1x1x128xf32> to vector<8x8x128xf32>
    %5 = arith.addf %2, %4 : vector<8x8x128xf32>
    %cst_8 = arith.constant dense<0xFF800000> : vector<8x8xf32>
    %6 = vector.multi_reduction <maximumf>, %5, %cst_8 [2] : vector<8x8x128xf32> to vector<8x8xf32>
    %7 = vector.shape_cast %6 : vector<8x8xf32> to vector<8x8x1xf32>
    %8 = vector.broadcast %7 : vector<8x8x1xf32> to vector<8x8x128xf32>
    %9 = arith.subf %5, %8 : vector<8x8x128xf32>
    %10 = math.exp %9 : vector<8x8x128xf32>
    %cst_9 = arith.constant dense<0.000000e+00> : vector<8x8xf32>
    %11 = vector.multi_reduction <add>, %10, %cst_9 [2] : vector<8x8x128xf32> to vector<8x8xf32>
    %12 = vector.shape_cast %11 : vector<8x8xf32> to vector<8x8x1xf32>
    %cst_10 = arith.constant 1.000000e+00 : f32
    %13 = vector.broadcast %cst_10 : f32 to vector<8x8x1xf32>
    %14 = arith.divf %13, %12 : vector<8x8x1xf32>
    %15 = vector.broadcast %14 : vector<8x8x1xf32> to vector<8x8x128xf32>
    %16 = arith.mulf %10, %15 : vector<8x8x128xf32>
    %c0_11 = arith.constant 0 : index
    %c0_12 = arith.constant 0 : index
    %c0_13 = arith.constant 0 : index
    %17 = vector.load %arg4[%c0_11, %c0_12, %c0_13] : memref<8x128x8xf32, #tpu.memory_space<vmem>>, vector<8x128x8xf32>
    "tpu.trace_start"() <{level = 10 : i32, message = "gqs,gse->gqe"}> : () -> ()
    %cst_14 = arith.constant dense<0.000000e+00> : vector<8x8x8xf32>
    %18 = tpu.matmul %16, %17, %cst_14 {dimension_numbers = #tpu.dot_dimension_numbers<[2], [1], [1], [2], [0, 0, 0, 1, 1, 2], [0], [0]>} : vector<8x8x128xf32>, vector<8x128x8xf32>, vector<8x8x8xf32> -> vector<8x8x8xf32>
    "tpu.trace_stop"() : () -> ()
    %c0_15 = arith.constant 0 : index
    %c0_16 = arith.constant 0 : index
    %c0_17 = arith.constant 0 : index
    %19 = vector.load %arg6[%c0_15, %c0_16, %c0_17] : memref<8x8x8xf32, #tpu.memory_space<vmem>>, vector<8x8x8xf32>
    tpu.vector_store %arg6[%c0_15, %c0_16, %c0_17], %18 {strides = array<i32>} : memref<8x8x8xf32, #tpu.memory_space<vmem>>, vector<8x8x8xf32>,
    %c0_18 = arith.constant 0 : index
    %c0_19 = arith.constant 0 : index
    %c0_20 = arith.constant 0 : index
    %20 = vector.load %arg7[%c0_18, %c0_19, %c0_20] : memref<8x8x128xf32, #tpu.memory_space<vmem>>, vector<8x8x128xf32>
    tpu.vector_store %arg7[%c0_18, %c0_19, %c0_20], %16 {strides = array<i32>} : memref<8x8x128xf32, #tpu.memory_space<vmem>>, vector<8x8x128xf32>,
    return
  }
  func.func @transform_0(%arg0: i32, %arg1: i32) -> (i32, i32, i32) {
    %c0_i32 = arith.constant 0 : i32
    %c0_i32_0 = arith.constant 0 : i32
    return %arg0, %arg1, %c0_i32 : i32, i32, i32
  }
  func.func @transform_1(%arg0: i32, %arg1: i32) -> (i32, i32, i32) {
    %c0_i32 = arith.constant 0 : i32
    %c0_i32_0 = arith.constant 0 : i32
    %c0_i32_1 = arith.constant 0 : i32
    return %arg0, %c0_i32, %c0_i32_0 : i32, i32, i32
  }
  func.func @transform_2(%arg0: i32, %arg1: i32) -> (i32, i32, i32) {
    %c0_i32 = arith.constant 0 : i32
    %c0_i32_0 = arith.constant 0 : i32
    %c0_i32_1 = arith.constant 0 : i32
    return %arg0, %c0_i32, %c0_i32_0 : i32, i32, i32
  }
  func.func @transform_3(%arg0: i32, %arg1: i32) -> (i32, i32, i32) {
    %c0_i32 = arith.constant 0 : i32
    %c0_i32_0 = arith.constant 0 : i32
    %c0_i32_1 = arith.constant 0 : i32
    %c0_i32_2 = arith.constant 0 : i32
    return %c0_i32, %c0_i32_0, %c0_i32_1 : i32, i32, i32
  }
  func.func @transform_4(%arg0: i32, %arg1: i32) -> (i32, i32, i32) {
    %c0_i32 = arith.constant 0 : i32
    %c0_i32_0 = arith.constant 0 : i32
    return %arg0, %arg1, %c0_i32 : i32, i32, i32
  }
  func.func @transform_5(%arg0: i32, %arg1: i32) -> (i32, i32, i32) {
    %c0_i32 = arith.constant 0 : i32
    %c0_i32_0 = arith.constant 0 : i32
    return %arg0, %arg1, %c0_i32 : i32, i32, i32
  }
}

</mosaic_0001>

<llo_original>
// kernel: tpu_custom_call.1
$region0: #{tpu_custom_call.1}
  #allocation0 [shape = 'u32[]', space=smem, size = 0x4, offset = 0x4, fixed_abs, tag = 'smem constant byte address 0x4 - core index']
  #allocation1 [shape = 'u32[144,128]{1,0:T(1,128)}', space=vmem, size = 0x12000, scoped, tag = 'internal scratch']
  %s0 = inlined_call_operand.hbm [shape: f32[8,128], index: 0, kind: input, shape index: {}]
  %s1 = inlined_call_operand.hbm [shape: f32[16,128], index: 1, kind: input, shape index: {}]
  %s2 = inlined_call_operand.hbm [shape: f32[16,128], index: 2, kind: output, shape index: {}]
  %s3 = sld [smem:[#allocation0]]
  $region49: #{tpu_custom_call.1} parent=0
    _
  %s5 = ssub.s32 1, %s3
  %s6 = scalar_select 0, %s5, %s3
  $region1: #{tpu_custom_call.1} parent=0
    #allocation2 [shape = 'u8[4096]{0}', space=vmem, size = 0x1000, scoped, tag = 'input window, operand 0, single buffered']
    #allocation3 [shape = 's32[2]{0}', space=sflag, size = 0x8, scoped, tag = 'scoped memory for tpu_custom_call.1']
    #allocation4 [shape = 's32[2]{0}', space=sflag, size = 0x8, scoped, tag = 'scoped memory for tpu_custom_call.1']
    #allocation5 [shape = 'u8[8192]{0}', space=vmem, size = 0x2000, scoped, tag = 'input window, operand 1']
    #allocation6 [shape = 's32[2]{0}', space=sflag, size = 0x8, scoped, tag = 'scoped memory for tpu_custom_call.1']
    #allocation7 [shape = 'u8[8192]{0}', space=vmem, size = 0x2000, scoped, tag = 'output window, operand 0']
    %7 = vsyncpa [#allocation3], 0
    %8 = vsyncpa [#allocation6], 0
    %s9 = scalar_lea.sflag [#allocation6], 1
    %10 = vsyncpa %s9, 0
    %11 = vsyncpa [#allocation4], 0
    %s12 = scalar_lea.sflag [#allocation4], 1
    %13 = vsyncpa %s12, 0
    loop: start=0, step=1, limit=4
    $region2: #{tpu_custom_call.1} parent=1 // loop_pre_header
      _
    $region3: #{tpu_custom_call.1} parent=1 // loop_header
      %s15 = sphi 0, %s19
      %p16 = scmp.ge.s32.totalorder %s15, 4
      %s23 = sphi 0, %s23
      %s25 = sphi 0, %s23
      %s26 = sphi 0, %s25
      %s40 = sphi 0, %s26
      %s46 = sphi 0, %s48
      %s49 = sphi 0, %s46
      %s50 = sphi 0, %s49
      %s66 = sphi 0, %s50
      %s72 = sphi 0, %s74
      %s75 = sphi 0, %s72
      %s76 = sphi 0, %s75
      %s92 = sphi 0, %s76
    $region4: #{tpu_custom_call.1} parent=1 // loop_header_branch
      %18 = sbr.rel (%p16) target = $region8
    $region5: #{tpu_custom_call.1} parent=1 // loop_body
      %s20 = ssub.s32 %s15, 1
      %s21 = ssub.s32 %s15, 2
      %s22 = sadd.s32 %s15, 1
      %s24 = sadd.s32 %s23, 1
      %p27 = scmp.eq.s32.totalorder %s15, 1
      %p28 = scmp.ne.s32.totalorder %s23, %s25
      %p29 = scmp.eq.s32.totalorder %s15, 0
      %p30 = por %p28, %p29
      %p31 = scmp.ne.s32.totalorder %s23, %s25
      %p32 = scmp.eq.s32.totalorder %s20, 1
      %p33 = por %p31, %p32
      %p34 = scmp.ne.s32.totalorder %s25, %s26
      %p35 = scmp.eq.s32.totalorder %s20, 0
      %p36 = por %p34, %p35
      %p37 = scmp.ne.s32.totalorder %s25, %s26
      %p38 = scmp.eq.s32.totalorder %s21, 1
      %p39 = por %p37, %p38
      %p41 = scmp.ne.s32.totalorder %s26, %s40
      %p42 = scmp.eq.s32.totalorder %s21, 0
      %p43 = por %p41, %p42
      %s44 = ssub.s32 %s15, %s22
      %p45 = scmp.eq.s32.totalorder %s44, 0
      %s47 = sadd.s32 %s46, 1
      %s48 = scalar_select %p45, %s46, %s47
      %p51 = pneg %p45
      %p52 = scmp.eq.s32.totalorder %s15, 1
      %p53 = por %p51, %p52
      %p54 = scmp.ne.s32.totalorder %s46, %s49
      %p55 = scmp.eq.s32.totalorder %s15, 0
      %p56 = por %p54, %p55
      %p57 = scmp.ne.s32.totalorder %s46, %s49
      %p58 = scmp.eq.s32.totalorder %s20, 1
      %p59 = por %p57, %p58
      %p60 = scmp.ne.s32.totalorder %s49, %s50
      %p61 = scmp.eq.s32.totalorder %s20, 0
      %p62 = por %p60, %p61
      %p63 = scmp.ne.s32.totalorder %s49, %s50
      %p64 = scmp.eq.s32.totalorder %s21, 1
      %p65 = por %p63, %p64
      %p67 = scmp.ne.s32.totalorder %s50, %s66
      %p68 = scmp.eq.s32.totalorder %s21, 0
      %p69 = por %p67, %p68
      %s70 = ssub.s32 %s15, %s22
      %p71 = scmp.eq.s32.totalorder %s70, 0
      %s73 = sadd.s32 %s72, 1
      %s74 = scalar_select %p71, %s72, %s73
      %p77 = pneg %p71
      %p78 = scmp.eq.s32.totalorder %s15, 1
      %p79 = por %p77, %p78
      %p80 = scmp.ne.s32.totalorder %s72, %s75
      %p81 = scmp.eq.s32.totalorder %s15, 0
      %p82 = por %p80, %p81
      %p83 = scmp.ne.s32.totalorder %s72, %s75
      %p84 = scmp.eq.s32.totalorder %s20, 1
      %p85 = por %p83, %p84
      %p86 = scmp.ne.s32.totalorder %s75, %s76
      %p87 = scmp.eq.s32.totalorder %s20, 0
      %p88 = por %p86, %p87
      %p89 = scmp.ne.s32.totalorder %s75, %s76
      %p90 = scmp.eq.s32.totalorder %s21, 1
      %p91 = por %p89, %p90
      %p93 = scmp.ne.s32.totalorder %s76, %s92
      %p94 = scmp.eq.s32.totalorder %s21, 0
      %p95 = por %p93, %p94
      %p96 = scmp.le.s32.totalorder 1, %s15
      %p97 = scmp.lt.s32.totalorder %s15, 3
      %p98 = pnand %p96, %p97
      %p99 = pneg %p98
      // Predicated region
      $region9: #{tpu_custom_call.1} parent=5 // pred_check
        _
      $region10: #{tpu_custom_call.1} parent=5 // pred_check_branch
        %101 = sbr.rel (%p98) target = $region12
      $region11: #{tpu_custom_call.1} parent=5 // pred_region
        %s102 = ssub.s32 %s15, 1
        // Predicated region
        $region13: #{tpu_custom_call.1} parent=11 // pred_check
          %p103 = pneg %p36
        $region14: #{tpu_custom_call.1} parent=11 // pred_check_branch
          %105 = sbr.rel (%p103) target = $region16
        $region15: #{tpu_custom_call.1} parent=11 // pred_region
          %s107 = ssub.s32 128, 128
          %108 = vsyncadd [#allocation3], %s107
          %s110 = sshll.u32 [#allocation2], 4
          %s111 = int_to_ptr.vmem [resolvable:$true] %s110
          %113 = dma.hbm_to_vmem [thread:$0]  %s0, 128, %s111, [#allocation3]
        $region16: #{tpu_custom_call.1} parent=11 // pred_fallthru
          _
      $region12: #{tpu_custom_call.1} parent=5 // pred_fallthru
        _
      %p114 = scmp.lt.s32.totalorder %s15, 2
      // Predicated region
      $region17: #{tpu_custom_call.1} parent=5 // pred_check
        %p115 = pneg %p114
      $region18: #{tpu_custom_call.1} parent=5 // pred_check_branch
        %117 = sbr.rel (%p115) target = $region20
      $region19: #{tpu_custom_call.1} parent=5 // pred_region
        // Predicated region
        $region21: #{tpu_custom_call.1} parent=19 // pred_check
          %p118 = pneg %p56
        $region22: #{tpu_custom_call.1} parent=19 // pred_check_branch
          %120 = sbr.rel (%p118) target = $region24
        $region23: #{tpu_custom_call.1} parent=19 // pred_region
          %s121 = sand.u32 %s46, 1
          %s122 = scalar_lea.sflag [#allocation6], %s121
          %s123 = sand.u32 %s46, 1
          %s124 = smul.addr %s123, 8
          %s125 = scalar_lea.vmem [#allocation5], %s124
          %s127 = ssub.s32 128, 128
          %128 = vsyncadd %s122, %s127
          %s129 = smul.addr %s15, 128
          %s130 = scalar_lea.hbm %s1, %s129
          %s132 = sshll.u32 %s125, 4
          %s133 = int_to_ptr.vmem [resolvable:$true] %s132
          %135 = dma.hbm_to_vmem [thread:$0]  %s130, 128, %s133, %s122
        $region24: #{tpu_custom_call.1} parent=19 // pred_fallthru
          _
      $region20: #{tpu_custom_call.1} parent=5 // pred_fallthru
        _
      %p136 = scmp.le.s32.totalorder 1, %s15
      %p137 = scmp.lt.s32.totalorder %s15, 3
      %p138 = pnand %p136, %p137
      %p139 = pneg %p138
      // Predicated region
      $region25: #{tpu_custom_call.1} parent=5 // pred_check
        _
      $region26: #{tpu_custom_call.1} parent=5 // pred_check_branch
        %141 = sbr.rel (%p138) target = $region28
      $region27: #{tpu_custom_call.1} parent=5 // pred_region
        %s142 = ssub.s32 %s15, 1
        // Predicated region
        $region29: #{tpu_custom_call.1} parent=27 // pred_check
          %p143 = pneg %p36
        $region30: #{tpu_custom_call.1} parent=27 // pred_check_branch
          %145 = sbr.rel (%p143) target = $region32
        $region31: #{tpu_custom_call.1} parent=27 // pred_region
          %146 = dma.done [#allocation3], 128
        $region32: #{tpu_custom_call.1} parent=27 // pred_fallthru
          _
        %s147 = sand.u32 %s49, 1
        %s148 = scalar_lea.sflag [#allocation6], %s147
        %s149 = sand.u32 %s49, 1
        %s150 = smul.addr %s149, 8
        %s151 = scalar_lea.vmem [#allocation5], %s150
        // Predicated region
        $region33: #{tpu_custom_call.1} parent=27 // pred_check
          %p152 = pneg %p62
        $region34: #{tpu_custom_call.1} parent=27 // pred_check_branch
          %154 = sbr.rel (%p152) target = $region36
        $region35: #{tpu_custom_call.1} parent=27 // pred_region
          %155 = dma.done %s148, 128
        $region36: #{tpu_custom_call.1} parent=27 // pred_fallthru
          _
        %p156 = pneg %p36
        %p157 = pneg %p33
        %s158 = sand.u32 %s49, 1
        %s159 = scalar_lea.sflag [#allocation6], %s158
        %s160 = sand.u32 %s49, 1
        %s161 = smul.addr %s160, 8
        %s162 = scalar_lea.vmem [#allocation5], %s161
        %p163 = pneg %p62
        %p164 = pneg %p59
        %p165 = pneg %p88
        %p166 = pneg %p85
        %s167 = sand.u32 %s75, 1
        %s168 = scalar_lea.sflag [#allocation4], %s167
        %s169 = sand.u32 %s75, 1
        %s170 = smul.addr %s169, 8
        %s171 = scalar_lea.vmem [#allocation7], %s170
        %v172 = vld [vmem:[%s151] sm:$0xff]
        %v173 = vld [vmem:[#allocation2] sm:$0xff]
        %v174 = vadd.f32 %v172, %v173
        %175 = vst [vmem:[%s171] sm:$0xff] %v174
        %s176 = sand.u32 %s75, 1
        %s177 = scalar_lea.sflag [#allocation4], %s176
        %s178 = sand.u32 %s75, 1
        %s179 = smul.addr %s178, 8
        %s180 = scalar_lea.vmem [#allocation7], %s179
        // Predicated region
        $region37: #{tpu_custom_call.1} parent=27 // pred_check
          %p181 = pneg %p85
        $region38: #{tpu_custom_call.1} parent=27 // pred_check_branch
          %183 = sbr.rel (%p181) target = $region40
        $region39: #{tpu_custom_call.1} parent=27 // pred_region
          %s185 = ssub.s32 128, 128
          %186 = vsyncadd %s177, %s185
          %s187 = smul.addr %s20, 128
          %s188 = scalar_lea.hbm %s2, %s187
          %s190 = sshll.u32 %s180, 4
          %s191 = int_to_ptr.vmem [resolvable:$true] %s190
          %193 = dma.vmem_to_hbm [thread:$0]  %s191, 128, %s188, %s177
        $region40: #{tpu_custom_call.1} parent=27 // pred_fallthru
          _
      $region28: #{tpu_custom_call.1} parent=5 // pred_fallthru
        _
      %p194 = scmp.le.s32.totalorder 2, %s15
      // Predicated region
      $region41: #{tpu_custom_call.1} parent=5 // pred_check
        %p195 = pneg %p194
      $region42: #{tpu_custom_call.1} parent=5 // pred_check_branch
        %197 = sbr.rel (%p195) target = $region44
      $region43: #{tpu_custom_call.1} parent=5 // pred_region
        %s198 = ssub.s32 %s15, 2
        // Predicated region
        $region45: #{tpu_custom_call.1} parent=43 // pred_check
          %p199 = pneg %p91
        $region46: #{tpu_custom_call.1} parent=43 // pred_check_branch
          %201 = sbr.rel (%p199) target = $region48
        $region47: #{tpu_custom_call.1} parent=43 // pred_region
          %s202 = sand.u32 %s76, 1
          %s203 = scalar_lea.sflag [#allocation4], %s202
          %s204 = sand.u32 %s76, 1
          %s205 = smul.addr %s204, 8
          %s206 = scalar_lea.vmem [#allocation7], %s205
          %207 = dma.done %s203, 128
        $region48: #{tpu_custom_call.1} parent=43 // pred_fallthru
          _
      $region44: #{tpu_custom_call.1} parent=5 // pred_fallthru
        _
    $region6: #{tpu_custom_call.1} parent=1 // loop_footer
      %s19 = sadd.s32 1, %s15
    $region7: #{tpu_custom_call.1} parent=1 // loop_footer_branch
      %14 = sbr.rel target = $region3
    $region8: #{tpu_custom_call.1} parent=1 // loop_exit
      _
    %208 = vsyncpa [#allocation3], 1
    %s209 = scalar_lea.sflag [#allocation3], 1
    %210 = vsyncpa %s209, 1
    %211 = vsyncpa [#allocation6], 1
    %s212 = scalar_lea.sflag [#allocation6], 1
    %213 = vsyncpa %s212, 1
    %214 = vsyncpa [#allocation4], 1
    %s215 = scalar_lea.sflag [#allocation4], 1
    %216 = vsyncpa %s215, 1

// kernel: tsmixer_forward.6
$region0: #{tsmixer_forward.6}
  #allocation0 [shape = 'u32[]', space=smem, size = 0x4, offset = 0x4, fixed_abs, tag = 'smem constant byte address 0x4 - core index']
  #allocation1 [shape = 'u32[144,128]{1,0:T(1,128)}', space=vmem, size = 0x12000, scoped, tag = 'internal scratch']
  #allocation2 [shape = 'f32[16,32]{1,0:T(8,128)}', space=vmem, size = 0x2000, scoped, tag = 'scratch operand']
  %s0 = inlined_call_operand.vmem [shape: f32[16,32], index: 0, kind: input, shape index: {}]
  %s1 = inlined_call_operand.vmem [shape: f32[32,32], index: 1, kind: input, shape index: {}]
  %s2 = inlined_call_operand.vmem [shape: f32[1,32], index: 2, kind: input, shape index: {}]
  %s3 = inlined_call_operand.vmem [shape: f32[16,32], index: 3, kind: output, shape index: {}]
  %s4 = sld [smem:[#allocation0]]
  $region30: #{tsmixer_forward.6} parent=0
    _
  %s6 = ssub.s32 1, %s4
  %s7 = scalar_select 0, %s6, %s4
  // Predicated region
  $region2: #{tsmixer_forward.6} parent=0 // pred_check
    _
  $region3: #{tsmixer_forward.6} parent=0 // pred_check_branch
    %9 = sbr.rel (0) target = $region5
  $region4: #{tsmixer_forward.6} parent=0 // pred_region
    _
  $region5: #{tsmixer_forward.6} parent=0 // pred_fallthru
    _
  // Predicated region
  $region6: #{tsmixer_forward.6} parent=0 // pred_check
    _
  $region7: #{tsmixer_forward.6} parent=0 // pred_check_branch
    %11 = sbr.rel (0) target = $region9
  $region8: #{tsmixer_forward.6} parent=0 // pred_region
    _
  $region9: #{tsmixer_forward.6} parent=0 // pred_fallthru
    _
  // Predicated region
  $region10: #{tsmixer_forward.6} parent=0 // pred_check
    _
  $region11: #{tsmixer_forward.6} parent=0 // pred_check_branch
    %13 = sbr.rel (0) target = $region13
  $region12: #{tsmixer_forward.6} parent=0 // pred_region
    _
  $region13: #{tsmixer_forward.6} parent=0 // pred_fallthru
    _
  %p14 = scmp.eq.s32.totalorder 0, 0
  // Predicated region
  $region14: #{tsmixer_forward.6} parent=0 // pred_check
    %p15 = pneg %p14
  $region15: #{tsmixer_forward.6} parent=0 // pred_check_branch
    %17 = sbr.rel (%p15) target = $region17
  $region16: #{tsmixer_forward.6} parent=0 // pred_region
    %vm18 = vcmask 261120
    %19 = vst.msk [vmem:[#allocation2] sm:$0xff] %vm18, 0.0
    %20 = vst.msk [vmem:[#allocation2 + $0x8] sm:$0xff] %vm18, 0.0
  $region17: #{tsmixer_forward.6} parent=0 // pred_fallthru
    _
  %v21 = vld [vmem:[#allocation2] sm:$0xff]
  %v22 = vld [vmem:[#allocation2 + $0x8] sm:$0xff]
  %v23 = vld [vmem:[%s0] sm:$0xff]
  %v24 = vld [vmem:[%s0 + $0x8] sm:$0xff]
  %v25 = vld [vmem:[%s1] sm:$0xff]
  %v26 = vld [vmem:[%s1 + $0x8] sm:$0xff]
  %v27 = vld [vmem:[%s1 + $0x10] sm:$0xff]
  %v28 = vld [vmem:[%s1 + $0x18] sm:$0xff]
  %vm29 = vcmask 261120
  %v31 = vsel %vm29, %v23, 0
  %v34 = vsel %vm29, %v24, 0
  %36 = vmatprep.subr.mxu0 0.0
  %37 = vmatpush1.msra.mxu0 %v25
  %38 = vmatprep.subr.mxu0 0.0
  %39 = vmatpush1.msra.mxu0 %v26
  %40 = vmatprep.subr.mxu0 0.0
  %41 = vmatpush1.msra.mxu0 %v27
  %42 = vmatprep.subr.mxu0 0.0
  %43 = vmatpush1.msra.mxu0 %v28
  %44 = vmatprep.subr.mxu0 0.0
  %45 = vmatpush1.msra.mxu0 0.0
  %46 = vmatprep.subr.mxu0 0.0
  %47 = vmatpush1.msra.mxu0 0.0
  %48 = vmatprep.subr.mxu0 0.0
  %49 = vmatpush1.msra.mxu0 0.0
  %50 = vmatprep.subr.mxu0 0.0
  %51 = vmatpush1.msra.mxu0 0.0
  %52 = vmatprep.subr.mxu0 0.0
  %53 = vmatpush1.msra.mxu0 0.0
  %54 = vmatprep.subr.mxu0 0.0
  %55 = vmatpush1.msra.mxu0 0.0
  %56 = vmatprep.subr.mxu0 0.0
  %57 = vmatpush1.msra.mxu0 0.0
  %58 = vmatprep.subr.mxu0 0.0
  %59 = vmatpush1.msra.mxu0 0.0
  %60 = vmatprep.subr.mxu0 0.0
  %61 = vmatpush1.msra.mxu0 0.0
  %62 = vmatprep.subr.mxu0 0.0
  %63 = vmatpush1.msra.mxu0 0.0
  %64 = vmatprep.subr.mxu0 0.0
  %65 = vmatpush1.msra.mxu0 0.0
  %66 = vmatprep.subr.mxu0 0.0
  %67 = vmatpush1.msra.mxu0 0.0
  %68 = vmatprep.subr.mxu0 0.0
  %69 = vmatpush1.msra.mxu0 0.0
  %70 = vmatprep.subr.mxu0 0.0
  %71 = vmatpush1.msra.mxu0 0.0
  %72 = vmatprep.subr.mxu0 0.0
  %73 = vmatpush1.msra.mxu0 0.0
  %74 = vmatprep.subr.mxu0 0.0
  %75 = vmatpush1.msra.mxu0 0.0
  %76 = vmatprep.subr.mxu0 0.0
  %77 = vmatpush1.msra.mxu0 0.0
  %78 = vmatprep.subr.mxu0 0.0
  %79 = vmatpush1.msra.mxu0 0.0
  %80 = vmatprep.subr.mxu0 0.0
  %81 = vmatpush1.msra.mxu0 0.0
  %82 = vmatprep.subr.mxu0 0.0
  %83 = vmatpush1.msra.mxu0 0.0
  %84 = vmatprep.subr.mxu0 0.0
  %85 = vmatpush1.msra.mxu0 0.0
  %86 = vmatprep.subr.mxu0 0.0
  %87 = vmatpush1.msra.mxu0 0.0
  %88 = vmatprep.subr.mxu0 0.0
  %89 = vmatpush1.msra.mxu0 0.0
  %90 = vmatprep.subr.mxu0 0.0
  %91 = vmatpush1.msra.mxu0 0.0
  %92 = vmatprep.subr.mxu0 0.0
  %93 = vmatpush1.msra.mxu0 0.0
  %94 = vmatprep.subr.mxu0 0.0
  %95 = vmatpush1.msra.mxu0 0.0
  %96 = vmatprep.subr.mxu0 0.0
  %97 = vmatpush1.msra.mxu0 0.0
  %98 = vmatprep.subr.mxu0 0.0
  %99 = vmatpush1.msra.mxu0 0.0
  %100 = vmatprep.mubr.f32.mxu0 0.0
  %101 = vmatmul.mubr.f32.gmra.mrb[0].mxu0 %v31
  %v102 = vpop.f32.mrb[0].mxu0
  %v103 = vadd.f32 0.0, %v102
  %v104 = vpop.f32.mrb[0].mxu0
  %105 = vmatprep.mubr.f32.mxu0 0.0
  %106 = vmatmul.mubr.f32.gmra.mrb[0].mxu0 %v34
  %v107 = vpop.f32.mrb[0].mxu0
  %v108 = vadd.f32 0.0, %v107
  %v109 = vpop.f32.mrb[0].mxu0
  %110 = vdwg.mxu0
  %v111 = vadd.f32 %v21, %v103
  %v112 = vadd.f32 %v22, %v108
  %113 = vst.msk [vmem:[#allocation2] sm:$0xff] %vm29, %v111
  %114 = vst.msk [vmem:[#allocation2 + $0x8] sm:$0xff] %vm29, %v112
  // Predicated region
  $region18: #{tsmixer_forward.6} parent=0 // pred_check
    %p115 = pneg %p14
  $region19: #{tsmixer_forward.6} parent=0 // pred_check_branch
    %117 = sbr.rel (%p115) target = $region21
  $region20: #{tsmixer_forward.6} parent=0 // pred_region
    %v118 = vld [vmem:[#allocation2] sm:$0xff]
    %v119 = vld [vmem:[#allocation2 + $0x8] sm:$0xff]
    %v120 = vld [vmem:[%s2] sm:$0x1]
    %v122 = vlaneseq
    %v123 = vshrl.u32 %v122, 7
    %v124 = vsub.s32 0, %v123
    %v125 = vrot.slane %v120, %v124
    %v127 = vadd.f32 %v118, %v125
    %v128 = vadd.f32 %v119, %v125
    %129 = vst.msk [vmem:[%s3] sm:$0xff] %vm29, %v127
    %130 = vst.msk [vmem:[%s3 + $0x8] sm:$0xff] %vm29, %v128
  $region21: #{tsmixer_forward.6} parent=0 // pred_fallthru
    _
  // Predicated region
  $region22: #{tsmixer_forward.6} parent=0 // pred_check
    _
  $region23: #{tsmixer_forward.6} parent=0 // pred_check_branch
    %132 = sbr.rel (0) target = $region25
  $region24: #{tsmixer_forward.6} parent=0 // pred_region
    _
  $region25: #{tsmixer_forward.6} parent=0 // pred_fallthru
    _
  // Predicated region
  $region26: #{tsmixer_forward.6} parent=0 // pred_check
    _
  $region27: #{tsmixer_forward.6} parent=0 // pred_check_branch
    %134 = sbr.rel (0) target = $region29
  $region28: #{tsmixer_forward.6} parent=0 // pred_region
    _
  $region29: #{tsmixer_forward.6} parent=0 // pred_fallthru
    _

// kernel: tsmixer_forward.9
$region0: #{tsmixer_forward.9}
  #allocation0 [shape = 'u32[]', space=smem, size = 0x4, offset = 0x4, fixed_abs, tag = 'smem constant byte address 0x4 - core index']
  #allocation1 [shape = 'u32[144,128]{1,0:T(1,128)}', space=vmem, size = 0x12000, scoped, tag = 'internal scratch']
  #allocation2 [shape = 'f32[8,32]{1,0:T(8,128)}', space=vmem, size = 0x1000, scoped, tag = 'scratch operand']
  %s0 = inlined_call_operand.vmem [shape: f32[2,4,8,8], index: 0, kind: input, shape index: {}]
  %s1 = inlined_call_operand.vmem [shape: f32[4,8,32], index: 1, kind: input, shape index: {}]
  %s2 = inlined_call_operand.vmem [shape: f32[1,32], index: 2, kind: input, shape index: {}]
  %s3 = inlined_call_operand.hbm [shape: f32[2,8,32], index: 3, kind: output, shape index: {}]
  %s4 = sld [smem:[#allocation0]]
  $region53: #{tsmixer_forward.9} parent=0
    _
  %s6 = ssub.s32 1, %s4
  %s7 = scalar_select 0, %s6, %s4
  $region1: #{tsmixer_forward.9} parent=0
    #allocation3 [shape = 'u8[8192]{0}', space=vmem, size = 0x2000, scoped, tag = 'output window, operand 0']
    #allocation4 [shape = 's32[2]{0}', space=sflag, size = 0x8, scoped, tag = 'scoped memory for tsmixer_forward.9']
    %8 = vsyncpa [#allocation4], 0
    %s9 = scalar_lea.sflag [#allocation4], 1
    %10 = vsyncpa %s9, 0
    loop: start=0, step=1, limit=10
    $region2: #{tsmixer_forward.9} parent=1 // loop_pre_header
      _
    $region3: #{tsmixer_forward.9} parent=1 // loop_header
      %s12 = sphi 0, %s16
      %p13 = scmp.ge.s32.totalorder %s12, 10
      %s19 = sphi 0, %s38
      %s20 = sphi 0, %s34
      %s21 = sphi 0, %s30
      %s22 = sphi 0, %s19
      %s23 = sphi 0, %s20
      %s24 = sphi 0, %s21
      %s25 = sphi 0, %s22
      %s26 = sphi 0, %s23
      %s27 = sphi 0, %s24
      %s45 = sphi 0, %s47
      %s48 = sphi 0, %s45
      %s49 = sphi 0, %s48
      %s65 = sphi 0, %s49
      %s71 = sphi 0, %s73
      %s74 = sphi 0, %s71
      %s75 = sphi 0, %s74
      %s91 = sphi 0, %s75
      %s95 = sphi 0, %s95
      %s97 = sphi 0, %s95
      %s98 = sphi 0, %s97
      %s112 = sphi 0, %s98
      %s120 = sphi 0, %s122
      %s123 = sphi 0, %s120
      %s124 = sphi 0, %s123
      %s140 = sphi 0, %s124
    $region4: #{tsmixer_forward.9} parent=1 // loop_header_branch
      %15 = sbr.rel (%p13) target = $region8
    $region5: #{tsmixer_forward.9} parent=1 // loop_body
      %s17 = ssub.s32 %s12, 1
      %s18 = ssub.s32 %s12, 2
      %s28 = sadd.s32 1, %s21
      %p29 = scmp.ge.s32.totalorder %s28, 4
      %s30 = scalar_select %p29, 0, %s28
      %s31 = sadd.s32 1, %s20
      %s32 = scalar_select %p29, %s31, %s20
      %p33 = scmp.ge.s32.totalorder %s32, 1
      %s34 = scalar_select %p33, 0, %s32
      %s35 = sadd.s32 1, %s19
      %s36 = scalar_select %p33, %s35, %s19
      %p37 = scmp.ge.s32.totalorder %s36, 2
      %s38 = scalar_select %p37, 0, %s36
      %s39 = ssub.s32 %s19, %s38
      %s40 = ssub.s32 %s21, %s30
      %s41 = sor.u32 %s39, %s40
      %s42 = ssub.s32 %s20, %s34
      %s43 = sor.u32 %s41, %s42
      %p44 = scmp.eq.s32.totalorder %s43, 0
      %s46 = sadd.s32 %s45, 1
      %s47 = scalar_select %p44, %s45, %s46
      %p50 = pneg %p44
      %p51 = scmp.eq.s32.totalorder %s12, 7
      %p52 = por %p50, %p51
      %p53 = scmp.ne.s32.totalorder %s45, %s48
      %p54 = scmp.eq.s32.totalorder %s12, 0
      %p55 = por %p53, %p54
      %p56 = scmp.ne.s32.totalorder %s45, %s48
      %p57 = scmp.eq.s32.totalorder %s17, 7
      %p58 = por %p56, %p57
      %p59 = scmp.ne.s32.totalorder %s48, %s49
      %p60 = scmp.eq.s32.totalorder %s17, 0
      %p61 = por %p59, %p60
      %p62 = scmp.ne.s32.totalorder %s48, %s49
      %p63 = scmp.eq.s32.totalorder %s18, 7
      %p64 = por %p62, %p63
      %p66 = scmp.ne.s32.totalorder %s49, %s65
      %p67 = scmp.eq.s32.totalorder %s18, 0
      %p68 = por %p66, %p67
      %s69 = ssub.s32 %s21, %s30
      %p70 = scmp.eq.s32.totalorder %s69, 0
      %s72 = sadd.s32 %s71, 1
      %s73 = scalar_select %p70, %s71, %s72
      %p76 = pneg %p70
      %p77 = scmp.eq.s32.totalorder %s12, 7
      %p78 = por %p76, %p77
      %p79 = scmp.ne.s32.totalorder %s71, %s74
      %p80 = scmp.eq.s32.totalorder %s12, 0
      %p81 = por %p79, %p80
      %p82 = scmp.ne.s32.totalorder %s71, %s74
      %p83 = scmp.eq.s32.totalorder %s17, 7
      %p84 = por %p82, %p83
      %p85 = scmp.ne.s32.totalorder %s74, %s75
      %p86 = scmp.eq.s32.totalorder %s17, 0
      %p87 = por %p85, %p86
      %p88 = scmp.ne.s32.totalorder %s74, %s75
      %p89 = scmp.eq.s32.totalorder %s18, 7
      %p90 = por %p88, %p89
      %p92 = scmp.ne.s32.totalorder %s75, %s91
      %p93 = scmp.eq.s32.totalorder %s18, 0
      %p94 = por %p92, %p93
      %s96 = sadd.s32 %s95, 1
      %p99 = scmp.eq.s32.totalorder %s12, 7
      %p100 = scmp.ne.s32.totalorder %s95, %s97
      %p101 = scmp.eq.s32.totalorder %s12, 0
      %p102 = por %p100, %p101
      %p103 = scmp.ne.s32.totalorder %s95, %s97
      %p104 = scmp.eq.s32.totalorder %s17, 7
      %p105 = por %p103, %p104
      %p106 = scmp.ne.s32.totalorder %s97, %s98
      %p107 = scmp.eq.s32.totalorder %s17, 0
      %p108 = por %p106, %p107
      %p109 = scmp.ne.s32.totalorder %s97, %s98
      %p110 = scmp.eq.s32.totalorder %s18, 7
      %p111 = por %p109, %p110
      %p113 = scmp.ne.s32.totalorder %s98, %s112
      %p114 = scmp.eq.s32.totalorder %s18, 0
      %p115 = por %p113, %p114
      %s116 = ssub.s32 %s19, %s38
      %s117 = ssub.s32 %s20, %s34
      %s118 = sor.u32 %s116, %s117
      %p119 = scmp.eq.s32.totalorder %s118, 0
      %s121 = sadd.s32 %s120, 1
      %s122 = scalar_select %p119, %s120, %s121
      %p125 = pneg %p119
      %p126 = scmp.eq.s32.totalorder %s12, 7
      %p127 = por %p125, %p126
      %p128 = scmp.ne.s32.totalorder %s120, %s123
      %p129 = scmp.eq.s32.totalorder %s12, 0
      %p130 = por %p128, %p129
      %p131 = scmp.ne.s32.totalorder %s120, %s123
      %p132 = scmp.eq.s32.totalorder %s17, 7
      %p133 = por %p131, %p132
      %p134 = scmp.ne.s32.totalorder %s123, %s124
      %p135 = scmp.eq.s32.totalorder %s17, 0
      %p136 = por %p134, %p135
      %p137 = scmp.ne.s32.totalorder %s123, %s124
      %p138 = scmp.eq.s32.totalorder %s18, 7
      %p139 = por %p137, %p138
      %p141 = scmp.ne.s32.totalorder %s124, %s140
      %p142 = scmp.eq.s32.totalorder %s18, 0
      %p143 = por %p141, %p142
      %p144 = scmp.le.s32.totalorder 1, %s12
      %p145 = scmp.lt.s32.totalorder %s12, 9
      %p146 = pnand %p144, %p145
      %p147 = pneg %p146
      // Predicated region
      $region9: #{tsmixer_forward.9} parent=5 // pred_check
        _
      $region10: #{tsmixer_forward.9} parent=5 // pred_check_branch
        %149 = sbr.rel (%p146) target = $region12
      $region11: #{tsmixer_forward.9} parent=5 // pred_region
        %s150 = ssub.s32 %s12, 1
        // Predicated region
        $region13: #{tsmixer_forward.9} parent=11 // pred_check
          %p151 = pneg %p108
        $region14: #{tsmixer_forward.9} parent=11 // pred_check_branch
          %153 = sbr.rel (%p151) target = $region16
        $region15: #{tsmixer_forward.9} parent=11 // pred_region
          _
        $region16: #{tsmixer_forward.9} parent=11 // pred_fallthru
          _
      $region12: #{tsmixer_forward.9} parent=5 // pred_fallthru
        _
      %p154 = scmp.lt.s32.totalorder %s12, 8
      // Predicated region
      $region17: #{tsmixer_forward.9} parent=5 // pred_check
        %p155 = pneg %p154
      $region18: #{tsmixer_forward.9} parent=5 // pred_check_branch
        %157 = sbr.rel (%p155) target = $region20
      $region19: #{tsmixer_forward.9} parent=5 // pred_region
        // Predicated region
        $region21: #{tsmixer_forward.9} parent=19 // pred_check
          %p158 = pneg %p55
        $region22: #{tsmixer_forward.9} parent=19 // pred_check_branch
          %160 = sbr.rel (%p158) target = $region24
        $region23: #{tsmixer_forward.9} parent=19 // pred_region
          %p161 = scmp.lt.s32.totalorder %s19, 1
          %s162 = scalar_select %p161, %s19, 1
          %p163 = scmp.lt.s32.totalorder %s21, 3
          %s164 = scalar_select %p163, %s21, 3
          %p165 = scmp.lt.s32.totalorder %s20, 0
          %s166 = scalar_select %p165, %s20, 0
          %s167 = sadd.s32 %s166, %s164
          %s168 = smul.addr %s162, 4
          %s169 = sadd.s32 %s167, %s168
          %s170 = smul.addr %s169, 8
          %s171 = scalar_lea.vmem %s0, %s170
        $region24: #{tsmixer_forward.9} parent=19 // pred_fallthru
          _
        // Predicated region
        $region25: #{tsmixer_forward.9} parent=19 // pred_check
          %p172 = pneg %p81
        $region26: #{tsmixer_forward.9} parent=19 // pred_check_branch
          %174 = sbr.rel (%p172) target = $region28
        $region27: #{tsmixer_forward.9} parent=19 // pred_region
          %p175 = scmp.lt.s32.totalorder %s21, 3
          %s176 = scalar_select %p175, %s21, 3
          %s177 = smul.addr %s176, 8
          %s178 = scalar_lea.vmem %s1, %s177
        $region28: #{tsmixer_forward.9} parent=19 // pred_fallthru
          _
      $region20: #{tsmixer_forward.9} parent=5 // pred_fallthru
        _
      %p179 = scmp.le.s32.totalorder 1, %s12
      %p180 = scmp.lt.s32.totalorder %s12, 9
      %p181 = pnand %p179, %p180
      %p182 = pneg %p181
      // Predicated region
      $region29: #{tsmixer_forward.9} parent=5 // pred_check
        _
      $region30: #{tsmixer_forward.9} parent=5 // pred_check_branch
        %184 = sbr.rel (%p181) target = $region32
      $region31: #{tsmixer_forward.9} parent=5 // pred_region
        %s185 = ssub.s32 %s12, 1
        %p186 = scmp.lt.s32.totalorder %s22, 1
        %s187 = scalar_select %p186, %s22, 1
        %p188 = scmp.lt.s32.totalorder %s24, 3
        %s189 = scalar_select %p188, %s24, 3
        %p190 = scmp.lt.s32.totalorder %s23, 0
        %s191 = scalar_select %p190, %s23, 0
        %s192 = sadd.s32 %s191, %s189
        %s193 = smul.addr %s187, 4
        %s194 = sadd.s32 %s192, %s193
        %s195 = smul.addr %s194, 8
        %s196 = scalar_lea.vmem %s0, %s195
        %p197 = pneg %p61
        %p198 = pneg %p58
        %p199 = scmp.lt.s32.totalorder %s24, 3
        %s200 = scalar_select %p199, %s24, 3
        %s201 = smul.addr %s200, 8
        %s202 = scalar_lea.vmem %s1, %s201
        %p203 = pneg %p87
        %p204 = pneg %p84
        %p205 = pneg %p108
        %p206 = pneg %p105
        %p207 = pneg %p136
        %p208 = pneg %p133
        %s209 = sand.u32 %s123, 1
        %s210 = scalar_lea.sflag [#allocation4], %s209
        %s211 = sand.u32 %s123, 1
        %s212 = smul.addr %s211, 8
        %s213 = scalar_lea.vmem [#allocation3], %s212
        %p214 = scmp.lt.s32.totalorder %s22, 1
        %s215 = scalar_select %p214, %s22, 1
        %p216 = scmp.lt.s32.totalorder %s24, 3
        %s217 = scalar_select %p216, %s24, 3
        %p218 = scmp.lt.s32.totalorder %s23, 0
        %s219 = scalar_select %p218, %s23, 0
        %s220 = sadd.s32 %s219, %s217
        %s221 = smul.addr %s215, 4
        %s222 = sadd.s32 %s220, %s221
        %s223 = smul.addr %s222, 8
        %s224 = scalar_lea.vmem %s0, %s223
        %p225 = scmp.lt.s32.totalorder %s24, 3
        %s226 = scalar_select %p225, %s24, 3
        %s227 = smul.addr %s226, 8
        %s228 = scalar_lea.vmem %s1, %s227
        %p229 = scmp.eq.s32.totalorder %s24, 0
        // Predicated region
        $region33: #{tsmixer_forward.9} parent=31 // pred_check
          %p230 = pneg %p229
        $region34: #{tsmixer_forward.9} parent=31 // pred_check_branch
          %232 = sbr.rel (%p230) target = $region36
        $region35: #{tsmixer_forward.9} parent=31 // pred_region
          %vm233 = vcmask 261120
          %234 = vst.msk [vmem:[#allocation2] sm:$0xff] %vm233, 0.0
        $region36: #{tsmixer_forward.9} parent=31 // pred_fallthru
          _
        %v235 = vld [vmem:[#allocation2] sm:$0xff]
        %v236 = vld [vmem:[%s224] sm:$0xff]
        %v237 = vld [vmem:[%s228] sm:$0xff]
        %vm238 = vcmask 64512
        %v240 = vsel %vm238, %v236, 0
        %242 = vmatprep.subr.mxu0 0.0
        %243 = vmatpush1.msra.mxu0 %v237
        %244 = vmatprep.subr.mxu0 0.0
        %245 = vmatpush1.msra.mxu0 0.0
        %246 = vmatprep.subr.mxu0 0.0
        %247 = vmatpush1.msra.mxu0 0.0
        %248 = vmatprep.subr.mxu0 0.0
        %249 = vmatpush1.msra.mxu0 0.0
        %250 = vmatprep.subr.mxu0 0.0
        %251 = vmatpush1.msra.mxu0 0.0
        %252 = vmatprep.subr.mxu0 0.0
        %253 = vmatpush1.msra.mxu0 0.0
        %254 = vmatprep.subr.mxu0 0.0
        %255 = vmatpush1.msra.mxu0 0.0
        %256 = vmatprep.subr.mxu0 0.0
        %257 = vmatpush1.msra.mxu0 0.0
        %258 = vmatprep.subr.mxu0 0.0
        %259 = vmatpush1.msra.mxu0 0.0
        %260 = vmatprep.subr.mxu0 0.0
        %261 = vmatpush1.msra.mxu0 0.0
        %262 = vmatprep.subr.mxu0 0.0
        %263 = vmatpush1.msra.mxu0 0.0
        %264 = vmatprep.subr.mxu0 0.0
        %265 = vmatpush1.msra.mxu0 0.0
        %266 = vmatprep.subr.mxu0 0.0
        %267 = vmatpush1.msra.mxu0 0.0
        %268 = vmatprep.subr.mxu0 0.0
        %269 = vmatpush1.msra.mxu0 0.0
        %270 = vmatprep.subr.mxu0 0.0
        %271 = vmatpush1.msra.mxu0 0.0
        %272 = vmatprep.subr.mxu0 0.0
        %273 = vmatpush1.msra.mxu0 0.0
        %274 = vmatprep.subr.mxu0 0.0
        %275 = vmatpush1.msra.mxu0 0.0
        %276 = vmatprep.subr.mxu0 0.0
        %277 = vmatpush1.msra.mxu0 0.0
        %278 = vmatprep.subr.mxu0 0.0
        %279 = vmatpush1.msra.mxu0 0.0
        %280 = vmatprep.subr.mxu0 0.0
        %281 = vmatpush1.msra.mxu0 0.0
        %282 = vmatprep.subr.mxu0 0.0
        %283 = vmatpush1.msra.mxu0 0.0
        %284 = vmatprep.subr.mxu0 0.0
        %285 = vmatpush1.msra.mxu0 0.0
        %286 = vmatprep.subr.mxu0 0.0
        %287 = vmatpush1.msra.mxu0 0.0
        %288 = vmatprep.subr.mxu0 0.0
        %289 = vmatpush1.msra.mxu0 0.0
        %290 = vmatprep.subr.mxu0 0.0
        %291 = vmatpush1.msra.mxu0 0.0
        %292 = vmatprep.subr.mxu0 0.0
        %293 = vmatpush1.msra.mxu0 0.0
        %294 = vmatprep.subr.mxu0 0.0
        %295 = vmatpush1.msra.mxu0 0.0
        %296 = vmatprep.subr.mxu0 0.0
        %297 = vmatpush1.msra.mxu0 0.0
        %298 = vmatprep.subr.mxu0 0.0
        %299 = vmatpush1.msra.mxu0 0.0
        %300 = vmatprep.subr.mxu0 0.0
        %301 = vmatpush1.msra.mxu0 0.0
        %302 = vmatprep.subr.mxu0 0.0
        %303 = vmatpush1.msra.mxu0 0.0
        %304 = vmatprep.subr.mxu0 0.0
        %305 = vmatpush1.msra.mxu0 0.0
        %306 = vmatprep.mubr.f32.mxu0 0.0
        %307 = vmatmul.mubr.f32.gmra.mrb[0].mxu0 %v240
        %v308 = vpop.f32.mrb[0].mxu0
        %v309 = vadd.f32 0.0, %v308
        %v310 = vpop.f32.mrb[0].mxu0
        %311 = vdwg.mxu0
        %v312 = vadd.f32 %v235, %v309
        %vm313 = vcmask 261120
        %314 = vst.msk [vmem:[#allocation2] sm:$0xff] %vm313, %v312
        %p315 = scmp.eq.s32.totalorder %s24, 3
        // Predicated region
        $region37: #{tsmixer_forward.9} parent=31 // pred_check
          %p316 = pneg %p315
        $region38: #{tsmixer_forward.9} parent=31 // pred_check_branch
          %318 = sbr.rel (%p316) target = $region40
        $region39: #{tsmixer_forward.9} parent=31 // pred_region
          %v319 = vld [vmem:[#allocation2] sm:$0xff]
          %v320 = vld [vmem:[%s2] sm:$0x1]
          %v322 = vlaneseq
          %v323 = vshrl.u32 %v322, 7
          %v324 = vsub.s32 0, %v323
          %v325 = vrot.slane %v320, %v324
          %v327 = vadd.f32 %v319, %v325
          %328 = vst.msk [vmem:[%s213] sm:$0xff] %vm313, %v327
        $region40: #{tsmixer_forward.9} parent=31 // pred_fallthru
          _
        %s329 = sand.u32 %s123, 1
        %s330 = scalar_lea.sflag [#allocation4], %s329
        %s331 = sand.u32 %s123, 1
        %s332 = smul.addr %s331, 8
        %s333 = scalar_lea.vmem [#allocation3], %s332
        // Predicated region
        $region41: #{tsmixer_forward.9} parent=31 // pred_check
          %p334 = pneg %p133
        $region42: #{tsmixer_forward.9} parent=31 // pred_check_branch
          %336 = sbr.rel (%p334) target = $region44
        $region43: #{tsmixer_forward.9} parent=31 // pred_region
          %s338 = ssub.s32 128, 128
          %339 = vsyncadd %s330, %s338
          %s340 = sadd.s32 %s23, %s22
          %s341 = smul.addr %s340, 128
          %s342 = scalar_lea.hbm %s3, %s341
          %s344 = sshll.u32 %s333, 4
          %s345 = int_to_ptr.vmem [resolvable:$true] %s344
          %347 = dma.vmem_to_hbm [thread:$0]  %s345, 128, %s342, %s330
        $region44: #{tsmixer_forward.9} parent=31 // pred_fallthru
          _
      $region32: #{tsmixer_forward.9} parent=5 // pred_fallthru
        _
      %p348 = scmp.le.s32.totalorder 2, %s12
      // Predicated region
      $region45: #{tsmixer_forward.9} parent=5 // pred_check
        %p349 = pneg %p348
      $region46: #{tsmixer_forward.9} parent=5 // pred_check_branch
        %351 = sbr.rel (%p349) target = $region48
      $region47: #{tsmixer_forward.9} parent=5 // pred_region
        %s352 = ssub.s32 %s12, 2
        // Predicated region
        $region49: #{tsmixer_forward.9} parent=47 // pred_check
          %p353 = pneg %p139
        $region50: #{tsmixer_forward.9} parent=47 // pred_check_branch
          %355 = sbr.rel (%p353) target = $region52
        $region51: #{tsmixer_forward.9} parent=47 // pred_region
          %s356 = sand.u32 %s124, 1
          %s357 = scalar_lea.sflag [#allocation4], %s356
          %s358 = sand.u32 %s124, 1
          %s359 = smul.addr %s358, 8
          %s360 = scalar_lea.vmem [#allocation3], %s359
          %361 = dma.done %s357, 128
        $region52: #{tsmixer_forward.9} parent=47 // pred_fallthru
          _
      $region48: #{tsmixer_forward.9} parent=5 // pred_fallthru
        _
    $region6: #{tsmixer_forward.9} parent=1 // loop_footer
      %s16 = sadd.s32 1, %s12
    $region7: #{tsmixer_forward.9} parent=1 // loop_footer_branch
      %11 = sbr.rel target = $region3
    $region8: #{tsmixer_forward.9} parent=1 // loop_exit
      _
    %362 = vsyncpa [#allocation4], 1
    %s363 = scalar_lea.sflag [#allocation4], 1
    %364 = vsyncpa %s363, 1

// kernel: tsmixer_forward.8
$region0: #{tsmixer_forward.8}
  #allocation0 [shape = 'u32[]', space=smem, size = 0x4, offset = 0x4, fixed_abs, tag = 'smem constant byte address 0x4 - core index']
  #allocation1 [shape = 'u32[144,128]{1,0:T(1,128)}', space=vmem, size = 0x12000, scoped, tag = 'internal scratch']
  %s0 = inlined_call_operand.vmem [shape: f32[8,8,8], index: 0, kind: input, shape index: {}]
  %s1 = inlined_call_operand.vmem [shape: f32[8,128,8], index: 1, kind: input, shape index: {}]
  %s2 = inlined_call_operand.vmem [shape: f32[8,128,8], index: 2, kind: input, shape index: {}]
  %s3 = inlined_call_operand.vmem [shape: f32[1,1,128], index: 3, kind: input, shape index: {}]
  %s4 = inlined_call_operand.vmem [shape: f32[8,8,8], index: 4, kind: output, shape index: {0}]
  %s5 = inlined_call_operand.hbm [shape: f32[8,8,128], index: 5, kind: output, shape index: {1}]
  %6 = xla_tuple %s4, %s5
  %s7 = sld [smem:[#allocation0]]
  $region34: #{tsmixer_forward.8} parent=0
    _
  %s9 = ssub.s32 1, %s7
  %s10 = scalar_select 0, %s9, %s7
  $region1: #{tsmixer_forward.8} parent=0
    #allocation2 [shape = 'u8[32768]{0}', space=vmem, size = 0x8000, scoped, tag = 'output window, operand 1, single buffered']
    #allocation3 [shape = 's32[1]{0}', space=sflag, size = 0x4, scoped, tag = 'scoped memory for tsmixer_forward.8']
    %11 = vsyncpa [#allocation3], 0
    // Predicated region
    $region2: #{tsmixer_forward.8} parent=1 // pred_check
      _
    $region3: #{tsmixer_forward.8} parent=1 // pred_check_branch
      %13 = sbr.rel (0) target = $region5
    $region4: #{tsmixer_forward.8} parent=1 // pred_region
      _
    $region5: #{tsmixer_forward.8} parent=1 // pred_fallthru
      _
    // Predicated region
    $region6: #{tsmixer_forward.8} parent=1 // pred_check
      _
    $region7: #{tsmixer_forward.8} parent=1 // pred_check_branch
      %15 = sbr.rel (0) target = $region9
    $region8: #{tsmixer_forward.8} parent=1 // pred_region
      _
    $region9: #{tsmixer_forward.8} parent=1 // pred_fallthru
      _
    // Predicated region
    $region10: #{tsmixer_forward.8} parent=1 // pred_check
      _
    $region11: #{tsmixer_forward.8} parent=1 // pred_check_branch
      %17 = sbr.rel (0) target = $region13
    $region12: #{tsmixer_forward.8} parent=1 // pred_region
      _
    $region13: #{tsmixer_forward.8} parent=1 // pred_fallthru
      _
    // Predicated region
    $region14: #{tsmixer_forward.8} parent=1 // pred_check
      _
    $region15: #{tsmixer_forward.8} parent=1 // pred_check_branch
      %19 = sbr.rel (0) target = $region17
    $region16: #{tsmixer_forward.8} parent=1 // pred_region
      _
    $region17: #{tsmixer_forward.8} parent=1 // pred_fallthru
      _
    %v20 = vld [vmem:[%s0] sm:$0xff]
    %v21 = vld [vmem:[%s0 + $0x8] sm:$0xff]
    %v22 = vld [vmem:[%s0 + $0x10] sm:$0xff]
    %v23 = vld [vmem:[%s0 + $0x18] sm:$0xff]
    %v24 = vld [vmem:[%s0 + $0x20] sm:$0xff]
    %v25 = vld [vmem:[%s0 + $0x28] sm:$0xff]
    %v26 = vld [vmem:[%s0 + $0x30] sm:$0xff]
    %v27 = vld [vmem:[%s0 + $0x38] sm:$0xff]
    %v28 = vld [vmem:[%s1] sm:$0xff]
    %v29 = vld [vmem:[%s1 + $0x8] sm:$0xff]
    %v30 = vld [vmem:[%s1 + $0x10] sm:$0xff]
    %v31 = vld [vmem:[%s1 + $0x18] sm:$0xff]
    %v32 = vld [vmem:[%s1 + $0x20] sm:$0xff]
    %v33 = vld [vmem:[%s1 + $0x28] sm:$0xff]
    %v34 = vld [vmem:[%s1 + $0x30] sm:$0xff]
    %v35 = vld [vmem:[%s1 + $0x38] sm:$0xff]
    %v36 = vld [vmem:[%s1 + $0x40] sm:$0xff]
    %v37 = vld [vmem:[%s1 + $0x48] sm:$0xff]
    %v38 = vld [vmem:[%s1 + $0x50] sm:$0xff]
    %v39 = vld [vmem:[%s1 + $0x58] sm:$0xff]
    %v40 = vld [vmem:[%s1 + $0x60] sm:$0xff]
    %v41 = vld [vmem:[%s1 + $0x68] sm:$0xff]
    %v42 = vld [vmem:[%s1 + $0x70] sm:$0xff]
    %v43 = vld [vmem:[%s1 + $0x78] sm:$0xff]
    %v44 = vld [vmem:[%s1 + $0x80] sm:$0xff]
    %v45 = vld [vmem:[%s1 + $0x88] sm:$0xff]
    %v46 = vld [vmem:[%s1 + $0x90] sm:$0xff]
    %v47 = vld [vmem:[%s1 + $0x98] sm:$0xff]
    %v48 = vld [vmem:[%s1 + $0xa0] sm:$0xff]
    %v49 = vld [vmem:[%s1 + $0xa8] sm:$0xff]
    %v50 = vld [vmem:[%s1 + $0xb0] sm:$0xff]
    %v51 = vld [vmem:[%s1 + $0xb8] sm:$0xff]
    %v52 = vld [vmem:[%s1 + $0xc0] sm:$0xff]
    %v53 = vld [vmem:[%s1 + $0xc8] sm:$0xff]
    %v54 = vld [vmem:[%s1 + $0xd0] sm:$0xff]
    %v55 = vld [vmem:[%s1 + $0xd8] sm:$0xff]
    %v56 = vld [vmem:[%s1 + $0xe0] sm:$0xff]
    %v57 = vld [vmem:[%s1 + $0xe8] sm:$0xff]
    %v58 = vld [vmem:[%s1 + $0xf0] sm:$0xff]
    %v59 = vld [vmem:[%s1 + $0xf8] sm:$0xff]
    %v60 = vld [vmem:[%s1 + $0x100] sm:$0xff]
    %v61 = vld [vmem:[%s1 + $0x108] sm:$0xff]
    %v62 = vld [vmem:[%s1 + $0x110] sm:$0xff]
    %v63 = vld [vmem:[%s1 + $0x118] sm:$0xff]
    %v64 = vld [vmem:[%s1 + $0x120] sm:$0xff]
    %v65 = vld [vmem:[%s1 + $0x128] sm:$0xff]
    %v66 = vld [vmem:[%s1 + $0x130] sm:$0xff]
    %v67 = vld [vmem:[%s1 + $0x138] sm:$0xff]
    %v68 = vld [vmem:[%s1 + $0x140] sm:$0xff]
    %v69 = vld [vmem:[%s1 + $0x148] sm:$0xff]
    %v70 = vld [vmem:[%s1 + $0x150] sm:$0xff]
    %v71 = vld [vmem:[%s1 + $0x158] sm:$0xff]
    %v72 = vld [vmem:[%s1 + $0x160] sm:$0xff]
    %v73 = vld [vmem:[%s1 + $0x168] sm:$0xff]
    %v74 = vld [vmem:[%s1 + $0x170] sm:$0xff]
    %v75 = vld [vmem:[%s1 + $0x178] sm:$0xff]
    %v76 = vld [vmem:[%s1 + $0x180] sm:$0xff]
    %v77 = vld [vmem:[%s1 + $0x188] sm:$0xff]
    %v78 = vld [vmem:[%s1 + $0x190] sm:$0xff]
    %v79 = vld [vmem:[%s1 + $0x198] sm:$0xff]
    %v80 = vld [vmem:[%s1 + $0x1a0] sm:$0xff]
    %v81 = vld [vmem:[%s1 + $0x1a8] sm:$0xff]
    %v82 = vld [vmem:[%s1 + $0x1b0] sm:$0xff]
    %v83 = vld [vmem:[%s1 + $0x1b8] sm:$0xff]
    %v84 = vld [vmem:[%s1 + $0x1c0] sm:$0xff]
    %v85 = vld [vmem:[%s1 + $0x1c8] sm:$0xff]
    %v86 = vld [vmem:[%s1 + $0x1d0] sm:$0xff]
    %v87 = vld [vmem:[%s1 + $0x1d8] sm:$0xff]
    %v88 = vld [vmem:[%s1 + $0x1e0] sm:$0xff]
    %v89 = vld [vmem:[%s1 + $0x1e8] sm:$0xff]
    %v90 = vld [vmem:[%s1 + $0x1f0] sm:$0xff]
    %v91 = vld [vmem:[%s1 + $0x1f8] sm:$0xff]
    %v92 = vld [vmem:[%s1 + $0x200] sm:$0xff]
    %v93 = vld [vmem:[%s1 + $0x208] sm:$0xff]
    %v94 = vld [vmem:[%s1 + $0x210] sm:$0xff]
    %v95 = vld [vmem:[%s1 + $0x218] sm:$0xff]
    %v96 = vld [vmem:[%s1 + $0x220] sm:$0xff]
    %v97 = vld [vmem:[%s1 + $0x228] sm:$0xff]
    %v98 = vld [vmem:[%s1 + $0x230] sm:$0xff]
    %v99 = vld [vmem:[%s1 + $0x238] sm:$0xff]
    %v100 = vld [vmem:[%s1 + $0x240] sm:$0xff]
    %v101 = vld [vmem:[%s1 + $0x248] sm:$0xff]
    %v102 = vld [vmem:[%s1 + $0x250] sm:$0xff]
    %v103 = vld [vmem:[%s1 + $0x258] sm:$0xff]
    %v104 = vld [vmem:[%s1 + $0x260] sm:$0xff]
    %v105 = vld [vmem:[%s1 + $0x268] sm:$0xff]
    %v106 = vld [vmem:[%s1 + $0x270] sm:$0xff]
    %v107 = vld [vmem:[%s1 + $0x278] sm:$0xff]
    %v108 = vld [vmem:[%s1 + $0x280] sm:$0xff]
    %v109 = vld [vmem:[%s1 + $0x288] sm:$0xff]
    %v110 = vld [vmem:[%s1 + $0x290] sm:$0xff]
    %v111 = vld [vmem:[%s1 + $0x298] sm:$0xff]
    %v112 = vld [vmem:[%s1 + $0x2a0] sm:$0xff]
    %v113 = vld [vmem:[%s1 + $0x2a8] sm:$0xff]
    %v114 = vld [vmem:[%s1 + $0x2b0] sm:$0xff]
    %v115 = vld [vmem:[%s1 + $0x2b8] sm:$0xff]
    %v116 = vld [vmem:[%s1 + $0x2c0] sm:$0xff]
    %v117 = vld [vmem:[%s1 + $0x2c8] sm:$0xff]
    %v118 = vld [vmem:[%s1 + $0x2d0] sm:$0xff]
    %v119 = vld [vmem:[%s1 + $0x2d8] sm:$0xff]
    %v120 = vld [vmem:[%s1 + $0x2e0] sm:$0xff]
    %v121 = vld [vmem:[%s1 + $0x2e8] sm:$0xff]
    %v122 = vld [vmem:[%s1 + $0x2f0] sm:$0xff]
    %v123 = vld [vmem:[%s1 + $0x2f8] sm:$0xff]
    %v124 = vld [vmem:[%s1 + $0x300] sm:$0xff]
    %v125 = vld [vmem:[%s1 + $0x308] sm:$0xff]
    %v126 = vld [vmem:[%s1 + $0x310] sm:$0xff]
    %v127 = vld [vmem:[%s1 + $0x318] sm:$0xff]
    %v128 = vld [vmem:[%s1 + $0x320] sm:$0xff]
    %v129 = vld [vmem:[%s1 + $0x328] sm:$0xff]
    %v130 = vld [vmem:[%s1 + $0x330] sm:$0xff]
    %v131 = vld [vmem:[%s1 + $0x338] sm:$0xff]
    %v132 = vld [vmem:[%s1 + $0x340] sm:$0xff]
    %v133 = vld [vmem:[%s1 + $0x348] sm:$0xff]
    %v134 = vld [vmem:[%s1 + $0x350] sm:$0xff]
    %v135 = vld [vmem:[%s1 + $0x358] sm:$0xff]
    %v136 = vld [vmem:[%s1 + $0x360] sm:$0xff]
    %v137 = vld [vmem:[%s1 + $0x368] sm:$0xff]
    %v138 = vld [vmem:[%s1 + $0x370] sm:$0xff]
    %v139 = vld [vmem:[%s1 + $0x378] sm:$0xff]
    %v140 = vld [vmem:[%s1 + $0x380] sm:$0xff]
    %v141 = vld [vmem:[%s1 + $0x388] sm:$0xff]
    %v142 = vld [vmem:[%s1 + $0x390] sm:$0xff]
    %v143 = vld [vmem:[%s1 + $0x398] sm:$0xff]
    %v144 = vld [vmem:[%s1 + $0x3a0] sm:$0xff]
    %v145 = vld [vmem:[%s1 + $0x3a8] sm:$0xff]
    %v146 = vld [vmem:[%s1 + $0x3b0] sm:$0xff]
    %v147 = vld [vmem:[%s1 + $0x3b8] sm:$0xff]
    %v148 = vld [vmem:[%s1 + $0x3c0] sm:$0xff]
    %v149 = vld [vmem:[%s1 + $0x3c8] sm:$0xff]
    %v150 = vld [vmem:[%s1 + $0x3d0] sm:$0xff]
    %v151 = vld [vmem:[%s1 + $0x3d8] sm:$0xff]
    %v152 = vld [vmem:[%s1 + $0x3e0] sm:$0xff]
    %v153 = vld [vmem:[%s1 + $0x3e8] sm:$0xff]
    %v154 = vld [vmem:[%s1 + $0x3f0] sm:$0xff]
    %v155 = vld [vmem:[%s1 + $0x3f8] sm:$0xff]
    %v156 = vld [vmem:[%s3] sm:$0x1]
    %v158 = vlaneseq
    %v159 = vshrl.u32 %v158, 7
    %v160 = vsub.s32 0, %v159
    %v161 = vrot.slane %v156, %v160
    %vm163 = vcmask 64512
    %v165 = vsel %vm163, %v20, 0
    %v168 = vsel %vm163, %v28, 0
    %v171 = vsel %vm163, %v29, 0
    %v174 = vsel %vm163, %v30, 0
    %v177 = vsel %vm163, %v31, 0
    %v180 = vsel %vm163, %v32, 0
    %v183 = vsel %vm163, %v33, 0
    %v186 = vsel %vm163, %v34, 0
    %v189 = vsel %vm163, %v35, 0
    %v192 = vsel %vm163, %v36, 0
    %v195 = vsel %vm163, %v37, 0
    %v198 = vsel %vm163, %v38, 0
    %v201 = vsel %vm163, %v39, 0
    %v204 = vsel %vm163, %v40, 0
    %v207 = vsel %vm163, %v41, 0
    %v210 = vsel %vm163, %v42, 0
    %v213 = vsel %vm163, %v43, 0
    %215 = vmatprep.subr.mxu0 0.0
    %216 = vmatpush1.xpose.msra.mxu0 %v168
    %217 = vmatprep.subr.mxu0 0.0
    %218 = vmatpush1.xpose.msra.mxu0 %v171
    %219 = vmatprep.subr.mxu0 0.0
    %220 = vmatpush1.xpose.msra.mxu0 %v174
    %221 = vmatprep.subr.mxu0 0.0
    %222 = vmatpush1.xpose.msra.mxu0 %v177
    %223 = vmatprep.subr.mxu0 0.0
    %224 = vmatpush1.xpose.msra.mxu0 %v180
    %225 = vmatprep.subr.mxu0 0.0
    %226 = vmatpush1.xpose.msra.mxu0 %v183
    %227 = vmatprep.subr.mxu0 0.0
    %228 = vmatpush1.xpose.msra.mxu0 %v186
    %229 = vmatprep.subr.mxu0 0.0
    %230 = vmatpush1.xpose.msra.mxu0 %v189
    %231 = vmatprep.subr.mxu0 0.0
    %232 = vmatpush1.xpose.msra.mxu0 %v192
    %233 = vmatprep.subr.mxu0 0.0
    %234 = vmatpush1.xpose.msra.mxu0 %v195
    %235 = vmatprep.subr.mxu0 0.0
    %236 = vmatpush1.xpose.msra.mxu0 %v198
    %237 = vmatprep.subr.mxu0 0.0
    %238 = vmatpush1.xpose.msra.mxu0 %v201
    %239 = vmatprep.subr.mxu0 0.0
    %240 = vmatpush1.xpose.msra.mxu0 %v204
    %241 = vmatprep.subr.mxu0 0.0
    %242 = vmatpush1.xpose.msra.mxu0 %v207
    %243 = vmatprep.subr.mxu0 0.0
    %244 = vmatpush1.xpose.msra.mxu0 %v210
    %245 = vmatprep.subr.mxu0 0.0
    %246 = vmatpush1.xpose.msra.mxu0 %v213
    %247 = vmatprep.subr.mxu0 0.0
    %248 = vmatpush1.xpose.msra.mxu0 0.0
    %249 = vmatprep.subr.mxu0 0.0
    %250 = vmatpush1.xpose.msra.mxu0 0.0
    %251 = vmatprep.subr.mxu0 0.0
    %252 = vmatpush1.xpose.msra.mxu0 0.0
    %253 = vmatprep.subr.mxu0 0.0
    %254 = vmatpush1.xpose.msra.mxu0 0.0
    %255 = vmatprep.subr.mxu0 0.0
    %256 = vmatpush1.xpose.msra.mxu0 0.0
    %257 = vmatprep.subr.mxu0 0.0
    %258 = vmatpush1.xpose.msra.mxu0 0.0
    %259 = vmatprep.subr.mxu0 0.0
    %260 = vmatpush1.xpose.msra.mxu0 0.0
    %261 = vmatprep.subr.mxu0 0.0
    %262 = vmatpush1.xpose.msra.mxu0 0.0
    %263 = vmatprep.subr.mxu0 0.0
    %264 = vmatpush1.xpose.msra.mxu0 0.0
    %265 = vmatprep.subr.mxu0 0.0
    %266 = vmatpush1.xpose.msra.mxu0 0.0
    %267 = vmatprep.subr.mxu0 0.0
    %268 = vmatpush1.xpose.msra.mxu0 0.0
    %269 = vmatprep.subr.mxu0 0.0
    %270 = vmatpush1.xpose.msra.mxu0 0.0
    %271 = vmatprep.subr.mxu0 0.0
    %272 = vmatpush1.xpose.msra.mxu0 0.0
    %273 = vmatprep.subr.mxu0 0.0
    %274 = vmatpush1.xpose.msra.mxu0 0.0
    %275 = vmatprep.subr.mxu0 0.0
    %276 = vmatpush1.xpose.msra.mxu0 0.0
    %277 = vmatprep.subr.mxu0 0.0
    %278 = vmatpush1.xpose.msra.mxu0 0.0
    %279 = vmatprep.mubr.f32.mxu0 0.0
    %280 = vmatmul.mubr.f32.gmra.mrb[0].mxu0 %v165
    %v281 = vpop.f32.mrb[0].mxu0
    %v282 = vadd.f32 %v161, %v281
    %v283 = vpop.f32.mrb[0].mxu0
    %284 = vdwg.mxu0
    %v286 = vsel %vm163, %v21, 0
    %v289 = vsel %vm163, %v44, 0
    %v292 = vsel %vm163, %v45, 0
    %v295 = vsel %vm163, %v46, 0
    %v298 = vsel %vm163, %v47, 0
    %v301 = vsel %vm163, %v48, 0
    %v304 = vsel %vm163, %v49, 0
    %v307 = vsel %vm163, %v50, 0
    %v310 = vsel %vm163, %v51, 0
    %v313 = vsel %vm163, %v52, 0
    %v316 = vsel %vm163, %v53, 0
    %v319 = vsel %vm163, %v54, 0
    %v322 = vsel %vm163, %v55, 0
    %v325 = vsel %vm163, %v56, 0
    %v328 = vsel %vm163, %v57, 0
    %v331 = vsel %vm163, %v58, 0
    %v334 = vsel %vm163, %v59, 0
    %336 = vmatprep.subr.mxu0 0.0
    %337 = vmatpush1.xpose.msra.mxu0 %v289
    %338 = vmatprep.subr.mxu0 0.0
    %339 = vmatpush1.xpose.msra.mxu0 %v292
    %340 = vmatprep.subr.mxu0 0.0
    %341 = vmatpush1.xpose.msra.mxu0 %v295
    %342 = vmatprep.subr.mxu0 0.0
    %343 = vmatpush1.xpose.msra.mxu0 %v298
    %344 = vmatprep.subr.mxu0 0.0
    %345 = vmatpush1.xpose.msra.mxu0 %v301
    %346 = vmatprep.subr.mxu0 0.0
    %347 = vmatpush1.xpose.msra.mxu0 %v304
    %348 = vmatprep.subr.mxu0 0.0
    %349 = vmatpush1.xpose.msra.mxu0 %v307
    %350 = vmatprep.subr.mxu0 0.0
    %351 = vmatpush1.xpose.msra.mxu0 %v310
    %352 = vmatprep.subr.mxu0 0.0
    %353 = vmatpush1.xpose.msra.mxu0 %v313
    %354 = vmatprep.subr.mxu0 0.0
    %355 = vmatpush1.xpose.msra.mxu0 %v316
    %356 = vmatprep.subr.mxu0 0.0
    %357 = vmatpush1.xpose.msra.mxu0 %v319
    %358 = vmatprep.subr.mxu0 0.0
    %359 = vmatpush1.xpose.msra.mxu0 %v322
    %360 = vmatprep.subr.mxu0 0.0
    %361 = vmatpush1.xpose.msra.mxu0 %v325
    %362 = vmatprep.subr.mxu0 0.0
    %363 = vmatpush1.xpose.msra.mxu0 %v328
    %364 = vmatprep.subr.mxu0 0.0
    %365 = vmatpush1.xpose.msra.mxu0 %v331
    %366 = vmatprep.subr.mxu0 0.0
    %367 = vmatpush1.xpose.msra.mxu0 %v334
    %368 = vmatprep.subr.mxu0 0.0
    %369 = vmatpush1.xpose.msra.mxu0 0.0
    %370 = vmatprep.subr.mxu0 0.0
    %371 = vmatpush1.xpose.msra.mxu0 0.0
    %372 = vmatprep.subr.mxu0 0.0
    %373 = vmatpush1.xpose.msra.mxu0 0.0
    %374 = vmatprep.subr.mxu0 0.0
    %375 = vmatpush1.xpose.msra.mxu0 0.0
    %376 = vmatprep.subr.mxu0 0.0
    %377 = vmatpush1.xpose.msra.mxu0 0.0
    %378 = vmatprep.subr.mxu0 0.0
    %379 = vmatpush1.xpose.msra.mxu0 0.0
    %380 = vmatprep.subr.mxu0 0.0
    %381 = vmatpush1.xpose.msra.mxu0 0.0
    %382 = vmatprep.subr.mxu0 0.0
    %383 = vmatpush1.xpose.msra.mxu0 0.0
    %384 = vmatprep.subr.mxu0 0.0
    %385 = vmatpush1.xpose.msra.mxu0 0.0
    %386 = vmatprep.subr.mxu0 0.0
    %387 = vmatpush1.xpose.msra.mxu0 0.0
    %388 = vmatprep.subr.mxu0 0.0
    %389 = vmatpush1.xpose.msra.mxu0 0.0
    %390 = vmatprep.subr.mxu0 0.0
    %391 = vmatpush1.xpose.msra.mxu0 0.0
    %392 = vmatprep.subr.mxu0 0.0
    %393 = vmatpush1.xpose.msra.mxu0 0.0
    %394 = vmatprep.subr.mxu0 0.0
    %395 = vmatpush1.xpose.msra.mxu0 0.0
    %396 = vmatprep.subr.mxu0 0.0
    %397 = vmatpush1.xpose.msra.mxu0 0.0
    %398 = vmatprep.subr.mxu0 0.0
    %399 = vmatpush1.xpose.msra.mxu0 0.0
    %400 = vmatprep.mubr.f32.mxu0 0.0
    %401 = vmatmul.mubr.f32.gmra.mrb[0].mxu0 %v286
    %v402 = vpop.f32.mrb[0].mxu0
    %v403 = vadd.f32 %v161, %v402
    %v404 = vpop.f32.mrb[0].mxu0
    %405 = vdwg.mxu0
    %v407 = vsel %vm163, %v22, 0
    %v410 = vsel %vm163, %v60, 0
    %v413 = vsel %vm163, %v61, 0
    %v416 = vsel %vm163, %v62, 0
    %v419 = vsel %vm163, %v63, 0
    %v422 = vsel %vm163, %v64, 0
    %v425 = vsel %vm163, %v65, 0
    %v428 = vsel %vm163, %v66, 0
    %v431 = vsel %vm163, %v67, 0
    %v434 = vsel %vm163, %v68, 0
    %v437 = vsel %vm163, %v69, 0
    %v440 = vsel %vm163, %v70, 0
    %v443 = vsel %vm163, %v71, 0
    %v446 = vsel %vm163, %v72, 0
    %v449 = vsel %vm163, %v73, 0
    %v452 = vsel %vm163, %v74, 0
    %v455 = vsel %vm163, %v75, 0
    %457 = vmatprep.subr.mxu0 0.0
    %458 = vmatpush1.xpose.msra.mxu0 %v410
    %459 = vmatprep.subr.mxu0 0.0
    %460 = vmatpush1.xpose.msra.mxu0 %v413
    %461 = vmatprep.subr.mxu0 0.0
    %462 = vmatpush1.xpose.msra.mxu0 %v416
    %463 = vmatprep.subr.mxu0 0.0
    %464 = vmatpush1.xpose.msra.mxu0 %v419
    %465 = vmatprep.subr.mxu0 0.0
    %466 = vmatpush1.xpose.msra.mxu0 %v422
    %467 = vmatprep.subr.mxu0 0.0
    %468 = vmatpush1.xpose.msra.mxu0 %v425
    %469 = vmatprep.subr.mxu0 0.0
    %470 = vmatpush1.xpose.msra.mxu0 %v428
    %471 = vmatprep.subr.mxu0 0.0
    %472 = vmatpush1.xpose.msra.mxu0 %v431
    %473 = vmatprep.subr.mxu0 0.0
    %474 = vmatpush1.xpose.msra.mxu0 %v434
    %475 = vmatprep.subr.mxu0 0.0
    %476 = vmatpush1.xpose.msra.mxu0 %v437
    %477 = vmatprep.subr.mxu0 0.0
    %478 = vmatpush1.xpose.msra.mxu0 %v440
    %479 = vmatprep.subr.mxu0 0.0
    %480 = vmatpush1.xpose.msra.mxu0 %v443
    %481 = vmatprep.subr.mxu0 0.0
    %482 = vmatpush1.xpose.msra.mxu0 %v446
    %483 = vmatprep.subr.mxu0 0.0
    %484 = vmatpush1.xpose.msra.mxu0 %v449
    %485 = vmatprep.subr.mxu0 0.0
    %486 = vmatpush1.xpose.msra.mxu0 %v452
    %487 = vmatprep.subr.mxu0 0.0
    %488 = vmatpush1.xpose.msra.mxu0 %v455
    %489 = vmatprep.subr.mxu0 0.0
    %490 = vmatpush1.xpose.msra.mxu0 0.0
    %491 = vmatprep.subr.mxu0 0.0
    %492 = vmatpush1.xpose.msra.mxu0 0.0
    %493 = vmatprep.subr.mxu0 0.0
    %494 = vmatpush1.xpose.msra.mxu0 0.0
    %495 = vmatprep.subr.mxu0 0.0
    %496 = vmatpush1.xpose.msra.mxu0 0.0
    %497 = vmatprep.subr.mxu0 0.0
    %498 = vmatpush1.xpose.msra.mxu0 0.0
    %499 = vmatprep.subr.mxu0 0.0
    %500 = vmatpush1.xpose.msra.mxu0 0.0
    %501 = vmatprep.subr.mxu0 0.0
    %502 = vmatpush1.xpose.msra.mxu0 0.0
    %503 = vmatprep.subr.mxu0 0.0
    %504 = vmatpush1.xpose.msra.mxu0 0.0
    %505 = vmatprep.subr.mxu0 0.0
    %506 = vmatpush1.xpose.msra.mxu0 0.0
    %507 = vmatprep.subr.mxu0 0.0
    %508 = vmatpush1.xpose.msra.mxu0 0.0
    %509 = vmatprep.subr.mxu0 0.0
    %510 = vmatpush1.xpose.msra.mxu0 0.0
    %511 = vmatprep.subr.mxu0 0.0
    %512 = vmatpush1.xpose.msra.mxu0 0.0
    %513 = vmatprep.subr.mxu0 0.0
    %514 = vmatpush1.xpose.msra.mxu0 0.0
    %515 = vmatprep.subr.mxu0 0.0
    %516 = vmatpush1.xpose.msra.mxu0 0.0
    %517 = vmatprep.subr.mxu0 0.0
    %518 = vmatpush1.xpose.msra.mxu0 0.0
    %519 = vmatprep.subr.mxu0 0.0
    %520 = vmatpush1.xpose.msra.mxu0 0.0
    %521 = vmatprep.mubr.f32.mxu0 0.0
    %522 = vmatmul.mubr.f32.gmra.mrb[0].mxu0 %v407
    %v523 = vpop.f32.mrb[0].mxu0
    %v524 = vadd.f32 %v161, %v523
    %v525 = vpop.f32.mrb[0].mxu0
    %526 = vdwg.mxu0
    %v528 = vsel %vm163, %v23, 0
    %v531 = vsel %vm163, %v76, 0
    %v534 = vsel %vm163, %v77, 0
    %v537 = vsel %vm163, %v78, 0
    %v540 = vsel %vm163, %v79, 0
    %v543 = vsel %vm163, %v80, 0
    %v546 = vsel %vm163, %v81, 0
    %v549 = vsel %vm163, %v82, 0
    %v552 = vsel %vm163, %v83, 0
    %v555 = vsel %vm163, %v84, 0
    %v558 = vsel %vm163, %v85, 0
    %v561 = vsel %vm163, %v86, 0
    %v564 = vsel %vm163, %v87, 0
    %v567 = vsel %vm163, %v88, 0
    %v570 = vsel %vm163, %v89, 0
    %v573 = vsel %vm163, %v90, 0
    %v576 = vsel %vm163, %v91, 0
    %578 = vmatprep.subr.mxu0 0.0
    %579 = vmatpush1.xpose.msra.mxu0 %v531
    %580 = vmatprep.subr.mxu0 0.0
    %581 = vmatpush1.xpose.msra.mxu0 %v534
    %582 = vmatprep.subr.mxu0 0.0
    %583 = vmatpush1.xpose.msra.mxu0 %v537
    %584 = vmatprep.subr.mxu0 0.0
    %585 = vmatpush1.xpose.msra.mxu0 %v540
    %586 = vmatprep.subr.mxu0 0.0
    %587 = vmatpush1.xpose.msra.mxu0 %v543
    %588 = vmatprep.subr.mxu0 0.0
    %589 = vmatpush1.xpose.msra.mxu0 %v546
    %590 = vmatprep.subr.mxu0 0.0
    %591 = vmatpush1.xpose.msra.mxu0 %v549
    %592 = vmatprep.subr.mxu0 0.0
    %593 = vmatpush1.xpose.msra.mxu0 %v552
    %594 = vmatprep.subr.mxu0 0.0
    %595 = vmatpush1.xpose.msra.mxu0 %v555
    %596 = vmatprep.subr.mxu0 0.0
    %597 = vmatpush1.xpose.msra.mxu0 %v558
    %598 = vmatprep.subr.mxu0 0.0
    %599 = vmatpush1.xpose.msra.mxu0 %v561
    %600 = vmatprep.subr.mxu0 0.0
    %601 = vmatpush1.xpose.msra.mxu0 %v564
    %602 = vmatprep.subr.mxu0 0.0
    %603 = vmatpush1.xpose.msra.mxu0 %v567
    %604 = vmatprep.subr.mxu0 0.0
    %605 = vmatpush1.xpose.msra.mxu0 %v570
    %606 = vmatprep.subr.mxu0 0.0
    %607 = vmatpush1.xpose.msra.mxu0 %v573
    %608 = vmatprep.subr.mxu0 0.0
    %609 = vmatpush1.xpose.msra.mxu0 %v576
    %610 = vmatprep.subr.mxu0 0.0
    %611 = vmatpush1.xpose.msra.mxu0 0.0
    %612 = vmatprep.subr.mxu0 0.0
    %613 = vmatpush1.xpose.msra.mxu0 0.0
    %614 = vmatprep.subr.mxu0 0.0
    %615 = vmatpush1.xpose.msra.mxu0 0.0
    %616 = vmatprep.subr.mxu0 0.0
    %617 = vmatpush1.xpose.msra.mxu0 0.0
    %618 = vmatprep.subr.mxu0 0.0
    %619 = vmatpush1.xpose.msra.mxu0 0.0
    %620 = vmatprep.subr.mxu0 0.0
    %621 = vmatpush1.xpose.msra.mxu0 0.0
    %622 = vmatprep.subr.mxu0 0.0
    %623 = vmatpush1.xpose.msra.mxu0 0.0
    %624 = vmatprep.subr.mxu0 0.0
    %625 = vmatpush1.xpose.msra.mxu0 0.0
    %626 = vmatprep.subr.mxu0 0.0
    %627 = vmatpush1.xpose.msra.mxu0 0.0
    %628 = vmatprep.subr.mxu0 0.0
    %629 = vmatpush1.xpose.msra.mxu0 0.0
    %630 = vmatprep.subr.mxu0 0.0
    %631 = vmatpush1.xpose.msra.mxu0 0.0
    %632 = vmatprep.subr.mxu0 0.0
    %633 = vmatpush1.xpose.msra.mxu0 0.0
    %634 = vmatprep.subr.mxu0 0.0
    %635 = vmatpush1.xpose.msra.mxu0 0.0
    %636 = vmatprep.subr.mxu0 0.0
    %637 = vmatpush1.xpose.msra.mxu0 0.0
    %638 = vmatprep.subr.mxu0 0.0
    %639 = vmatpush1.xpose.msra.mxu0 0.0
    %640 = vmatprep.subr.mxu0 0.0
    %641 = vmatpush1.xpose.msra.mxu0 0.0
    %642 = vmatprep.mubr.f32.mxu0 0.0
    %643 = vmatmul.mubr.f32.gmra.mrb[0].mxu0 %v528
    %v644 = vpop.f32.mrb[0].mxu0
    %v645 = vadd.f32 %v161, %v644
    %v646 = vpop.f32.mrb[0].mxu0
    %647 = vdwg.mxu0
    %v649 = vsel %vm163, %v24, 0
    %v652 = vsel %vm163, %v92, 0
    %v655 = vsel %vm163, %v93, 0
    %v658 = vsel %vm163, %v94, 0
    %v661 = vsel %vm163, %v95, 0
    %v664 = vsel %vm163, %v96, 0
    %v667 = vsel %vm163, %v97, 0
    %v670 = vsel %vm163, %v98, 0
    %v673 = vsel %vm163, %v99, 0
    %v676 = vsel %vm163, %v100, 0
    %v679 = vsel %vm163, %v101, 0
    %v682 = vsel %vm163, %v102, 0
    %v685 = vsel %vm163, %v103, 0
    %v688 = vsel %vm163, %v104, 0
    %v691 = vsel %vm163, %v105, 0
    %v694 = vsel %vm163, %v106, 0
    %v697 = vsel %vm163, %v107, 0
    %699 = vmatprep.subr.mxu0 0.0
    %700 = vmatpush1.xpose.msra.mxu0 %v652
    %701 = vmatprep.subr.mxu0 0.0
    %702 = vmatpush1.xpose.msra.mxu0 %v655
    %703 = vmatprep.subr.mxu0 0.0
    %704 = vmatpush1.xpose.msra.mxu0 %v658
    %705 = vmatprep.subr.mxu0 0.0
    %706 = vmatpush1.xpose.msra.mxu0 %v661
    %707 = vmatprep.subr.mxu0 0.0
    %708 = vmatpush1.xpose.msra.mxu0 %v664
    %709 = vmatprep.subr.mxu0 0.0
    %710 = vmatpush1.xpose.msra.mxu0 %v667
    %711 = vmatprep.subr.mxu0 0.0
    %712 = vmatpush1.xpose.msra.mxu0 %v670
    %713 = vmatprep.subr.mxu0 0.0
    %714 = vmatpush1.xpose.msra.mxu0 %v673
    %715 = vmatprep.subr.mxu0 0.0
    %716 = vmatpush1.xpose.msra.mxu0 %v676
    %717 = vmatprep.subr.mxu0 0.0
    %718 = vmatpush1.xpose.msra.mxu0 %v679
    %719 = vmatprep.subr.mxu0 0.0
    %720 = vmatpush1.xpose.msra.mxu0 %v682
    %721 = vmatprep.subr.mxu0 0.0
    %722 = vmatpush1.xpose.msra.mxu0 %v685
    %723 = vmatprep.subr.mxu0 0.0
    %724 = vmatpush1.xpose.msra.mxu0 %v688
    %725 = vmatprep.subr.mxu0 0.0
    %726 = vmatpush1.xpose.msra.mxu0 %v691
    %727 = vmatprep.subr.mxu0 0.0
    %728 = vmatpush1.xpose.msra.mxu0 %v694
    %729 = vmatprep.subr.mxu0 0.0
    %730 = vmatpush1.xpose.msra.mxu0 %v697
    %731 = vmatprep.subr.mxu0 0.0
    %732 = vmatpush1.xpose.msra.mxu0 0.0
    %733 = vmatprep.subr.mxu0 0.0
    %734 = vmatpush1.xpose.msra.mxu0 0.0
    %735 = vmatprep.subr.mxu0 0.0
    %736 = vmatpush1.xpose.msra.mxu0 0.0
    %737 = vmatprep.subr.mxu0 0.0
    %738 = vmatpush1.xpose.msra.mxu0 0.0
    %739 = vmatprep.subr.mxu0 0.0
    %740 = vmatpush1.xpose.msra.mxu0 0.0
    %741 = vmatprep.subr.mxu0 0.0
    %742 = vmatpush1.xpose.msra.mxu0 0.0
    %743 = vmatprep.subr.mxu0 0.0
    %744 = vmatpush1.xpose.msra.mxu0 0.0
    %745 = vmatprep.subr.mxu0 0.0
    %746 = vmatpush1.xpose.msra.mxu0 0.0
    %747 = vmatprep.subr.mxu0 0.0
    %748 = vmatpush1.xpose.msra.mxu0 0.0
    %749 = vmatprep.subr.mxu0 0.0
    %750 = vmatpush1.xpose.msra.mxu0 0.0
    %751 = vmatprep.subr.mxu0 0.0
    %752 = vmatpush1.xpose.msra.mxu0 0.0
    %753 = vmatprep.subr.mxu0 0.0
    %754 = vmatpush1.xpose.msra.mxu0 0.0
    %755 = vmatprep.subr.mxu0 0.0
    %756 = vmatpush1.xpose.msra.mxu0 0.0
    %757 = vmatprep.subr.mxu0 0.0
    %758 = vmatpush1.xpose.msra.mxu0 0.0
    %759 = vmatprep.subr.mxu0 0.0
    %760 = vmatpush1.xpose.msra.mxu0 0.0
    %761 = vmatprep.subr.mxu0 0.0
    %762 = vmatpush1.xpose.msra.mxu0 0.0
    %763 = vmatprep.mubr.f32.mxu0 0.0
    %764 = vmatmul.mubr.f32.gmra.mrb[0].mxu0 %v649
    %v765 = vpop.f32.mrb[0].mxu0
    %v766 = vadd.f32 %v161, %v765
    %v767 = vpop.f32.mrb[0].mxu0
    %768 = vdwg.mxu0
    %v770 = vsel %vm163, %v25, 0
    %v773 = vsel %vm163, %v108, 0
    %v776 = vsel %vm163, %v109, 0
    %v779 = vsel %vm163, %v110, 0
    %v782 = vsel %vm163, %v111, 0
    %v785 = vsel %vm163, %v112, 0
    %v788 = vsel %vm163, %v113, 0
    %v791 = vsel %vm163, %v114, 0
    %v794 = vsel %vm163, %v115, 0
    %v797 = vsel %vm163, %v116, 0
    %v800 = vsel %vm163, %v117, 0
    %v803 = vsel %vm163, %v118, 0
    %v806 = vsel %vm163, %v119, 0
    %v809 = vsel %vm163, %v120, 0
    %v812 = vsel %vm163, %v121, 0
    %v815 = vsel %vm163, %v122, 0
    %v818 = vsel %vm163, %v123, 0
    %820 = vmatprep.subr.mxu0 0.0
    %821 = vmatpush1.xpose.msra.mxu0 %v773
    %822 = vmatprep.subr.mxu0 0.0
    %823 = vmatpush1.xpose.msra.mxu0 %v776
    %824 = vmatprep.subr.mxu0 0.0
    %825 = vmatpush1.xpose.msra.mxu0 %v779
    %826 = vmatprep.subr.mxu0 0.0
    %827 = vmatpush1.xpose.msra.mxu0 %v782
    %828 = vmatprep.subr.mxu0 0.0
    %829 = vmatpush1.xpose.msra.mxu0 %v785
    %830 = vmatprep.subr.mxu0 0.0
    %831 = vmatpush1.xpose.msra.mxu0 %v788
    %832 = vmatprep.subr.mxu0 0.0
    %833 = vmatpush1.xpose.msra.mxu0 %v791
    %834 = vmatprep.subr.mxu0 0.0
    %835 = vmatpush1.xpose.msra.mxu0 %v794
    %836 = vmatprep.subr.mxu0 0.0
    %837 = vmatpush1.xpose.msra.mxu0 %v797
    %838 = vmatprep.subr.mxu0 0.0
    %839 = vmatpush1.xpose.msra.mxu0 %v800
    %840 = vmatprep.subr.mxu0 0.0
    %841 = vmatpush1.xpose.msra.mxu0 %v803
    %842 = vmatprep.subr.mxu0 0.0
    %843 = vmatpush1.xpose.msra.mxu0 %v806
    %844 = vmatprep.subr.mxu0 0.0
    %845 = vmatpush1.xpose.msra.mxu0 %v809
    %846 = vmatprep.subr.mxu0 0.0
    %847 = vmatpush1.xpose.msra.mxu0 %v812
    %848 = vmatprep.subr.mxu0 0.0
    %849 = vmatpush1.xpose.msra.mxu0 %v815
    %850 = vmatprep.subr.mxu0 0.0
    %851 = vmatpush1.xpose.msra.mxu0 %v818
    %852 = vmatprep.subr.mxu0 0.0
    %853 = vmatpush1.xpose.msra.mxu0 0.0
    %854 = vmatprep.subr.mxu0 0.0
    %855 = vmatpush1.xpose.msra.mxu0 0.0
    %856 = vmatprep.subr.mxu0 0.0
    %857 = vmatpush1.xpose.msra.mxu0 0.0
    %858 = vmatprep.subr.mxu0 0.0
    %859 = vmatpush1.xpose.msra.mxu0 0.0
    %860 = vmatprep.subr.mxu0 0.0
    %861 = vmatpush1.xpose.msra.mxu0 0.0
    %862 = vmatprep.subr.mxu0 0.0
    %863 = vmatpush1.xpose.msra.mxu0 0.0
    %864 = vmatprep.subr.mxu0 0.0
    %865 = vmatpush1.xpose.msra.mxu0 0.0
    %866 = vmatprep.subr.mxu0 0.0
    %867 = vmatpush1.xpose.msra.mxu0 0.0
    %868 = vmatprep.subr.mxu0 0.0
    %869 = vmatpush1.xpose.msra.mxu0 0.0
    %870 = vmatprep.subr.mxu0 0.0
    %871 = vmatpush1.xpose.msra.mxu0 0.0
    %872 = vmatprep.subr.mxu0 0.0
    %873 = vmatpush1.xpose.msra.mxu0 0.0
    %874 = vmatprep.subr.mxu0 0.0
    %875 = vmatpush1.xpose.msra.mxu0 0.0
    %876 = vmatprep.subr.mxu0 0.0
    %877 = vmatpush1.xpose.msra.mxu0 0.0
    %878 = vmatprep.subr.mxu0 0.0
    %879 = vmatpush1.xpose.msra.mxu0 0.0
    %880 = vmatprep.subr.mxu0 0.0
    %881 = vmatpush1.xpose.msra.mxu0 0.0
    %882 = vmatprep.subr.mxu0 0.0
    %883 = vmatpush1.xpose.msra.mxu0 0.0
    %884 = vmatprep.mubr.f32.mxu0 0.0
    %885 = vmatmul.mubr.f32.gmra.mrb[0].mxu0 %v770
    %v886 = vpop.f32.mrb[0].mxu0
    %v887 = vadd.f32 %v161, %v886
    %v888 = vpop.f32.mrb[0].mxu0
    %889 = vdwg.mxu0
    %v891 = vsel %vm163, %v26, 0
    %v894 = vsel %vm163, %v124, 0
    %v897 = vsel %vm163, %v125, 0
    %v900 = vsel %vm163, %v126, 0
    %v903 = vsel %vm163, %v127, 0
    %v906 = vsel %vm163, %v128, 0
    %v909 = vsel %vm163, %v129, 0
    %v912 = vsel %vm163, %v130, 0
    %v915 = vsel %vm163, %v131, 0
    %v918 = vsel %vm163, %v132, 0
    %v921 = vsel %vm163, %v133, 0
    %v924 = vsel %vm163, %v134, 0
    %v927 = vsel %vm163, %v135, 0
    %v930 = vsel %vm163, %v136, 0
    %v933 = vsel %vm163, %v137, 0
    %v936 = vsel %vm163, %v138, 0
    %v939 = vsel %vm163, %v139, 0
    %941 = vmatprep.subr.mxu0 0.0
    %942 = vmatpush1.xpose.msra.mxu0 %v894
    %943 = vmatprep.subr.mxu0 0.0
    %944 = vmatpush1.xpose.msra.mxu0 %v897
    %945 = vmatprep.subr.mxu0 0.0
    %946 = vmatpush1.xpose.msra.mxu0 %v900
    %947 = vmatprep.subr.mxu0 0.0
    %948 = vmatpush1.xpose.msra.mxu0 %v903
    %949 = vmatprep.subr.mxu0 0.0
    %950 = vmatpush1.xpose.msra.mxu0 %v906
    %951 = vmatprep.subr.mxu0 0.0
    %952 = vmatpush1.xpose.msra.mxu0 %v909
    %953 = vmatprep.subr.mxu0 0.0
    %954 = vmatpush1.xpose.msra.mxu0 %v912
    %955 = vmatprep.subr.mxu0 0.0
    %956 = vmatpush1.xpose.msra.mxu0 %v915
    %957 = vmatprep.subr.mxu0 0.0
    %958 = vmatpush1.xpose.msra.mxu0 %v918
    %959 = vmatprep.subr.mxu0 0.0
    %960 = vmatpush1.xpose.msra.mxu0 %v921
    %961 = vmatprep.subr.mxu0 0.0
    %962 = vmatpush1.xpose.msra.mxu0 %v924
    %963 = vmatprep.subr.mxu0 0.0
    %964 = vmatpush1.xpose.msra.mxu0 %v927
    %965 = vmatprep.subr.mxu0 0.0
    %966 = vmatpush1.xpose.msra.mxu0 %v930
    %967 = vmatprep.subr.mxu0 0.0
    %968 = vmatpush1.xpose.msra.mxu0 %v933
    %969 = vmatprep.subr.mxu0 0.0
    %970 = vmatpush1.xpose.msra.mxu0 %v936
    %971 = vmatprep.subr.mxu0 0.0
    %972 = vmatpush1.xpose.msra.mxu0 %v939
    %973 = vmatprep.subr.mxu0 0.0
    %974 = vmatpush1.xpose.msra.mxu0 0.0
    %975 = vmatprep.subr.mxu0 0.0
    %976 = vmatpush1.xpose.msra.mxu0 0.0
    %977 = vmatprep.subr.mxu0 0.0
    %978 = vmatpush1.xpose.msra.mxu0 0.0
    %979 = vmatprep.subr.mxu0 0.0
    %980 = vmatpush1.xpose.msra.mxu0 0.0
    %981 = vmatprep.subr.mxu0 0.0
    %982 = vmatpush1.xpose.msra.mxu0 0.0
    %983 = vmatprep.subr.mxu0 0.0
    %984 = vmatpush1.xpose.msra.mxu0 0.0
    %985 = vmatprep.subr.mxu0 0.0
    %986 = vmatpush1.xpose.msra.mxu0 0.0
    %987 = vmatprep.subr.mxu0 0.0
    %988 = vmatpush1.xpose.msra.mxu0 0.0
    %989 = vmatprep.subr.mxu0 0.0
    %990 = vmatpush1.xpose.msra.mxu0 0.0
    %991 = vmatprep.subr.mxu0 0.0
    %992 = vmatpush1.xpose.msra.mxu0 0.0
    %993 = vmatprep.subr.mxu0 0.0
    %994 = vmatpush1.xpose.msra.mxu0 0.0
    %995 = vmatprep.subr.mxu0 0.0
    %996 = vmatpush1.xpose.msra.mxu0 0.0
    %997 = vmatprep.subr.mxu0 0.0
    %998 = vmatpush1.xpose.msra.mxu0 0.0
    %999 = vmatprep.subr.mxu0 0.0
    %1000 = vmatpush1.xpose.msra.mxu0 0.0
    %1001 = vmatprep.subr.mxu0 0.0
    %1002 = vmatpush1.xpose.msra.mxu0 0.0
    %1003 = vmatprep.subr.mxu0 0.0
    %1004 = vmatpush1.xpose.msra.mxu0 0.0
    %1005 = vmatprep.mubr.f32.mxu0 0.0
    %1006 = vmatmul.mubr.f32.gmra.mrb[0].mxu0 %v891
    %v1007 = vpop.f32.mrb[0].mxu0
    %v1008 = vadd.f32 %v161, %v1007
    %v1009 = vpop.f32.mrb[0].mxu0
    %1010 = vdwg.mxu0
    %v1012 = vsel %vm163, %v27, 0
    %v1015 = vsel %vm163, %v140, 0
    %v1018 = vsel %vm163, %v141, 0
    %v1021 = vsel %vm163, %v142, 0
    %v1024 = vsel %vm163, %v143, 0
    %v1027 = vsel %vm163, %v144, 0
    %v1030 = vsel %vm163, %v145, 0
    %v1033 = vsel %vm163, %v146, 0
    %v1036 = vsel %vm163, %v147, 0
    %v1039 = vsel %vm163, %v148, 0
    %v1042 = vsel %vm163, %v149, 0
    %v1045 = vsel %vm163, %v150, 0
    %v1048 = vsel %vm163, %v151, 0
    %v1051 = vsel %vm163, %v152, 0
    %v1054 = vsel %vm163, %v153, 0
    %v1057 = vsel %vm163, %v154, 0
    %v1060 = vsel %vm163, %v155, 0
    %1062 = vmatprep.subr.mxu0 0.0
    %1063 = vmatpush1.xpose.msra.mxu0 %v1015
    %1064 = vmatprep.subr.mxu0 0.0
    %1065 = vmatpush1.xpose.msra.mxu0 %v1018
    %1066 = vmatprep.subr.mxu0 0.0
    %1067 = vmatpush1.xpose.msra.mxu0 %v1021
    %1068 = vmatprep.subr.mxu0 0.0
    %1069 = vmatpush1.xpose.msra.mxu0 %v1024
    %1070 = vmatprep.subr.mxu0 0.0
    %1071 = vmatpush1.xpose.msra.mxu0 %v1027
    %1072 = vmatprep.subr.mxu0 0.0
    %1073 = vmatpush1.xpose.msra.mxu0 %v1030
    %1074 = vmatprep.subr.mxu0 0.0
    %1075 = vmatpush1.xpose.msra.mxu0 %v1033
    %1076 = vmatprep.subr.mxu0 0.0
    %1077 = vmatpush1.xpose.msra.mxu0 %v1036
    %1078 = vmatprep.subr.mxu0 0.0
    %1079 = vmatpush1.xpose.msra.mxu0 %v1039
    %1080 = vmatprep.subr.mxu0 0.0
    %1081 = vmatpush1.xpose.msra.mxu0 %v1042
    %1082 = vmatprep.subr.mxu0 0.0
    %1083 = vmatpush1.xpose.msra.mxu0 %v1045
    %1084 = vmatprep.subr.mxu0 0.0
    %1085 = vmatpush1.xpose.msra.mxu0 %v1048
    %1086 = vmatprep.subr.mxu0 0.0
    %1087 = vmatpush1.xpose.msra.mxu0 %v1051
    %1088 = vmatprep.subr.mxu0 0.0
    %1089 = vmatpush1.xpose.msra.mxu0 %v1054
    %1090 = vmatprep.subr.mxu0 0.0
    %1091 = vmatpush1.xpose.msra.mxu0 %v1057
    %1092 = vmatprep.subr.mxu0 0.0
    %1093 = vmatpush1.xpose.msra.mxu0 %v1060
    %1094 = vmatprep.subr.mxu0 0.0
    %1095 = vmatpush1.xpose.msra.mxu0 0.0
    %1096 = vmatprep.subr.mxu0 0.0
    %1097 = vmatpush1.xpose.msra.mxu0 0.0
    %1098 = vmatprep.subr.mxu0 0.0
    %1099 = vmatpush1.xpose.msra.mxu0 0.0
    %1100 = vmatprep.subr.mxu0 0.0
    %1101 = vmatpush1.xpose.msra.mxu0 0.0
    %1102 = vmatprep.subr.mxu0 0.0
    %1103 = vmatpush1.xpose.msra.mxu0 0.0
    %1104 = vmatprep.subr.mxu0 0.0
    %1105 = vmatpush1.xpose.msra.mxu0 0.0
    %1106 = vmatprep.subr.mxu0 0.0
    %1107 = vmatpush1.xpose.msra.mxu0 0.0
    %1108 = vmatprep.subr.mxu0 0.0
    %1109 = vmatpush1.xpose.msra.mxu0 0.0
    %1110 = vmatprep.subr.mxu0 0.0
    %1111 = vmatpush1.xpose.msra.mxu0 0.0
    %1112 = vmatprep.subr.mxu0 0.0
    %1113 = vmatpush1.xpose.msra.mxu0 0.0
    %1114 = vmatprep.subr.mxu0 0.0
    %1115 = vmatpush1.xpose.msra.mxu0 0.0
    %1116 = vmatprep.subr.mxu0 0.0
    %1117 = vmatpush1.xpose.msra.mxu0 0.0
    %1118 = vmatprep.subr.mxu0 0.0
    %1119 = vmatpush1.xpose.msra.mxu0 0.0
    %1120 = vmatprep.subr.mxu0 0.0
    %1121 = vmatpush1.xpose.msra.mxu0 0.0
    %1122 = vmatprep.subr.mxu0 0.0
    %1123 = vmatpush1.xpose.msra.mxu0 0.0
    %1124 = vmatprep.subr.mxu0 0.0
    %1125 = vmatpush1.xpose.msra.mxu0 0.0
    %1126 = vmatprep.mubr.f32.mxu0 0.0
    %1127 = vmatmul.mubr.f32.gmra.mrb[0].mxu0 %v1012
    %v1128 = vpop.f32.mrb[0].mxu0
    %v1129 = vadd.f32 %v161, %v1128
    %v1130 = vpop.f32.mrb[0].mxu0
    %1131 = vdwg.mxu0
    %1132 = vmax.xlane.f32.xlu0 %v282
    %v1133 = vpop.xlane.xlu0 %1132
    %1134 = vmax.xlane.f32.xlu0 %v403
    %v1135 = vpop.xlane.xlu0 %1134
    %1136 = vmax.xlane.f32.xlu0 %v524
    %v1137 = vpop.xlane.xlu0 %1136
    %1138 = vmax.xlane.f32.xlu0 %v645
    %v1139 = vpop.xlane.xlu0 %1138
    %1140 = vmax.xlane.f32.xlu0 %v766
    %v1141 = vpop.xlane.xlu0 %1140
    %1142 = vmax.xlane.f32.xlu0 %v887
    %v1143 = vpop.xlane.xlu0 %1142
    %1144 = vmax.xlane.f32.xlu0 %v1008
    %v1145 = vpop.xlane.xlu0 %1144
    %1146 = vmax.xlane.f32.xlu0 %v1129
    %v1147 = vpop.xlane.xlu0 %1146
    %v1148 = vsub.f32 %v282, %v1133
    %v1149 = vsub.f32 %v403, %v1135
    %v1150 = vsub.f32 %v524, %v1137
    %v1151 = vsub.f32 %v645, %v1139
    %v1152 = vsub.f32 %v766, %v1141
    %v1153 = vsub.f32 %v887, %v1143
    %v1154 = vsub.f32 %v1008, %v1145
    %v1155 = vsub.f32 %v1129, %v1147
    %v1156 = vmul.f32 %v1148, 1.442695
    %v1157 = vpow.pop %v1156
    %v1158 = vmul.f32 %v1149, 1.442695
    %v1159 = vpow.pop %v1158
    %v1160 = vmul.f32 %v1150, 1.442695
    %v1161 = vpow.pop %v1160
    %v1162 = vmul.f32 %v1151, 1.442695
    %v1163 = vpow.pop %v1162
    %v1164 = vmul.f32 %v1152, 1.442695
    %v1165 = vpow.pop %v1164
    %v1166 = vmul.f32 %v1153, 1.442695
    %v1167 = vpow.pop %v1166
    %v1168 = vmul.f32 %v1154, 1.442695
    %v1169 = vpow.pop %v1168
    %v1170 = vmul.f32 %v1155, 1.442695
    %v1171 = vpow.pop %v1170
    %1172 = vadd.xlane.f32.xlu0 %v1157
    %v1173 = vpop.xlane.xlu0 %1172
    %1174 = vadd.xlane.f32.xlu0 %v1159
    %v1175 = vpop.xlane.xlu0 %1174
    %1176 = vadd.xlane.f32.xlu0 %v1161
    %v1177 = vpop.xlane.xlu0 %1176
    %1178 = vadd.xlane.f32.xlu0 %v1163
    %v1179 = vpop.xlane.xlu0 %1178
    %1180 = vadd.xlane.f32.xlu0 %v1165
    %v1181 = vpop.xlane.xlu0 %1180
    %1182 = vadd.xlane.f32.xlu0 %v1167
    %v1183 = vpop.xlane.xlu0 %1182
    %1184 = vadd.xlane.f32.xlu0 %v1169
    %v1185 = vpop.xlane.xlu0 %1184
    %1186 = vadd.xlane.f32.xlu0 %v1171
    %v1187 = vpop.xlane.xlu0 %1186
    %v1188 = vrcp.pop %v1173
    %v1189 = vmul.f32 1.0, %v1188
    %v1190 = vrcp.pop %v1175
    %v1191 = vmul.f32 1.0, %v1190
    %v1192 = vrcp.pop %v1177
    %v1193 = vmul.f32 1.0, %v1192
    %v1194 = vrcp.pop %v1179
    %v1195 = vmul.f32 1.0, %v1194
    %v1196 = vrcp.pop %v1181
    %v1197 = vmul.f32 1.0, %v1196
    %v1198 = vrcp.pop %v1183
    %v1199 = vmul.f32 1.0, %v1198
    %v1200 = vrcp.pop %v1185
    %v1201 = vmul.f32 1.0, %v1200
    %v1202 = vrcp.pop %v1187
    %v1203 = vmul.f32 1.0, %v1202
    %v1204 = vmul.f32 %v1157, %v1189
    %v1205 = vmul.f32 %v1159, %v1191
    %v1206 = vmul.f32 %v1161, %v1193
    %v1207 = vmul.f32 %v1163, %v1195
    %v1208 = vmul.f32 %v1165, %v1197
    %v1209 = vmul.f32 %v1167, %v1199
    %v1210 = vmul.f32 %v1169, %v1201
    %v1211 = vmul.f32 %v1171, %v1203
    %v1212 = vld [vmem:[%s2] sm:$0xff]
    %v1213 = vld [vmem:[%s2 + $0x8] sm:$0xff]
    %v1214 = vld [vmem:[%s2 + $0x10] sm:$0xff]
    %v1215 = vld [vmem:[%s2 + $0x18] sm:$0xff]
    %v1216 = vld [vmem:[%s2 + $0x20] sm:$0xff]
    %v1217 = vld [vmem:[%s2 + $0x28] sm:$0xff]
    %v1218 = vld [vmem:[%s2 + $0x30] sm:$0xff]
    %v1219 = vld [vmem:[%s2 + $0x38] sm:$0xff]
    %v1220 = vld [vmem:[%s2 + $0x40] sm:$0xff]
    %v1221 = vld [vmem:[%s2 + $0x48] sm:$0xff]
    %v1222 = vld [vmem:[%s2 + $0x50] sm:$0xff]
    %v1223 = vld [vmem:[%s2 + $0x58] sm:$0xff]
    %v1224 = vld [vmem:[%s2 + $0x60] sm:$0xff]
    %v1225 = vld [vmem:[%s2 + $0x68] sm:$0xff]
    %v1226 = vld [vmem:[%s2 + $0x70] sm:$0xff]
    %v1227 = vld [vmem:[%s2 + $0x78] sm:$0xff]
    %v1228 = vld [vmem:[%s2 + $0x80] sm:$0xff]
    %v1229 = vld [vmem:[%s2 + $0x88] sm:$0xff]
    %v1230 = vld [vmem:[%s2 + $0x90] sm:$0xff]
    %v1231 = vld [vmem:[%s2 + $0x98] sm:$0xff]
    %v1232 = vld [vmem:[%s2 + $0xa0] sm:$0xff]
    %v1233 = vld [vmem:[%s2 + $0xa8] sm:$0xff]
    %v1234 = vld [vmem:[%s2 + $0xb0] sm:$0xff]
    %v1235 = vld [vmem:[%s2 + $0xb8] sm:$0xff]
    %v1236 = vld [vmem:[%s2 + $0xc0] sm:$0xff]
    %v1237 = vld [vmem:[%s2 + $0xc8] sm:$0xff]
    %v1238 = vld [vmem:[%s2 + $0xd0] sm:$0xff]
    %v1239 = vld [vmem:[%s2 + $0xd8] sm:$0xff]
    %v1240 = vld [vmem:[%s2 + $0xe0] sm:$0xff]
    %v1241 = vld [vmem:[%s2 + $0xe8] sm:$0xff]
    %v1242 = vld [vmem:[%s2 + $0xf0] sm:$0xff]
    %v1243 = vld [vmem:[%s2 + $0xf8] sm:$0xff]
    %v1244 = vld [vmem:[%s2 + $0x100] sm:$0xff]
    %v1245 = vld [vmem:[%s2 + $0x108] sm:$0xff]
    %v1246 = vld [vmem:[%s2 + $0x110] sm:$0xff]
    %v1247 = vld [vmem:[%s2 + $0x118] sm:$0xff]
    %v1248 = vld [vmem:[%s2 + $0x120] sm:$0xff]
    %v1249 = vld [vmem:[%s2 + $0x128] sm:$0xff]
    %v1250 = vld [vmem:[%s2 + $0x130] sm:$0xff]
    %v1251 = vld [vmem:[%s2 + $0x138] sm:$0xff]
    %v1252 = vld [vmem:[%s2 + $0x140] sm:$0xff]
    %v1253 = vld [vmem:[%s2 + $0x148] sm:$0xff]
    %v1254 = vld [vmem:[%s2 + $0x150] sm:$0xff]
    %v1255 = vld [vmem:[%s2 + $0x158] sm:$0xff]
    %v1256 = vld [vmem:[%s2 + $0x160] sm:$0xff]
    %v1257 = vld [vmem:[%s2 + $0x168] sm:$0xff]
    %v1258 = vld [vmem:[%s2 + $0x170] sm:$0xff]
    %v1259 = vld [vmem:[%s2 + $0x178] sm:$0xff]
    %v1260 = vld [vmem:[%s2 + $0x180] sm:$0xff]
    %v1261 = vld [vmem:[%s2 + $0x188] sm:$0xff]
    %v1262 = vld [vmem:[%s2 + $0x190] sm:$0xff]
    %v1263 = vld [vmem:[%s2 + $0x198] sm:$0xff]
    %v1264 = vld [vmem:[%s2 + $0x1a0] sm:$0xff]
    %v1265 = vld [vmem:[%s2 + $0x1a8] sm:$0xff]
    %v1266 = vld [vmem:[%s2 + $0x1b0] sm:$0xff]
    %v1267 = vld [vmem:[%s2 + $0x1b8] sm:$0xff]
    %v1268 = vld [vmem:[%s2 + $0x1c0] sm:$0xff]
    %v1269 = vld [vmem:[%s2 + $0x1c8] sm:$0xff]
    %v1270 = vld [vmem:[%s2 + $0x1d0] sm:$0xff]
    %v1271 = vld [vmem:[%s2 + $0x1d8] sm:$0xff]
    %v1272 = vld [vmem:[%s2 + $0x1e0] sm:$0xff]
    %v1273 = vld [vmem:[%s2 + $0x1e8] sm:$0xff]
    %v1274 = vld [vmem:[%s2 + $0x1f0] sm:$0xff]
    %v1275 = vld [vmem:[%s2 + $0x1f8] sm:$0xff]
    %v1276 = vld [vmem:[%s2 + $0x200] sm:$0xff]
    %v1277 = vld [vmem:[%s2 + $0x208] sm:$0xff]
    %v1278 = vld [vmem:[%s2 + $0x210] sm:$0xff]
    %v1279 = vld [vmem:[%s2 + $0x218] sm:$0xff]
    %v1280 = vld [vmem:[%s2 + $0x220] sm:$0xff]
    %v1281 = vld [vmem:[%s2 + $0x228] sm:$0xff]
    %v1282 = vld [vmem:[%s2 + $0x230] sm:$0xff]
    %v1283 = vld [vmem:[%s2 + $0x238] sm:$0xff]
    %v1284 = vld [vmem:[%s2 + $0x240] sm:$0xff]
    %v1285 = vld [vmem:[%s2 + $0x248] sm:$0xff]
    %v1286 = vld [vmem:[%s2 + $0x250] sm:$0xff]
    %v1287 = vld [vmem:[%s2 + $0x258] sm:$0xff]
    %v1288 = vld [vmem:[%s2 + $0x260] sm:$0xff]
    %v1289 = vld [vmem:[%s2 + $0x268] sm:$0xff]
    %v1290 = vld [vmem:[%s2 + $0x270] sm:$0xff]
    %v1291 = vld [vmem:[%s2 + $0x278] sm:$0xff]
    %v1292 = vld [vmem:[%s2 + $0x280] sm:$0xff]
    %v1293 = vld [vmem:[%s2 + $0x288] sm:$0xff]
    %v1294 = vld [vmem:[%s2 + $0x290] sm:$0xff]
    %v1295 = vld [vmem:[%s2 + $0x298] sm:$0xff]
    %v1296 = vld [vmem:[%s2 + $0x2a0] sm:$0xff]
    %v1297 = vld [vmem:[%s2 + $0x2a8] sm:$0xff]
    %v1298 = vld [vmem:[%s2 + $0x2b0] sm:$0xff]
    %v1299 = vld [vmem:[%s2 + $0x2b8] sm:$0xff]
    %v1300 = vld [vmem:[%s2 + $0x2c0] sm:$0xff]
    %v1301 = vld [vmem:[%s2 + $0x2c8] sm:$0xff]
    %v1302 = vld [vmem:[%s2 + $0x2d0] sm:$0xff]
    %v1303 = vld [vmem:[%s2 + $0x2d8] sm:$0xff]
    %v1304 = vld [vmem:[%s2 + $0x2e0] sm:$0xff]
    %v1305 = vld [vmem:[%s2 + $0x2e8] sm:$0xff]
    %v1306 = vld [vmem:[%s2 + $0x2f0] sm:$0xff]
    %v1307 = vld [vmem:[%s2 + $0x2f8] sm:$0xff]
    %v1308 = vld [vmem:[%s2 + $0x300] sm:$0xff]
    %v1309 = vld [vmem:[%s2 + $0x308] sm:$0xff]
    %v1310 = vld [vmem:[%s2 + $0x310] sm:$0xff]
    %v1311 = vld [vmem:[%s2 + $0x318] sm:$0xff]
    %v1312 = vld [vmem:[%s2 + $0x320] sm:$0xff]
    %v1313 = vld [vmem:[%s2 + $0x328] sm:$0xff]
    %v1314 = vld [vmem:[%s2 + $0x330] sm:$0xff]
    %v1315 = vld [vmem:[%s2 + $0x338] sm:$0xff]
    %v1316 = vld [vmem:[%s2 + $0x340] sm:$0xff]
    %v1317 = vld [vmem:[%s2 + $0x348] sm:$0xff]
    %v1318 = vld [vmem:[%s2 + $0x350] sm:$0xff]
    %v1319 = vld [vmem:[%s2 + $0x358] sm:$0xff]
    %v1320 = vld [vmem:[%s2 + $0x360] sm:$0xff]
    %v1321 = vld [vmem:[%s2 + $0x368] sm:$0xff]
    %v1322 = vld [vmem:[%s2 + $0x370] sm:$0xff]
    %v1323 = vld [vmem:[%s2 + $0x378] sm:$0xff]
    %v1324 = vld [vmem:[%s2 + $0x380] sm:$0xff]
    %v1325 = vld [vmem:[%s2 + $0x388] sm:$0xff]
    %v1326 = vld [vmem:[%s2 + $0x390] sm:$0xff]
    %v1327 = vld [vmem:[%s2 + $0x398] sm:$0xff]
    %v1328 = vld [vmem:[%s2 + $0x3a0] sm:$0xff]
    %v1329 = vld [vmem:[%s2 + $0x3a8] sm:$0xff]
    %v1330 = vld [vmem:[%s2 + $0x3b0] sm:$0xff]
    %v1331 = vld [vmem:[%s2 + $0x3b8] sm:$0xff]
    %v1332 = vld [vmem:[%s2 + $0x3c0] sm:$0xff]
    %v1333 = vld [vmem:[%s2 + $0x3c8] sm:$0xff]
    %v1334 = vld [vmem:[%s2 + $0x3d0] sm:$0xff]
    %v1335 = vld [vmem:[%s2 + $0x3d8] sm:$0xff]
    %v1336 = vld [vmem:[%s2 + $0x3e0] sm:$0xff]
    %v1337 = vld [vmem:[%s2 + $0x3e8] sm:$0xff]
    %v1338 = vld [vmem:[%s2 + $0x3f0] sm:$0xff]
    %v1339 = vld [vmem:[%s2 + $0x3f8] sm:$0xff]
    %1340 = vmatprep.subr.mxu0 0.0
    %1341 = vmatpush1.msra.mxu0 %v1212
    %1342 = vmatprep.subr.mxu0 0.0
    %1343 = vmatpush1.msra.mxu0 %v1213
    %1344 = vmatprep.subr.mxu0 0.0
    %1345 = vmatpush1.msra.mxu0 %v1214
    %1346 = vmatprep.subr.mxu0 0.0
    %1347 = vmatpush1.msra.mxu0 %v1215
    %1348 = vmatprep.subr.mxu0 0.0
    %1349 = vmatpush1.msra.mxu0 %v1216
    %1350 = vmatprep.subr.mxu0 0.0
    %1351 = vmatpush1.msra.mxu0 %v1217
    %1352 = vmatprep.subr.mxu0 0.0
    %1353 = vmatpush1.msra.mxu0 %v1218
    %1354 = vmatprep.subr.mxu0 0.0
    %1355 = vmatpush1.msra.mxu0 %v1219
    %1356 = vmatprep.subr.mxu0 0.0
    %1357 = vmatpush1.msra.mxu0 %v1220
    %1358 = vmatprep.subr.mxu0 0.0
    %1359 = vmatpush1.msra.mxu0 %v1221
    %1360 = vmatprep.subr.mxu0 0.0
    %1361 = vmatpush1.msra.mxu0 %v1222
    %1362 = vmatprep.subr.mxu0 0.0
    %1363 = vmatpush1.msra.mxu0 %v1223
    %1364 = vmatprep.subr.mxu0 0.0
    %1365 = vmatpush1.msra.mxu0 %v1224
    %1366 = vmatprep.subr.mxu0 0.0
    %1367 = vmatpush1.msra.mxu0 %v1225
    %1368 = vmatprep.subr.mxu0 0.0
    %1369 = vmatpush1.msra.mxu0 %v1226
    %1370 = vmatprep.subr.mxu0 0.0
    %1371 = vmatpush1.msra.mxu0 %v1227
    %1372 = vmatprep.subr.mxu0 0.0
    %1373 = vmatpush1.msra.mxu0 0.0
    %1374 = vmatprep.subr.mxu0 0.0
    %1375 = vmatpush1.msra.mxu0 0.0
    %1376 = vmatprep.subr.mxu0 0.0
    %1377 = vmatpush1.msra.mxu0 0.0
    %1378 = vmatprep.subr.mxu0 0.0
    %1379 = vmatpush1.msra.mxu0 0.0
    %1380 = vmatprep.subr.mxu0 0.0
    %1381 = vmatpush1.msra.mxu0 0.0
    %1382 = vmatprep.subr.mxu0 0.0
    %1383 = vmatpush1.msra.mxu0 0.0
    %1384 = vmatprep.subr.mxu0 0.0
    %1385 = vmatpush1.msra.mxu0 0.0
    %1386 = vmatprep.subr.mxu0 0.0
    %1387 = vmatpush1.msra.mxu0 0.0
    %1388 = vmatprep.subr.mxu0 0.0
    %1389 = vmatpush1.msra.mxu0 0.0
    %1390 = vmatprep.subr.mxu0 0.0
    %1391 = vmatpush1.msra.mxu0 0.0
    %1392 = vmatprep.subr.mxu0 0.0
    %1393 = vmatpush1.msra.mxu0 0.0
    %1394 = vmatprep.subr.mxu0 0.0
    %1395 = vmatpush1.msra.mxu0 0.0
    %1396 = vmatprep.subr.mxu0 0.0
    %1397 = vmatpush1.msra.mxu0 0.0
    %1398 = vmatprep.subr.mxu0 0.0
    %1399 = vmatpush1.msra.mxu0 0.0
    %1400 = vmatprep.subr.mxu0 0.0
    %1401 = vmatpush1.msra.mxu0 0.0
    %1402 = vmatprep.subr.mxu0 0.0
    %1403 = vmatpush1.msra.mxu0 0.0
    %1404 = vmatprep.mubr.f32.mxu0 0.0
    %1405 = vmatmul.mubr.f32.gmra.mrb[0].mxu0 %v1204
    %v1406 = vpop.f32.mrb[0].mxu0
    %v1407 = vadd.f32 0.0, %v1406
    %v1408 = vpop.f32.mrb[0].mxu0
    %1409 = vdwg.mxu0
    %1410 = vmatprep.subr.mxu0 0.0
    %1411 = vmatpush1.msra.mxu0 %v1228
    %1412 = vmatprep.subr.mxu0 0.0
    %1413 = vmatpush1.msra.mxu0 %v1229
    %1414 = vmatprep.subr.mxu0 0.0
    %1415 = vmatpush1.msra.mxu0 %v1230
    %1416 = vmatprep.subr.mxu0 0.0
    %1417 = vmatpush1.msra.mxu0 %v1231
    %1418 = vmatprep.subr.mxu0 0.0
    %1419 = vmatpush1.msra.mxu0 %v1232
    %1420 = vmatprep.subr.mxu0 0.0
    %1421 = vmatpush1.msra.mxu0 %v1233
    %1422 = vmatprep.subr.mxu0 0.0
    %1423 = vmatpush1.msra.mxu0 %v1234
    %1424 = vmatprep.subr.mxu0 0.0
    %1425 = vmatpush1.msra.mxu0 %v1235
    %1426 = vmatprep.subr.mxu0 0.0
    %1427 = vmatpush1.msra.mxu0 %v1236
    %1428 = vmatprep.subr.mxu0 0.0
    %1429 = vmatpush1.msra.mxu0 %v1237
    %1430 = vmatprep.subr.mxu0 0.0
    %1431 = vmatpush1.msra.mxu0 %v1238
    %1432 = vmatprep.subr.mxu0 0.0
    %1433 = vmatpush1.msra.mxu0 %v1239
    %1434 = vmatprep.subr.mxu0 0.0
    %1435 = vmatpush1.msra.mxu0 %v1240
    %1436 = vmatprep.subr.mxu0 0.0
    %1437 = vmatpush1.msra.mxu0 %v1241
    %1438 = vmatprep.subr.mxu0 0.0
    %1439 = vmatpush1.msra.mxu0 %v1242
    %1440 = vmatprep.subr.mxu0 0.0
    %1441 = vmatpush1.msra.mxu0 %v1243
    %1442 = vmatprep.subr.mxu0 0.0
    %1443 = vmatpush1.msra.mxu0 0.0
    %1444 = vmatprep.subr.mxu0 0.0
    %1445 = vmatpush1.msra.mxu0 0.0
    %1446 = vmatprep.subr.mxu0 0.0
    %1447 = vmatpush1.msra.mxu0 0.0
    %1448 = vmatprep.subr.mxu0 0.0
    %1449 = vmatpush1.msra.mxu0 0.0
    %1450 = vmatprep.subr.mxu0 0.0
    %1451 = vmatpush1.msra.mxu0 0.0
    %1452 = vmatprep.subr.mxu0 0.0
    %1453 = vmatpush1.msra.mxu0 0.0
    %1454 = vmatprep.subr.mxu0 0.0
    %1455 = vmatpush1.msra.mxu0 0.0
    %1456 = vmatprep.subr.mxu0 0.0
    %1457 = vmatpush1.msra.mxu0 0.0
    %1458 = vmatprep.subr.mxu0 0.0
    %1459 = vmatpush1.msra.mxu0 0.0
    %1460 = vmatprep.subr.mxu0 0.0
    %1461 = vmatpush1.msra.mxu0 0.0
    %1462 = vmatprep.subr.mxu0 0.0
    %1463 = vmatpush1.msra.mxu0 0.0
    %1464 = vmatprep.subr.mxu0 0.0
    %1465 = vmatpush1.msra.mxu0 0.0
    %1466 = vmatprep.subr.mxu0 0.0
    %1467 = vmatpush1.msra.mxu0 0.0
    %1468 = vmatprep.subr.mxu0 0.0
    %1469 = vmatpush1.msra.mxu0 0.0
    %1470 = vmatprep.subr.mxu0 0.0
    %1471 = vmatpush1.msra.mxu0 0.0
    %1472 = vmatprep.subr.mxu0 0.0
    %1473 = vmatpush1.msra.mxu0 0.0
    %1474 = vmatprep.mubr.f32.mxu0 0.0
    %1475 = vmatmul.mubr.f32.gmra.mrb[0].mxu0 %v1205
    %v1476 = vpop.f32.mrb[0].mxu0
    %v1477 = vadd.f32 0.0, %v1476
    %v1478 = vpop.f32.mrb[0].mxu0
    %1479 = vdwg.mxu0
    %1480 = vmatprep.subr.mxu0 0.0
    %1481 = vmatpush1.msra.mxu0 %v1244
    %1482 = vmatprep.subr.mxu0 0.0
    %1483 = vmatpush1.msra.mxu0 %v1245
    %1484 = vmatprep.subr.mxu0 0.0
    %1485 = vmatpush1.msra.mxu0 %v1246
    %1486 = vmatprep.subr.mxu0 0.0
    %1487 = vmatpush1.msra.mxu0 %v1247
    %1488 = vmatprep.subr.mxu0 0.0
    %1489 = vmatpush1.msra.mxu0 %v1248
    %1490 = vmatprep.subr.mxu0 0.0
    %1491 = vmatpush1.msra.mxu0 %v1249
    %1492 = vmatprep.subr.mxu0 0.0
    %1493 = vmatpush1.msra.mxu0 %v1250
    %1494 = vmatprep.subr.mxu0 0.0
    %1495 = vmatpush1.msra.mxu0 %v1251
    %1496 = vmatprep.subr.mxu0 0.0
    %1497 = vmatpush1.msra.mxu0 %v1252
    %1498 = vmatprep.subr.mxu0 0.0
    %1499 = vmatpush1.msra.mxu0 %v1253
    %1500 = vmatprep.subr.mxu0 0.0
    %1501 = vmatpush1.msra.mxu0 %v1254
    %1502 = vmatprep.subr.mxu0 0.0
    %1503 = vmatpush1.msra.mxu0 %v1255
    %1504 = vmatprep.subr.mxu0 0.0
    %1505 = vmatpush1.msra.mxu0 %v1256
    %1506 = vmatprep.subr.mxu0 0.0
    %1507 = vmatpush1.msra.mxu0 %v1257
    %1508 = vmatprep.subr.mxu0 0.0
    %1509 = vmatpush1.msra.mxu0 %v1258
    %1510 = vmatprep.subr.mxu0 0.0
    %1511 = vmatpush1.msra.mxu0 %v1259
    %1512 = vmatprep.subr.mxu0 0.0
    %1513 = vmatpush1.msra.mxu0 0.0
    %1514 = vmatprep.subr.mxu0 0.0
    %1515 = vmatpush1.msra.mxu0 0.0
    %1516 = vmatprep.subr.mxu0 0.0
    %1517 = vmatpush1.msra.mxu0 0.0
    %1518 = vmatprep.subr.mxu0 0.0
    %1519 = vmatpush1.msra.mxu0 0.0
    %1520 = vmatprep.subr.mxu0 0.0
    %1521 = vmatpush1.msra.mxu0 0.0
    %1522 = vmatprep.subr.mxu0 0.0
    %1523 = vmatpush1.msra.mxu0 0.0
    %1524 = vmatprep.subr.mxu0 0.0
    %1525 = vmatpush1.msra.mxu0 0.0
    %1526 = vmatprep.subr.mxu0 0.0
    %1527 = vmatpush1.msra.mxu0 0.0
    %1528 = vmatprep.subr.mxu0 0.0
    %1529 = vmatpush1.msra.mxu0 0.0
    %1530 = vmatprep.subr.mxu0 0.0
    %1531 = vmatpush1.msra.mxu0 0.0
    %1532 = vmatprep.subr.mxu0 0.0
    %1533 = vmatpush1.msra.mxu0 0.0
    %1534 = vmatprep.subr.mxu0 0.0
    %1535 = vmatpush1.msra.mxu0 0.0
    %1536 = vmatprep.subr.mxu0 0.0
    %1537 = vmatpush1.msra.mxu0 0.0
    %1538 = vmatprep.subr.mxu0 0.0
    %1539 = vmatpush1.msra.mxu0 0.0
    %1540 = vmatprep.subr.mxu0 0.0
    %1541 = vmatpush1.msra.mxu0 0.0
    %1542 = vmatprep.subr.mxu0 0.0
    %1543 = vmatpush1.msra.mxu0 0.0
    %1544 = vmatprep.mubr.f32.mxu0 0.0
    %1545 = vmatmul.mubr.f32.gmra.mrb[0].mxu0 %v1206
    %v1546 = vpop.f32.mrb[0].mxu0
    %v1547 = vadd.f32 0.0, %v1546
    %v1548 = vpop.f32.mrb[0].mxu0
    %1549 = vdwg.mxu0
    %1550 = vmatprep.subr.mxu0 0.0
    %1551 = vmatpush1.msra.mxu0 %v1260
    %1552 = vmatprep.subr.mxu0 0.0
    %1553 = vmatpush1.msra.mxu0 %v1261
    %1554 = vmatprep.subr.mxu0 0.0
    %1555 = vmatpush1.msra.mxu0 %v1262
    %1556 = vmatprep.subr.mxu0 0.0
    %1557 = vmatpush1.msra.mxu0 %v1263
    %1558 = vmatprep.subr.mxu0 0.0
    %1559 = vmatpush1.msra.mxu0 %v1264
    %1560 = vmatprep.subr.mxu0 0.0
    %1561 = vmatpush1.msra.mxu0 %v1265
    %1562 = vmatprep.subr.mxu0 0.0
    %1563 = vmatpush1.msra.mxu0 %v1266
    %1564 = vmatprep.subr.mxu0 0.0
    %1565 = vmatpush1.msra.mxu0 %v1267
    %1566 = vmatprep.subr.mxu0 0.0
    %1567 = vmatpush1.msra.mxu0 %v1268
    %1568 = vmatprep.subr.mxu0 0.0
    %1569 = vmatpush1.msra.mxu0 %v1269
    %1570 = vmatprep.subr.mxu0 0.0
    %1571 = vmatpush1.msra.mxu0 %v1270
    %1572 = vmatprep.subr.mxu0 0.0
    %1573 = vmatpush1.msra.mxu0 %v1271
    %1574 = vmatprep.subr.mxu0 0.0
    %1575 = vmatpush1.msra.mxu0 %v1272
    %1576 = vmatprep.subr.mxu0 0.0
    %1577 = vmatpush1.msra.mxu0 %v1273
    %1578 = vmatprep.subr.mxu0 0.0
    %1579 = vmatpush1.msra.mxu0 %v1274
    %1580 = vmatprep.subr.mxu0 0.0
    %1581 = vmatpush1.msra.mxu0 %v1275
    %1582 = vmatprep.subr.mxu0 0.0
    %1583 = vmatpush1.msra.mxu0 0.0
    %1584 = vmatprep.subr.mxu0 0.0
    %1585 = vmatpush1.msra.mxu0 0.0
    %1586 = vmatprep.subr.mxu0 0.0
    %1587 = vmatpush1.msra.mxu0 0.0
    %1588 = vmatprep.subr.mxu0 0.0
    %1589 = vmatpush1.msra.mxu0 0.0
    %1590 = vmatprep.subr.mxu0 0.0
    %1591 = vmatpush1.msra.mxu0 0.0
    %1592 = vmatprep.subr.mxu0 0.0
    %1593 = vmatpush1.msra.mxu0 0.0
    %1594 = vmatprep.subr.mxu0 0.0
    %1595 = vmatpush1.msra.mxu0 0.0
    %1596 = vmatprep.subr.mxu0 0.0
    %1597 = vmatpush1.msra.mxu0 0.0
    %1598 = vmatprep.subr.mxu0 0.0
    %1599 = vmatpush1.msra.mxu0 0.0
    %1600 = vmatprep.subr.mxu0 0.0
    %1601 = vmatpush1.msra.mxu0 0.0
    %1602 = vmatprep.subr.mxu0 0.0
    %1603 = vmatpush1.msra.mxu0 0.0
    %1604 = vmatprep.subr.mxu0 0.0
    %1605 = vmatpush1.msra.mxu0 0.0
    %1606 = vmatprep.subr.mxu0 0.0
    %1607 = vmatpush1.msra.mxu0 0.0
    %1608 = vmatprep.subr.mxu0 0.0
    %1609 = vmatpush1.msra.mxu0 0.0
    %1610 = vmatprep.subr.mxu0 0.0
    %1611 = vmatpush1.msra.mxu0 0.0
    %1612 = vmatprep.subr.mxu0 0.0
    %1613 = vmatpush1.msra.mxu0 0.0
    %1614 = vmatprep.mubr.f32.mxu0 0.0
    %1615 = vmatmul.mubr.f32.gmra.mrb[0].mxu0 %v1207
    %v1616 = vpop.f32.mrb[0].mxu0
    %v1617 = vadd.f32 0.0, %v1616
    %v1618 = vpop.f32.mrb[0].mxu0
    %1619 = vdwg.mxu0
    %1620 = vmatprep.subr.mxu0 0.0
    %1621 = vmatpush1.msra.mxu0 %v1276
    %1622 = vmatprep.subr.mxu0 0.0
    %1623 = vmatpush1.msra.mxu0 %v1277
    %1624 = vmatprep.subr.mxu0 0.0
    %1625 = vmatpush1.msra.mxu0 %v1278
    %1626 = vmatprep.subr.mxu0 0.0
    %1627 = vmatpush1.msra.mxu0 %v1279
    %1628 = vmatprep.subr.mxu0 0.0
    %1629 = vmatpush1.msra.mxu0 %v1280
    %1630 = vmatprep.subr.mxu0 0.0
    %1631 = vmatpush1.msra.mxu0 %v1281
    %1632 = vmatprep.subr.mxu0 0.0
    %1633 = vmatpush1.msra.mxu0 %v1282
    %1634 = vmatprep.subr.mxu0 0.0
    %1635 = vmatpush1.msra.mxu0 %v1283
    %1636 = vmatprep.subr.mxu0 0.0
    %1637 = vmatpush1.msra.mxu0 %v1284
    %1638 = vmatprep.subr.mxu0 0.0
    %1639 = vmatpush1.msra.mxu0 %v1285
    %1640 = vmatprep.subr.mxu0 0.0
    %1641 = vmatpush1.msra.mxu0 %v1286
    %1642 = vmatprep.subr.mxu0 0.0
    %1643 = vmatpush1.msra.mxu0 %v1287
    %1644 = vmatprep.subr.mxu0 0.0
    %1645 = vmatpush1.msra.mxu0 %v1288
    %1646 = vmatprep.subr.mxu0 0.0
    %1647 = vmatpush1.msra.mxu0 %v1289
    %1648 = vmatprep.subr.mxu0 0.0
    %1649 = vmatpush1.msra.mxu0 %v1290
    %1650 = vmatprep.subr.mxu0 0.0
    %1651 = vmatpush1.msra.mxu0 %v1291
    %1652 = vmatprep.subr.mxu0 0.0
    %1653 = vmatpush1.msra.mxu0 0.0
    %1654 = vmatprep.subr.mxu0 0.0
    %1655 = vmatpush1.msra.mxu0 0.0
    %1656 = vmatprep.subr.mxu0 0.0
    %1657 = vmatpush1.msra.mxu0 0.0
    %1658 = vmatprep.subr.mxu0 0.0
    %1659 = vmatpush1.msra.mxu0 0.0
    %1660 = vmatprep.subr.mxu0 0.0
    %1661 = vmatpush1.msra.mxu0 0.0
    %1662 = vmatprep.subr.mxu0 0.0
    %1663 = vmatpush1.msra.mxu0 0.0
    %1664 = vmatprep.subr.mxu0 0.0
    %1665 = vmatpush1.msra.mxu0 0.0
    %1666 = vmatprep.subr.mxu0 0.0
    %1667 = vmatpush1.msra.mxu0 0.0
    %1668 = vmatprep.subr.mxu0 0.0
    %1669 = vmatpush1.msra.mxu0 0.0
    %1670 = vmatprep.subr.mxu0 0.0
    %1671 = vmatpush1.msra.mxu0 0.0
    %1672 = vmatprep.subr.mxu0 0.0
    %1673 = vmatpush1.msra.mxu0 0.0
    %1674 = vmatprep.subr.mxu0 0.0
    %1675 = vmatpush1.msra.mxu0 0.0
    %1676 = vmatprep.subr.mxu0 0.0
    %1677 = vmatpush1.msra.mxu0 0.0
    %1678 = vmatprep.subr.mxu0 0.0
    %1679 = vmatpush1.msra.mxu0 0.0
    %1680 = vmatprep.subr.mxu0 0.0
    %1681 = vmatpush1.msra.mxu0 0.0
    %1682 = vmatprep.subr.mxu0 0.0
    %1683 = vmatpush1.msra.mxu0 0.0
    %1684 = vmatprep.mubr.f32.mxu0 0.0
    %1685 = vmatmul.mubr.f32.gmra.mrb[0].mxu0 %v1208
    %v1686 = vpop.f32.mrb[0].mxu0
    %v1687 = vadd.f32 0.0, %v1686
    %v1688 = vpop.f32.mrb[0].mxu0
    %1689 = vdwg.mxu0
    %1690 = vmatprep.subr.mxu0 0.0
    %1691 = vmatpush1.msra.mxu0 %v1292
    %1692 = vmatprep.subr.mxu0 0.0
    %1693 = vmatpush1.msra.mxu0 %v1293
    %1694 = vmatprep.subr.mxu0 0.0
    %1695 = vmatpush1.msra.mxu0 %v1294
    %1696 = vmatprep.subr.mxu0 0.0
    %1697 = vmatpush1.msra.mxu0 %v1295
    %1698 = vmatprep.subr.mxu0 0.0
    %1699 = vmatpush1.msra.mxu0 %v1296
    %1700 = vmatprep.subr.mxu0 0.0
    %1701 = vmatpush1.msra.mxu0 %v1297
    %1702 = vmatprep.subr.mxu0 0.0
    %1703 = vmatpush1.msra.mxu0 %v1298
    %1704 = vmatprep.subr.mxu0 0.0
    %1705 = vmatpush1.msra.mxu0 %v1299
    %1706 = vmatprep.subr.mxu0 0.0
    %1707 = vmatpush1.msra.mxu0 %v1300
    %1708 = vmatprep.subr.mxu0 0.0
    %1709 = vmatpush1.msra.mxu0 %v1301
    %1710 = vmatprep.subr.mxu0 0.0
    %1711 = vmatpush1.msra.mxu0 %v1302
    %1712 = vmatprep.subr.mxu0 0.0
    %1713 = vmatpush1.msra.mxu0 %v1303
    %1714 = vmatprep.subr.mxu0 0.0
    %1715 = vmatpush1.msra.mxu0 %v1304
    %1716 = vmatprep.subr.mxu0 0.0
    %1717 = vmatpush1.msra.mxu0 %v1305
    %1718 = vmatprep.subr.mxu0 0.0
    %1719 = vmatpush1.msra.mxu0 %v1306
    %1720 = vmatprep.subr.mxu0 0.0
    %1721 = vmatpush1.msra.mxu0 %v1307
    %1722 = vmatprep.subr.mxu0 0.0
    %1723 = vmatpush1.msra.mxu0 0.0
    %1724 = vmatprep.subr.mxu0 0.0
    %1725 = vmatpush1.msra.mxu0 0.0
    %1726 = vmatprep.subr.mxu0 0.0
    %1727 = vmatpush1.msra.mxu0 0.0
    %1728 = vmatprep.subr.mxu0 0.0
    %1729 = vmatpush1.msra.mxu0 0.0
    %1730 = vmatprep.subr.mxu0 0.0
    %1731 = vmatpush1.msra.mxu0 0.0
    %1732 = vmatprep.subr.mxu0 0.0
    %1733 = vmatpush1.msra.mxu0 0.0
    %1734 = vmatprep.subr.mxu0 0.0
    %1735 = vmatpush1.msra.mxu0 0.0
    %1736 = vmatprep.subr.mxu0 0.0
    %1737 = vmatpush1.msra.mxu0 0.0
    %1738 = vmatprep.subr.mxu0 0.0
    %1739 = vmatpush1.msra.mxu0 0.0
    %1740 = vmatprep.subr.mxu0 0.0
    %1741 = vmatpush1.msra.mxu0 0.0
    %1742 = vmatprep.subr.mxu0 0.0
    %1743 = vmatpush1.msra.mxu0 0.0
    %1744 = vmatprep.subr.mxu0 0.0
    %1745 = vmatpush1.msra.mxu0 0.0
    %1746 = vmatprep.subr.mxu0 0.0
    %1747 = vmatpush1.msra.mxu0 0.0
    %1748 = vmatprep.subr.mxu0 0.0
    %1749 = vmatpush1.msra.mxu0 0.0
    %1750 = vmatprep.subr.mxu0 0.0
    %1751 = vmatpush1.msra.mxu0 0.0
    %1752 = vmatprep.subr.mxu0 0.0
    %1753 = vmatpush1.msra.mxu0 0.0
    %1754 = vmatprep.mubr.f32.mxu0 0.0
    %1755 = vmatmul.mubr.f32.gmra.mrb[0].mxu0 %v1209
    %v1756 = vpop.f32.mrb[0].mxu0
    %v1757 = vadd.f32 0.0, %v1756
    %v1758 = vpop.f32.mrb[0].mxu0
    %1759 = vdwg.mxu0
    %1760 = vmatprep.subr.mxu0 0.0
    %1761 = vmatpush1.msra.mxu0 %v1308
    %1762 = vmatprep.subr.mxu0 0.0
    %1763 = vmatpush1.msra.mxu0 %v1309
    %1764 = vmatprep.subr.mxu0 0.0
    %1765 = vmatpush1.msra.mxu0 %v1310
    %1766 = vmatprep.subr.mxu0 0.0
    %1767 = vmatpush1.msra.mxu0 %v1311
    %1768 = vmatprep.subr.mxu0 0.0
    %1769 = vmatpush1.msra.mxu0 %v1312
    %1770 = vmatprep.subr.mxu0 0.0
    %1771 = vmatpush1.msra.mxu0 %v1313
    %1772 = vmatprep.subr.mxu0 0.0
    %1773 = vmatpush1.msra.mxu0 %v1314
    %1774 = vmatprep.subr.mxu0 0.0
    %1775 = vmatpush1.msra.mxu0 %v1315
    %1776 = vmatprep.subr.mxu0 0.0
    %1777 = vmatpush1.msra.mxu0 %v1316
    %1778 = vmatprep.subr.mxu0 0.0
    %1779 = vmatpush1.msra.mxu0 %v1317
    %1780 = vmatprep.subr.mxu0 0.0
    %1781 = vmatpush1.msra.mxu0 %v1318
    %1782 = vmatprep.subr.mxu0 0.0
    %1783 = vmatpush1.msra.mxu0 %v1319
    %1784 = vmatprep.subr.mxu0 0.0
    %1785 = vmatpush1.msra.mxu0 %v1320
    %1786 = vmatprep.subr.mxu0 0.0
    %1787 = vmatpush1.msra.mxu0 %v1321
    %1788 = vmatprep.subr.mxu0 0.0
    %1789 = vmatpush1.msra.mxu0 %v1322
    %1790 = vmatprep.subr.mxu0 0.0
    %1791 = vmatpush1.msra.mxu0 %v1323
    %1792 = vmatprep.subr.mxu0 0.0
    %1793 = vmatpush1.msra.mxu0 0.0
    %1794 = vmatprep.subr.mxu0 0.0
    %1795 = vmatpush1.msra.mxu0 0.0
    %1796 = vmatprep.subr.mxu0 0.0
    %1797 = vmatpush1.msra.mxu0 0.0
    %1798 = vmatprep.subr.mxu0 0.0
    %1799 = vmatpush1.msra.mxu0 0.0
    %1800 = vmatprep.subr.mxu0 0.0
    %1801 = vmatpush1.msra.mxu0 0.0
    %1802 = vmatprep.subr.mxu0 0.0
    %1803 = vmatpush1.msra.mxu0 0.0
    %1804 = vmatprep.subr.mxu0 0.0
    %1805 = vmatpush1.msra.mxu0 0.0
    %1806 = vmatprep.subr.mxu0 0.0
    %1807 = vmatpush1.msra.mxu0 0.0
    %1808 = vmatprep.subr.mxu0 0.0
    %1809 = vmatpush1.msra.mxu0 0.0
    %1810 = vmatprep.subr.mxu0 0.0
    %1811 = vmatpush1.msra.mxu0 0.0
    %1812 = vmatprep.subr.mxu0 0.0
    %1813 = vmatpush1.msra.mxu0 0.0
    %1814 = vmatprep.subr.mxu0 0.0
    %1815 = vmatpush1.msra.mxu0 0.0
    %1816 = vmatprep.subr.mxu0 0.0
    %1817 = vmatpush1.msra.mxu0 0.0
    %1818 = vmatprep.subr.mxu0 0.0
    %1819 = vmatpush1.msra.mxu0 0.0
    %1820 = vmatprep.subr.mxu0 0.0
    %1821 = vmatpush1.msra.mxu0 0.0
    %1822 = vmatprep.subr.mxu0 0.0
    %1823 = vmatpush1.msra.mxu0 0.0
    %1824 = vmatprep.mubr.f32.mxu0 0.0
    %1825 = vmatmul.mubr.f32.gmra.mrb[0].mxu0 %v1210
    %v1826 = vpop.f32.mrb[0].mxu0
    %v1827 = vadd.f32 0.0, %v1826
    %v1828 = vpop.f32.mrb[0].mxu0
    %1829 = vdwg.mxu0
    %1830 = vmatprep.subr.mxu0 0.0
    %1831 = vmatpush1.msra.mxu0 %v1324
    %1832 = vmatprep.subr.mxu0 0.0
    %1833 = vmatpush1.msra.mxu0 %v1325
    %1834 = vmatprep.subr.mxu0 0.0
    %1835 = vmatpush1.msra.mxu0 %v1326
    %1836 = vmatprep.subr.mxu0 0.0
    %1837 = vmatpush1.msra.mxu0 %v1327
    %1838 = vmatprep.subr.mxu0 0.0
    %1839 = vmatpush1.msra.mxu0 %v1328
    %1840 = vmatprep.subr.mxu0 0.0
    %1841 = vmatpush1.msra.mxu0 %v1329
    %1842 = vmatprep.subr.mxu0 0.0
    %1843 = vmatpush1.msra.mxu0 %v1330
    %1844 = vmatprep.subr.mxu0 0.0
    %1845 = vmatpush1.msra.mxu0 %v1331
    %1846 = vmatprep.subr.mxu0 0.0
    %1847 = vmatpush1.msra.mxu0 %v1332
    %1848 = vmatprep.subr.mxu0 0.0
    %1849 = vmatpush1.msra.mxu0 %v1333
    %1850 = vmatprep.subr.mxu0 0.0
    %1851 = vmatpush1.msra.mxu0 %v1334
    %1852 = vmatprep.subr.mxu0 0.0
    %1853 = vmatpush1.msra.mxu0 %v1335
    %1854 = vmatprep.subr.mxu0 0.0
    %1855 = vmatpush1.msra.mxu0 %v1336
    %1856 = vmatprep.subr.mxu0 0.0
    %1857 = vmatpush1.msra.mxu0 %v1337
    %1858 = vmatprep.subr.mxu0 0.0
    %1859 = vmatpush1.msra.mxu0 %v1338
    %1860 = vmatprep.subr.mxu0 0.0
    %1861 = vmatpush1.msra.mxu0 %v1339
    %1862 = vmatprep.subr.mxu0 0.0
    %1863 = vmatpush1.msra.mxu0 0.0
    %1864 = vmatprep.subr.mxu0 0.0
    %1865 = vmatpush1.msra.mxu0 0.0
    %1866 = vmatprep.subr.mxu0 0.0
    %1867 = vmatpush1.msra.mxu0 0.0
    %1868 = vmatprep.subr.mxu0 0.0
    %1869 = vmatpush1.msra.mxu0 0.0
    %1870 = vmatprep.subr.mxu0 0.0
    %1871 = vmatpush1.msra.mxu0 0.0
    %1872 = vmatprep.subr.mxu0 0.0
    %1873 = vmatpush1.msra.mxu0 0.0
    %1874 = vmatprep.subr.mxu0 0.0
    %1875 = vmatpush1.msra.mxu0 0.0
    %1876 = vmatprep.subr.mxu0 0.0
    %1877 = vmatpush1.msra.mxu0 0.0
    %1878 = vmatprep.subr.mxu0 0.0
    %1879 = vmatpush1.msra.mxu0 0.0
    %1880 = vmatprep.subr.mxu0 0.0
    %1881 = vmatpush1.msra.mxu0 0.0
    %1882 = vmatprep.subr.mxu0 0.0
    %1883 = vmatpush1.msra.mxu0 0.0
    %1884 = vmatprep.subr.mxu0 0.0
    %1885 = vmatpush1.msra.mxu0 0.0
    %1886 = vmatprep.subr.mxu0 0.0
    %1887 = vmatpush1.msra.mxu0 0.0
    %1888 = vmatprep.subr.mxu0 0.0
    %1889 = vmatpush1.msra.mxu0 0.0
    %1890 = vmatprep.subr.mxu0 0.0
    %1891 = vmatpush1.msra.mxu0 0.0
    %1892 = vmatprep.subr.mxu0 0.0
    %1893 = vmatpush1.msra.mxu0 0.0
    %1894 = vmatprep.mubr.f32.mxu0 0.0
    %1895 = vmatmul.mubr.f32.gmra.mrb[0].mxu0 %v1211
    %v1896 = vpop.f32.mrb[0].mxu0
    %v1897 = vadd.f32 0.0, %v1896
    %v1898 = vpop.f32.mrb[0].mxu0
    %1899 = vdwg.mxu0
    %1900 = vst.msk [vmem:[%s4] sm:$0xff] %vm163, %v1407
    %1901 = vst.msk [vmem:[%s4 + $0x8] sm:$0xff] %vm163, %v1477
    %1902 = vst.msk [vmem:[%s4 + $0x10] sm:$0xff] %vm163, %v1547
    %1903 = vst.msk [vmem:[%s4 + $0x18] sm:$0xff] %vm163, %v1617
    %1904 = vst.msk [vmem:[%s4 + $0x20] sm:$0xff] %vm163, %v1687
    %1905 = vst.msk [vmem:[%s4 + $0x28] sm:$0xff] %vm163, %v1757
    %1906 = vst.msk [vmem:[%s4 + $0x30] sm:$0xff] %vm163, %v1827
    %1907 = vst.msk [vmem:[%s4 + $0x38] sm:$0xff] %vm163, %v1897
    %1908 = vst [vmem:[#allocation2] sm:$0xff] %v1204
    %1909 = vst [vmem:[#allocation2 + $0x8] sm:$0xff] %v1205
    %1910 = vst [vmem:[#allocation2 + $0x10] sm:$0xff] %v1206
    %1911 = vst [vmem:[#allocation2 + $0x18] sm:$0xff] %v1207
    %1912 = vst [vmem:[#allocation2 + $0x20] sm:$0xff] %v1208
    %1913 = vst [vmem:[#allocation2 + $0x28] sm:$0xff] %v1209
    %1914 = vst [vmem:[#allocation2 + $0x30] sm:$0xff] %v1210
    %1915 = vst [vmem:[#allocation2 + $0x38] sm:$0xff] %v1211
    // Predicated region
    $region18: #{tsmixer_forward.8} parent=1 // pred_check
      _
    $region19: #{tsmixer_forward.8} parent=1 // pred_check_branch
      %1917 = sbr.rel (0) target = $region21
    $region20: #{tsmixer_forward.8} parent=1 // pred_region
      _
    $region21: #{tsmixer_forward.8} parent=1 // pred_fallthru
      _
    // Predicated region
    $region22: #{tsmixer_forward.8} parent=1 // pred_check
      _
    $region23: #{tsmixer_forward.8} parent=1 // pred_check_branch
      %1919 = sbr.rel (0) target = $region25
    $region24: #{tsmixer_forward.8} parent=1 // pred_region
      %s1921 = ssub.s32 1024, 1024
      %1922 = vsyncadd [#allocation3], %s1921
      %s1923 = sshll.u32 [#allocation2], 4
      %s1924 = int_to_ptr.vmem [resolvable:$true] %s1923
      %1929 = dma.vmem_to_hbm [thread:$0]  %s1924, 1024, %s5, [#allocation3], 128, 128, 8
    $region25: #{tsmixer_forward.8} parent=1 // pred_fallthru
      _
    // Predicated region
    $region26: #{tsmixer_forward.8} parent=1 // pred_check
      _
    $region27: #{tsmixer_forward.8} parent=1 // pred_check_branch
      %1931 = sbr.rel (0) target = $region29
    $region28: #{tsmixer_forward.8} parent=1 // pred_region
      _
    $region29: #{tsmixer_forward.8} parent=1 // pred_fallthru
      _
    // Predicated region
    $region30: #{tsmixer_forward.8} parent=1 // pred_check
      _
    $region31: #{tsmixer_forward.8} parent=1 // pred_check_branch
      %1933 = sbr.rel (0) target = $region33
    $region32: #{tsmixer_forward.8} parent=1 // pred_region
      %1934 = dma.done [#allocation3], 1024
    $region33: #{tsmixer_forward.8} parent=1 // pred_fallthru
      _
    %1935 = vsyncpa [#allocation3], 1

</llo_original>
